<compile_context>
chip_gen: v7x
topology: tpu7x:2x2x1
jax: 0.10.0
libtpu: 0.0.40
codegen_flags: <defaults>
</compile_context>

<pallas_src>
import jax
import jax.numpy as jnp
from jax.experimental import pallas as pl
from jax.experimental.pallas import tpu as pltpu

K_IN = 28 * 28       # 784
K_PAD = 896          # 7 * 128 : lane-aligned fc1 contraction dim
H1 = 1024
H2 = 256
N_OUT = 10
N_OUT_PAD = 128      # lane-dense output width


def _round_up(x, m):
    return (x + m - 1) // m * m


def _mlp_kernel(x_ref, w1_ref, b1_ref, w2_ref, b2_ref, w3_ref, b3_ref, o_ref):
    # fc1 + relu  (bf16 operands, f32 accumulation on the MXU)
    h1 = jnp.dot(x_ref[...], w1_ref[...], preferred_element_type=jnp.float32)
    h1 = jnp.maximum(h1 + b1_ref[...], 0.0).astype(jnp.bfloat16)
    # fc2 + relu
    h2 = jnp.dot(h1, w2_ref[...], preferred_element_type=jnp.float32)
    h2 = jnp.maximum(h2 + b2_ref[...], 0.0).astype(jnp.bfloat16)
    # fc3 (logits, no activation) -- 128-wide lane-dense padded output
    o = jnp.dot(h2, w3_ref[...], preferred_element_type=jnp.float32)
    o_ref[...] = (o + b3_ref[...]).astype(o_ref.dtype)


def nnnet_forward(x, params, *, block_b=512):
    """x: any shape whose trailing elements flatten to 784 per row
    (e.g. [B, 1, 28, 28]). Returns logits [B, 10] in float32."""
    w1, b1, w2, b2, w3, b3 = params
    x2d = x.reshape(-1, K_IN)                     # == x.view(-1, 784)
    B = x2d.shape[0]

    # Batch tile: big enough to amortize per-grid-step overhead (~0.35 us),
    # small enough to bound padding waste and VMEM on any generation
    # (weights stay resident; only the activation tile streams).
    TB = min(block_b, max(8, _round_up(B, 8)))
    B_pad = _round_up(B, TB)

    # ---- one-time layout plumbing in the wrapper (cheap) -------------------
    # bf16 activations/weights; biases stay f32 (added to the f32 accumulator).
    xb = jnp.pad(x2d.astype(jnp.bfloat16),
                 ((0, B_pad - B), (0, K_PAD - K_IN)))
    w1p = jnp.pad(w1.astype(jnp.bfloat16), ((0, K_PAD - K_IN), (0, 0)))
    w2b = w2.astype(jnp.bfloat16)
    w3p = jnp.pad(w3.astype(jnp.bfloat16), ((0, 0), (0, N_OUT_PAD - N_OUT)))
    b1f = b1.astype(jnp.float32).reshape(1, H1)
    b2f = b2.astype(jnp.float32).reshape(1, H2)
    b3p = jnp.pad(b3.astype(jnp.float32).reshape(1, N_OUT),
                  ((0, 0), (0, N_OUT_PAD - N_OUT)))

    grid = (B_pad // TB,)

    def resident(shape):
        # Weight/bias blocks: same block every grid step -> stays in VMEM,
        # no per-step re-DMA.
        return pl.BlockSpec(shape, lambda i: (0, 0))

    # TODO(synk): if this forward is called repeatedly at tiny batch, keep the
    # ~2.4 MB bf16 weights resident across calls (cross-call prefetch / P10)
    # instead of re-streaming them from HBM every invocation.
    out = pl.pallas_call(
        _mlp_kernel,
        out_shape=jax.ShapeDtypeStruct((B_pad, N_OUT_PAD), jnp.float32),
        grid=grid,
        in_specs=[
            pl.BlockSpec((TB, K_PAD), lambda i: (i, 0)),            # x streams
            resident((K_PAD, H1)), resident((1, H1)),               # fc1
            resident((H1, H2)),    resident((1, H2)),               # fc2
            resident((H2, N_OUT_PAD)), resident((1, N_OUT_PAD)),    # fc3
        ],
        out_specs=pl.BlockSpec((TB, N_OUT_PAD), lambda i: (i, 0)),
        compiler_params=pltpu.CompilerParams(
            dimension_semantics=("parallel",),   # megacore batch split on v7x
            vmem_limit_bytes=32 << 20,           # sized to use; fits v5e..v7x
        ),
    )(xb, w1p, b1f, w2b, b2f, w3p, b3p)

    return out[:B, :N_OUT]


def init_params(key):
    """Deterministic init mimicking PyTorch Linear default:
    U(-1/sqrt(fan_in), 1/sqrt(fan_in)). Weights stored as (in, out)."""
    def linear(key, fan_in, fan_out):
        kw, kb = jax.random.split(key)
        bound = 1.0 / jnp.sqrt(jnp.float32(fan_in))
        w = jax.random.uniform(kw, (fan_in, fan_out), jnp.float32, -bound, bound)
        b = jax.random.uniform(kb, (1, fan_out), jnp.float32, -bound, bound)
        return w, b

    k1, k2, k3 = jax.random.split(key, 3)
    w1, b1 = linear(k1, K_IN, H1)
    w2, b2 = linear(k2, H1, H2)
    w3, b3 = linear(k3, H2, N_OUT)
    return (w1, b1, w2, b2, w3, b3)


if __name__ == "__main__":
    key = jax.random.PRNGKey(0)
    kx, kp = jax.random.split(key)

    # Small MNIST-like batch: [batch=2, channels=1, 28, 28] (NCHW)
    x = jax.random.normal(kx, (2, 1, 28, 28), jnp.float32)
    params = init_params(kp)

    logits = nnnet_forward(x, params)
    jax.block_until_ready(logits)

    # Reference in plain JAX, applying the same bf16 rounding of inputs /
    # intermediates that the kernel uses (accumulation stays f32 both places).
    w1, b1, w2, b2, w3, b3 = params
    xf = x.reshape(-1, K_IN)
    rb = lambda a: a.astype(jnp.bfloat16).astype(jnp.float32)
    hp = jax.lax.Precision.HIGHEST
    h1 = jnp.maximum(jnp.dot(rb(xf), rb(w1), precision=hp) + b1, 0.0)
    h2 = jnp.maximum(jnp.dot(rb(h1), rb(w2), precision=hp) + b2, 0.0)
    ref = jnp.dot(rb(h2), rb(w3), precision=hp) + b3

    assert logits.shape == (2, 10)
    assert jnp.allclose(logits, ref, atol=1e-2, rtol=1e-2)

    print("KERNEL_OK")
</pallas_src>

<mosaic_0001>
module attributes {stable_mosaic.version = 11 : i64} {
  func.func @_mlp_kernel(%arg0: i32, %arg1: memref<8x896xbf16, #tpu.memory_space<vmem>>, %arg2: memref<896x1024xbf16, #tpu.memory_space<vmem>>, %arg3: memref<1x1024xf32, #tpu.memory_space<vmem>>, %arg4: memref<1024x256xbf16, #tpu.memory_space<vmem>>, %arg5: memref<1x256xf32, #tpu.memory_space<vmem>>, %arg6: memref<256x128xbf16, #tpu.memory_space<vmem>>, %arg7: memref<1x128xf32, #tpu.memory_space<vmem>>, %arg8: memref<8x128xf32, #tpu.memory_space<vmem>>) attributes {dimension_semantics = [#tpu.dimension_semantics<parallel>], iteration_bounds = array<i64: 1>, scalar_prefetch = 0 : i64, scratch_operands = 0 : i64, tpu.core_type = #tpu.core_type<tc>, window_params = [{transform_indices = @transform_0, window_bounds = array<i64: 8, 896>}, {pipeline_mode = #tpu.pipeline_mode<synchronous>, transform_indices = @transform_1, window_bounds = array<i64: 896, 1024>}, {pipeline_mode = #tpu.pipeline_mode<synchronous>, transform_indices = @transform_2, window_bounds = array<i64: 1, 1024>}, {pipeline_mode = #tpu.pipeline_mode<synchronous>, transform_indices = @transform_3, window_bounds = array<i64: 1024, 256>}, {pipeline_mode = #tpu.pipeline_mode<synchronous>, transform_indices = @transform_4, window_bounds = array<i64: 1, 256>}, {pipeline_mode = #tpu.pipeline_mode<synchronous>, transform_indices = @transform_5, window_bounds = array<i64: 256, 128>}, {pipeline_mode = #tpu.pipeline_mode<synchronous>, transform_indices = @transform_6, window_bounds = array<i64: 1, 128>}, {transform_indices = @transform_7, window_bounds = array<i64: 8, 128>}]} {
    %c0 = arith.constant 0 : index
    %c0_0 = arith.constant 0 : index
    %0 = vector.load %arg1[%c0, %c0_0] : memref<8x896xbf16, #tpu.memory_space<vmem>>, vector<8x896xbf16>
    %c0_1 = arith.constant 0 : index
    %c0_2 = arith.constant 0 : index
    %1 = vector.load %arg2[%c0_1, %c0_2] : memref<896x1024xbf16, #tpu.memory_space<vmem>>, vector<896x1024xbf16>
    %cst = arith.constant dense<0.000000e+00> : vector<8x1024xf32>
    %2 = tpu.matmul %0, %1, %cst {dimension_numbers = #tpu.dot_dimension_numbers<[1], [0], [0], [1], [0, 0, 1, 1], [], []>} : vector<8x896xbf16>, vector<896x1024xbf16>, vector<8x1024xf32> -> vector<8x1024xf32>
    %c0_3 = arith.constant 0 : index
    %c0_4 = arith.constant 0 : index
    %3 = vector.load %arg3[%c0_3, %c0_4] : memref<1x1024xf32, #tpu.memory_space<vmem>>, vector<1x1024xf32>
    %4 = vector.broadcast %3 : vector<1x1024xf32> to vector<8x1024xf32>
    %5 = arith.addf %2, %4 : vector<8x1024xf32>
    %cst_5 = arith.constant 0.000000e+00 : f32
    %6 = vector.broadcast %cst_5 : f32 to vector<8x1024xf32>
    %7 = arith.maximumf %5, %6 : vector<8x1024xf32>
    %8 = arith.truncf %7 : vector<8x1024xf32> to vector<8x1024xbf16>
    %c0_6 = arith.constant 0 : index
    %c0_7 = arith.constant 0 : index
    %9 = vector.load %arg4[%c0_6, %c0_7] : memref<1024x256xbf16, #tpu.memory_space<vmem>>, vector<1024x256xbf16>
    %cst_8 = arith.constant dense<0.000000e+00> : vector<8x256xf32>
    %10 = tpu.matmul %8, %9, %cst_8 {dimension_numbers = #tpu.dot_dimension_numbers<[1], [0], [0], [1], [0, 0, 1, 1], [], []>} : vector<8x1024xbf16>, vector<1024x256xbf16>, vector<8x256xf32> -> vector<8x256xf32>
    %c0_9 = arith.constant 0 : index
    %c0_10 = arith.constant 0 : index
    %11 = vector.load %arg5[%c0_9, %c0_10] : memref<1x256xf32, #tpu.memory_space<vmem>>, vector<1x256xf32>
    %12 = vector.broadcast %11 : vector<1x256xf32> to vector<8x256xf32>
    %13 = arith.addf %10, %12 : vector<8x256xf32>
    %cst_11 = arith.constant 0.000000e+00 : f32
    %14 = vector.broadcast %cst_11 : f32 to vector<8x256xf32>
    %15 = arith.maximumf %13, %14 : vector<8x256xf32>
    %16 = arith.truncf %15 : vector<8x256xf32> to vector<8x256xbf16>
    %c0_12 = arith.constant 0 : index
    %c0_13 = arith.constant 0 : index
    %17 = vector.load %arg6[%c0_12, %c0_13] : memref<256x128xbf16, #tpu.memory_space<vmem>>, vector<256x128xbf16>
    %cst_14 = arith.constant dense<0.000000e+00> : vector<8x128xf32>
    %18 = tpu.matmul %16, %17, %cst_14 {dimension_numbers = #tpu.dot_dimension_numbers<[1], [0], [0], [1], [0, 0, 1, 1], [], []>} : vector<8x256xbf16>, vector<256x128xbf16>, vector<8x128xf32> -> vector<8x128xf32>
    %c0_15 = arith.constant 0 : index
    %c0_16 = arith.constant 0 : index
    %19 = vector.load %arg7[%c0_15, %c0_16] : memref<1x128xf32, #tpu.memory_space<vmem>>, vector<1x128xf32>
    %20 = vector.broadcast %19 : vector<1x128xf32> to vector<8x128xf32>
    %21 = arith.addf %18, %20 : vector<8x128xf32>
    %c0_17 = arith.constant 0 : index
    %c0_18 = arith.constant 0 : index
    %22 = vector.load %arg8[%c0_17, %c0_18] : memref<8x128xf32, #tpu.memory_space<vmem>>, vector<8x128xf32>
    tpu.vector_store %arg8[%c0_17, %c0_18], %21 {strides = array<i32>} : memref<8x128xf32, #tpu.memory_space<vmem>>, vector<8x128xf32>,
    return
  }
  func.func @transform_0(%arg0: i32) -> (i32, i32) {
    %c0_i32 = arith.constant 0 : i32
    %c0_i32_0 = arith.constant 0 : i32
    return %arg0, %c0_i32 : i32, i32
  }
  func.func @transform_1(%arg0: i32) -> (i32, i32) {
    %c0_i32 = arith.constant 0 : i32
    %c0_i32_0 = arith.constant 0 : i32
    %c0_i32_1 = arith.constant 0 : i32
    return %c0_i32, %c0_i32_0 : i32, i32
  }
  func.func @transform_2(%arg0: i32) -> (i32, i32) {
    %c0_i32 = arith.constant 0 : i32
    %c0_i32_0 = arith.constant 0 : i32
    %c0_i32_1 = arith.constant 0 : i32
    return %c0_i32, %c0_i32_0 : i32, i32
  }
  func.func @transform_3(%arg0: i32) -> (i32, i32) {
    %c0_i32 = arith.constant 0 : i32
    %c0_i32_0 = arith.constant 0 : i32
    %c0_i32_1 = arith.constant 0 : i32
    return %c0_i32, %c0_i32_0 : i32, i32
  }
  func.func @transform_4(%arg0: i32) -> (i32, i32) {
    %c0_i32 = arith.constant 0 : i32
    %c0_i32_0 = arith.constant 0 : i32
    %c0_i32_1 = arith.constant 0 : i32
    return %c0_i32, %c0_i32_0 : i32, i32
  }
  func.func @transform_5(%arg0: i32) -> (i32, i32) {
    %c0_i32 = arith.constant 0 : i32
    %c0_i32_0 = arith.constant 0 : i32
    %c0_i32_1 = arith.constant 0 : i32
    return %c0_i32, %c0_i32_0 : i32, i32
  }
  func.func @transform_6(%arg0: i32) -> (i32, i32) {
    %c0_i32 = arith.constant 0 : i32
    %c0_i32_0 = arith.constant 0 : i32
    %c0_i32_1 = arith.constant 0 : i32
    return %c0_i32, %c0_i32_0 : i32, i32
  }
  func.func @transform_7(%arg0: i32) -> (i32, i32) {
    %c0_i32 = arith.constant 0 : i32
    %c0_i32_0 = arith.constant 0 : i32
    return %arg0, %c0_i32 : i32, i32
  }
}

</mosaic_0001>

<llo_original>
// kernel: tpu_custom_call.1
$region0: #{tpu_custom_call.1}
  #allocation0 [shape = 'u32[]', space=smem, size = 0x4, offset = 0x4, fixed_abs, tag = 'smem constant byte address 0x4 - core index']
  #allocation1 [shape = 'u32[144,128]{1,0:T(1,128)}', space=vmem, size = 0x12000, scoped, tag = 'internal scratch']
  %s0 = inlined_call_operand.hbm [shape: bf16[8,896], index: 0, kind: input, shape index: {}]
  %s1 = inlined_call_operand.hbm [shape: bf16[896,1024], index: 1, kind: input, shape index: {}]
  %s2 = inlined_call_operand.hbm [shape: f32[1,1024], index: 2, kind: input, shape index: {}]
  %s3 = inlined_call_operand.hbm [shape: bf16[1024,256], index: 3, kind: input, shape index: {}]
  %s4 = inlined_call_operand.hbm [shape: f32[1,256], index: 4, kind: input, shape index: {}]
  %s5 = inlined_call_operand.hbm [shape: bf16[256,128], index: 5, kind: input, shape index: {}]
  %s6 = inlined_call_operand.hbm [shape: f32[1,128], index: 6, kind: input, shape index: {}]
  %s7 = inlined_call_operand.hbm [shape: f32[8,128], index: 7, kind: output, shape index: {}]
  %s8 = sld [smem:[#allocation0]]
  $region66: #{tpu_custom_call.1} parent=0
    _
  %s10 = ssub.s32 1, %s8
  %s11 = scalar_select 0, %s10, %s8
  $region1: #{tpu_custom_call.1} parent=0
    #allocation2 [shape = 'u8[14336]{0}', space=vmem, size = 0x3800, scoped, tag = 'input window, operand 0, single buffered']
    #allocation3 [shape = 's32[1]{0}', space=sflag, size = 0x4, scoped, tag = 'scoped memory for tpu_custom_call.1']
    #allocation4 [shape = 's32[1]{0}', space=sflag, size = 0x4, scoped, tag = 'scoped memory for tpu_custom_call.1']
    #allocation5 [shape = 'u8[1835008]{0}', space=vmem, size = 0x1c0000, scoped, tag = 'input window, operand 1, single buffered']
    #allocation6 [shape = 's32[1]{0}', space=sflag, size = 0x4, scoped, tag = 'scoped memory for tpu_custom_call.1']
    #allocation7 [shape = 'u8[4096]{0}', space=vmem, size = 0x1000, scoped, tag = 'input window, operand 2, single buffered']
    #allocation8 [shape = 'u8[524288]{0}', space=vmem, size = 0x80000, scoped, tag = 'input window, operand 3, single buffered']
    #allocation9 [shape = 's32[1]{0}', space=sflag, size = 0x4, scoped, tag = 'scoped memory for tpu_custom_call.1']
    #allocation10 [shape = 'u8[1024]{0}', space=vmem, size = 0x400, scoped, tag = 'input window, operand 4, single buffered']
    #allocation11 [shape = 'u8[65536]{0}', space=vmem, size = 0x10000, scoped, tag = 'input window, operand 5, single buffered']
    #allocation12 [shape = 's32[1]{0}', space=sflag, size = 0x4, scoped, tag = 'scoped memory for tpu_custom_call.1']
    #allocation13 [shape = 'u8[512]{0}', space=vmem, size = 0x400, scoped, tag = 'input window, operand 6, single buffered']
    #allocation14 [shape = 'u8[4096]{0}', space=vmem, size = 0x1000, scoped, tag = 'output window, operand 0, single buffered']
    %12 = vsyncpa [#allocation3], 0
    %13 = vsyncpa [#allocation6], 0
    %14 = vsyncpa [#allocation9], 0
    %15 = vsyncpa [#allocation12], 0
    %16 = vsyncpa [#allocation4], 0
    // Predicated region
    $region2: #{tpu_custom_call.1} parent=1 // pred_check
      _
    $region3: #{tpu_custom_call.1} parent=1 // pred_check_branch
      %18 = sbr.rel (0) target = $region5
    $region4: #{tpu_custom_call.1} parent=1 // pred_region
      %s20 = ssub.s32 448, 448
      %21 = vsyncadd [#allocation3], %s20
      %s23 = sshll.u32 [#allocation2], 4
      %s24 = int_to_ptr.vmem [resolvable:$true] %s23
      %26 = dma.hbm_to_vmem [thread:$0]  %s0, 448, %s24, [#allocation3]
    $region5: #{tpu_custom_call.1} parent=1 // pred_fallthru
      _
    // Predicated region
    $region6: #{tpu_custom_call.1} parent=1 // pred_check
      _
    $region7: #{tpu_custom_call.1} parent=1 // pred_check_branch
      %28 = sbr.rel (0) target = $region9
    $region8: #{tpu_custom_call.1} parent=1 // pred_region
      %s30 = ssub.s32 57344, 57344
      %31 = vsyncadd [#allocation6], %s30
      %s32 = sshll.u32 [#allocation5], 4
      %s33 = int_to_ptr.vmem [resolvable:$true] %s32
      %38 = dma.hbm_to_vmem [thread:$0]  %s1, 57344, %s33, [#allocation6], 512, 512, 32
    $region9: #{tpu_custom_call.1} parent=1 // pred_fallthru
      _
    // Predicated region
    $region10: #{tpu_custom_call.1} parent=1 // pred_check
      _
    $region11: #{tpu_custom_call.1} parent=1 // pred_check_branch
      %40 = sbr.rel (0) target = $region13
    $region12: #{tpu_custom_call.1} parent=1 // pred_region
      %s42 = ssub.s32 128, 128
      %43 = vsyncadd [#allocation6], %s42
      %s45 = sshll.u32 [#allocation7], 4
      %s46 = int_to_ptr.vmem [resolvable:$true] %s45
      %48 = dma.hbm_to_vmem [thread:$0]  %s2, 128, %s46, [#allocation6]
    $region13: #{tpu_custom_call.1} parent=1 // pred_fallthru
      _
    // Predicated region
    $region14: #{tpu_custom_call.1} parent=1 // pred_check
      _
    $region15: #{tpu_custom_call.1} parent=1 // pred_check_branch
      %50 = sbr.rel (0) target = $region17
    $region16: #{tpu_custom_call.1} parent=1 // pred_region
      %s52 = ssub.s32 16384, 16384
      %53 = vsyncadd [#allocation9], %s52
      %s54 = sshll.u32 [#allocation8], 4
      %s55 = int_to_ptr.vmem [resolvable:$true] %s54
      %60 = dma.hbm_to_vmem [thread:$0]  %s3, 16384, %s55, [#allocation9], 128, 128, 8
    $region17: #{tpu_custom_call.1} parent=1 // pred_fallthru
      _
    // Predicated region
    $region18: #{tpu_custom_call.1} parent=1 // pred_check
      _
    $region19: #{tpu_custom_call.1} parent=1 // pred_check_branch
      %62 = sbr.rel (0) target = $region21
    $region20: #{tpu_custom_call.1} parent=1 // pred_region
      %s64 = ssub.s32 32, 32
      %65 = vsyncadd [#allocation9], %s64
      %s67 = sshll.u32 [#allocation10], 4
      %s68 = int_to_ptr.vmem [resolvable:$true] %s67
      %70 = dma.hbm_to_vmem [thread:$0]  %s4, 32, %s68, [#allocation9]
    $region21: #{tpu_custom_call.1} parent=1 // pred_fallthru
      _
    // Predicated region
    $region22: #{tpu_custom_call.1} parent=1 // pred_check
      _
    $region23: #{tpu_custom_call.1} parent=1 // pred_check_branch
      %72 = sbr.rel (0) target = $region25
    $region24: #{tpu_custom_call.1} parent=1 // pred_region
      %s74 = ssub.s32 2048, 2048
      %75 = vsyncadd [#allocation12], %s74
      %s76 = sshll.u32 [#allocation11], 4
      %s77 = int_to_ptr.vmem [resolvable:$true] %s76
      %82 = dma.hbm_to_vmem [thread:$0]  %s5, 2048, %s77, [#allocation12], 64, 64, 4
    $region25: #{tpu_custom_call.1} parent=1 // pred_fallthru
      _
    // Predicated region
    $region26: #{tpu_custom_call.1} parent=1 // pred_check
      _
    $region27: #{tpu_custom_call.1} parent=1 // pred_check_branch
      %84 = sbr.rel (0) target = $region29
    $region28: #{tpu_custom_call.1} parent=1 // pred_region
      %s86 = ssub.s32 16, 16
      %87 = vsyncadd [#allocation12], %s86
      %s89 = sshll.u32 [#allocation13], 4
      %s90 = int_to_ptr.vmem [resolvable:$true] %s89
      %92 = dma.hbm_to_vmem [thread:$0]  %s6, 16, %s90, [#allocation12]
    $region29: #{tpu_custom_call.1} parent=1 // pred_fallthru
      _
    // Predicated region
    $region30: #{tpu_custom_call.1} parent=1 // pred_check
      _
    $region31: #{tpu_custom_call.1} parent=1 // pred_check_branch
      %94 = sbr.rel (0) target = $region33
    $region32: #{tpu_custom_call.1} parent=1 // pred_region
      %95 = dma.done [#allocation3], 448
    $region33: #{tpu_custom_call.1} parent=1 // pred_fallthru
      _
    // Predicated region
    $region34: #{tpu_custom_call.1} parent=1 // pred_check
      _
    $region35: #{tpu_custom_call.1} parent=1 // pred_check_branch
      %97 = sbr.rel (0) target = $region37
    $region36: #{tpu_custom_call.1} parent=1 // pred_region
      %98 = dma.done [#allocation6], 57344
    $region37: #{tpu_custom_call.1} parent=1 // pred_fallthru
      _
    // Predicated region
    $region38: #{tpu_custom_call.1} parent=1 // pred_check
      _
    $region39: #{tpu_custom_call.1} parent=1 // pred_check_branch
      %100 = sbr.rel (0) target = $region41
    $region40: #{tpu_custom_call.1} parent=1 // pred_region
      %101 = dma.done [#allocation6], 128
    $region41: #{tpu_custom_call.1} parent=1 // pred_fallthru
      _
    // Predicated region
    $region42: #{tpu_custom_call.1} parent=1 // pred_check
      _
    $region43: #{tpu_custom_call.1} parent=1 // pred_check_branch
      %103 = sbr.rel (0) target = $region45
    $region44: #{tpu_custom_call.1} parent=1 // pred_region
      %104 = dma.done [#allocation9], 16384
    $region45: #{tpu_custom_call.1} parent=1 // pred_fallthru
      _
    // Predicated region
    $region46: #{tpu_custom_call.1} parent=1 // pred_check
      _
    $region47: #{tpu_custom_call.1} parent=1 // pred_check_branch
      %106 = sbr.rel (0) target = $region49
    $region48: #{tpu_custom_call.1} parent=1 // pred_region
      %107 = dma.done [#allocation9], 32
    $region49: #{tpu_custom_call.1} parent=1 // pred_fallthru
      _
    // Predicated region
    $region50: #{tpu_custom_call.1} parent=1 // pred_check
      _
    $region51: #{tpu_custom_call.1} parent=1 // pred_check_branch
      %109 = sbr.rel (0) target = $region53
    $region52: #{tpu_custom_call.1} parent=1 // pred_region
      %110 = dma.done [#allocation12], 2048
    $region53: #{tpu_custom_call.1} parent=1 // pred_fallthru
      _
    // Predicated region
    $region54: #{tpu_custom_call.1} parent=1 // pred_check
      _
    $region55: #{tpu_custom_call.1} parent=1 // pred_check_branch
      %112 = sbr.rel (0) target = $region57
    $region56: #{tpu_custom_call.1} parent=1 // pred_region
      %113 = dma.done [#allocation12], 16
    $region57: #{tpu_custom_call.1} parent=1 // pred_fallthru
      _
    %v115 = vld [vmem:[#allocation2] sm:$0xff]
    %v116 = vld [vmem:[#allocation2 + $0x8] sm:$0xff]
    %v117 = vld [vmem:[#allocation2 + $0x10] sm:$0xff]
    %v118 = vld [vmem:[#allocation2 + $0x18] sm:$0xf]
    %v119 = vld [vmem:[#allocation5] sm:$0xff]
    %v120 = vld [vmem:[#allocation5 + $0x8] sm:$0xff]
    %v121 = vld [vmem:[#allocation5 + $0x10] sm:$0xff]
    %v122 = vld [vmem:[#allocation5 + $0x18] sm:$0xff]
    %v123 = vld [vmem:[#allocation5 + $0x20] sm:$0xff]
    %v124 = vld [vmem:[#allocation5 + $0x28] sm:$0xff]
    %v125 = vld [vmem:[#allocation5 + $0x30] sm:$0xff]
    %v126 = vld [vmem:[#allocation5 + $0x38] sm:$0xff]
    %v127 = vld [vmem:[#allocation5 + $0x40] sm:$0xff]
    %v128 = vld [vmem:[#allocation5 + $0x48] sm:$0xff]
    %v129 = vld [vmem:[#allocation5 + $0x50] sm:$0xff]
    %v130 = vld [vmem:[#allocation5 + $0x58] sm:$0xff]
    %v131 = vld [vmem:[#allocation5 + $0x60] sm:$0xff]
    %v132 = vld [vmem:[#allocation5 + $0x68] sm:$0xff]
    %v133 = vld [vmem:[#allocation5 + $0x70] sm:$0xff]
    %v134 = vld [vmem:[#allocation5 + $0x78] sm:$0xff]
    %v135 = vld [vmem:[#allocation5 + $0x80] sm:$0xff]
    %v136 = vld [vmem:[#allocation5 + $0x88] sm:$0xff]
    %v137 = vld [vmem:[#allocation5 + $0x90] sm:$0xff]
    %v138 = vld [vmem:[#allocation5 + $0x98] sm:$0xff]
    %v139 = vld [vmem:[#allocation5 + $0xa0] sm:$0xff]
    %v140 = vld [vmem:[#allocation5 + $0xa8] sm:$0xff]
    %v141 = vld [vmem:[#allocation5 + $0xb0] sm:$0xff]
    %v142 = vld [vmem:[#allocation5 + $0xb8] sm:$0xff]
    %v143 = vld [vmem:[#allocation5 + $0xc0] sm:$0xff]
    %v144 = vld [vmem:[#allocation5 + $0xc8] sm:$0xff]
    %v145 = vld [vmem:[#allocation5 + $0xd0] sm:$0xff]
    %v146 = vld [vmem:[#allocation5 + $0xd8] sm:$0xff]
    %v147 = vld [vmem:[#allocation5 + $0xe0] sm:$0xff]
    %v148 = vld [vmem:[#allocation5 + $0xe8] sm:$0xff]
    %v149 = vld [vmem:[#allocation5 + $0xf0] sm:$0xff]
    %v150 = vld [vmem:[#allocation5 + $0xf8] sm:$0xff]
    %v151 = vld [vmem:[#allocation5 + $0x100] sm:$0xff]
    %v152 = vld [vmem:[#allocation5 + $0x108] sm:$0xff]
    %v153 = vld [vmem:[#allocation5 + $0x110] sm:$0xff]
    %v154 = vld [vmem:[#allocation5 + $0x118] sm:$0xff]
    %v155 = vld [vmem:[#allocation5 + $0x120] sm:$0xff]
    %v156 = vld [vmem:[#allocation5 + $0x128] sm:$0xff]
    %v157 = vld [vmem:[#allocation5 + $0x130] sm:$0xff]
    %v158 = vld [vmem:[#allocation5 + $0x138] sm:$0xff]
    %v159 = vld [vmem:[#allocation5 + $0x140] sm:$0xff]
    %v160 = vld [vmem:[#allocation5 + $0x148] sm:$0xff]
    %v161 = vld [vmem:[#allocation5 + $0x150] sm:$0xff]
    %v162 = vld [vmem:[#allocation5 + $0x158] sm:$0xff]
    %v163 = vld [vmem:[#allocation5 + $0x160] sm:$0xff]
    %v164 = vld [vmem:[#allocation5 + $0x168] sm:$0xff]
    %v165 = vld [vmem:[#allocation5 + $0x170] sm:$0xff]
    %v166 = vld [vmem:[#allocation5 + $0x178] sm:$0xff]
    %v167 = vld [vmem:[#allocation5 + $0x180] sm:$0xff]
    %v168 = vld [vmem:[#allocation5 + $0x188] sm:$0xff]
    %v169 = vld [vmem:[#allocation5 + $0x190] sm:$0xff]
    %v170 = vld [vmem:[#allocation5 + $0x198] sm:$0xff]
    %v171 = vld [vmem:[#allocation5 + $0x1a0] sm:$0xff]
    %v172 = vld [vmem:[#allocation5 + $0x1a8] sm:$0xff]
    %v173 = vld [vmem:[#allocation5 + $0x1b0] sm:$0xff]
    %v174 = vld [vmem:[#allocation5 + $0x1b8] sm:$0xff]
    %v175 = vld [vmem:[#allocation5 + $0x1c0] sm:$0xff]
    %v176 = vld [vmem:[#allocation5 + $0x1c8] sm:$0xff]
    %v177 = vld [vmem:[#allocation5 + $0x1d0] sm:$0xff]
    %v178 = vld [vmem:[#allocation5 + $0x1d8] sm:$0xff]
    %v179 = vld [vmem:[#allocation5 + $0x1e0] sm:$0xff]
    %v180 = vld [vmem:[#allocation5 + $0x1e8] sm:$0xff]
    %v181 = vld [vmem:[#allocation5 + $0x1f0] sm:$0xff]
    %v182 = vld [vmem:[#allocation5 + $0x1f8] sm:$0xff]
    %v183 = vld [vmem:[#allocation5 + $0x200] sm:$0xff]
    %v184 = vld [vmem:[#allocation5 + $0x208] sm:$0xff]
    %v185 = vld [vmem:[#allocation5 + $0x210] sm:$0xff]
    %v186 = vld [vmem:[#allocation5 + $0x218] sm:$0xff]
    %v187 = vld [vmem:[#allocation5 + $0x220] sm:$0xff]
    %v188 = vld [vmem:[#allocation5 + $0x228] sm:$0xff]
    %v189 = vld [vmem:[#allocation5 + $0x230] sm:$0xff]
    %v190 = vld [vmem:[#allocation5 + $0x238] sm:$0xff]
    %v191 = vld [vmem:[#allocation5 + $0x240] sm:$0xff]
    %v192 = vld [vmem:[#allocation5 + $0x248] sm:$0xff]
    %v193 = vld [vmem:[#allocation5 + $0x250] sm:$0xff]
    %v194 = vld [vmem:[#allocation5 + $0x258] sm:$0xff]
    %v195 = vld [vmem:[#allocation5 + $0x260] sm:$0xff]
    %v196 = vld [vmem:[#allocation5 + $0x268] sm:$0xff]
    %v197 = vld [vmem:[#allocation5 + $0x270] sm:$0xff]
    %v198 = vld [vmem:[#allocation5 + $0x278] sm:$0xff]
    %v199 = vld [vmem:[#allocation5 + $0x280] sm:$0xff]
    %v200 = vld [vmem:[#allocation5 + $0x288] sm:$0xff]
    %v201 = vld [vmem:[#allocation5 + $0x290] sm:$0xff]
    %v202 = vld [vmem:[#allocation5 + $0x298] sm:$0xff]
    %v203 = vld [vmem:[#allocation5 + $0x2a0] sm:$0xff]
    %v204 = vld [vmem:[#allocation5 + $0x2a8] sm:$0xff]
    %v205 = vld [vmem:[#allocation5 + $0x2b0] sm:$0xff]
    %v206 = vld [vmem:[#allocation5 + $0x2b8] sm:$0xff]
    %v207 = vld [vmem:[#allocation5 + $0x2c0] sm:$0xff]
    %v208 = vld [vmem:[#allocation5 + $0x2c8] sm:$0xff]
    %v209 = vld [vmem:[#allocation5 + $0x2d0] sm:$0xff]
    %v210 = vld [vmem:[#allocation5 + $0x2d8] sm:$0xff]
    %v211 = vld [vmem:[#allocation5 + $0x2e0] sm:$0xff]
    %v212 = vld [vmem:[#allocation5 + $0x2e8] sm:$0xff]
    %v213 = vld [vmem:[#allocation5 + $0x2f0] sm:$0xff]
    %v214 = vld [vmem:[#allocation5 + $0x2f8] sm:$0xff]
    %v215 = vld [vmem:[#allocation5 + $0x300] sm:$0xff]
    %v216 = vld [vmem:[#allocation5 + $0x308] sm:$0xff]
    %v217 = vld [vmem:[#allocation5 + $0x310] sm:$0xff]
    %v218 = vld [vmem:[#allocation5 + $0x318] sm:$0xff]
    %v219 = vld [vmem:[#allocation5 + $0x320] sm:$0xff]
    %v220 = vld [vmem:[#allocation5 + $0x328] sm:$0xff]
    %v221 = vld [vmem:[#allocation5 + $0x330] sm:$0xff]
    %v222 = vld [vmem:[#allocation5 + $0x338] sm:$0xff]
    %v223 = vld [vmem:[#allocation5 + $0x340] sm:$0xff]
    %v224 = vld [vmem:[#allocation5 + $0x348] sm:$0xff]
    %v225 = vld [vmem:[#allocation5 + $0x350] sm:$0xff]
    %v226 = vld [vmem:[#allocation5 + $0x358] sm:$0xff]
    %v227 = vld [vmem:[#allocation5 + $0x360] sm:$0xff]
    %v228 = vld [vmem:[#allocation5 + $0x368] sm:$0xff]
    %v229 = vld [vmem:[#allocation5 + $0x370] sm:$0xff]
    %v230 = vld [vmem:[#allocation5 + $0x378] sm:$0xff]
    %v231 = vld [vmem:[#allocation5 + $0x380] sm:$0xff]
    %v232 = vld [vmem:[#allocation5 + $0x388] sm:$0xff]
    %v233 = vld [vmem:[#allocation5 + $0x390] sm:$0xff]
    %v234 = vld [vmem:[#allocation5 + $0x398] sm:$0xff]
    %v235 = vld [vmem:[#allocation5 + $0x3a0] sm:$0xff]
    %v236 = vld [vmem:[#allocation5 + $0x3a8] sm:$0xff]
    %v237 = vld [vmem:[#allocation5 + $0x3b0] sm:$0xff]
    %v238 = vld [vmem:[#allocation5 + $0x3b8] sm:$0xff]
    %v239 = vld [vmem:[#allocation5 + $0x3c0] sm:$0xff]
    %v240 = vld [vmem:[#allocation5 + $0x3c8] sm:$0xff]
    %v241 = vld [vmem:[#allocation5 + $0x3d0] sm:$0xff]
    %v242 = vld [vmem:[#allocation5 + $0x3d8] sm:$0xff]
    %v243 = vld [vmem:[#allocation5 + $0x3e0] sm:$0xff]
    %v244 = vld [vmem:[#allocation5 + $0x3e8] sm:$0xff]
    %v245 = vld [vmem:[#allocation5 + $0x3f0] sm:$0xff]
    %v246 = vld [vmem:[#allocation5 + $0x3f8] sm:$0xff]
    %v247 = vld [vmem:[#allocation5 + $0x400] sm:$0xff]
    %v248 = vld [vmem:[#allocation5 + $0x408] sm:$0xff]
    %v249 = vld [vmem:[#allocation5 + $0x410] sm:$0xff]
    %v250 = vld [vmem:[#allocation5 + $0x418] sm:$0xff]
    %v251 = vld [vmem:[#allocation5 + $0x420] sm:$0xff]
    %v252 = vld [vmem:[#allocation5 + $0x428] sm:$0xff]
    %v253 = vld [vmem:[#allocation5 + $0x430] sm:$0xff]
    %v254 = vld [vmem:[#allocation5 + $0x438] sm:$0xff]
    %v255 = vld [vmem:[#allocation5 + $0x440] sm:$0xff]
    %v256 = vld [vmem:[#allocation5 + $0x448] sm:$0xff]
    %v257 = vld [vmem:[#allocation5 + $0x450] sm:$0xff]
    %v258 = vld [vmem:[#allocation5 + $0x458] sm:$0xff]
    %v259 = vld [vmem:[#allocation5 + $0x460] sm:$0xff]
    %v260 = vld [vmem:[#allocation5 + $0x468] sm:$0xff]
    %v261 = vld [vmem:[#allocation5 + $0x470] sm:$0xff]
    %v262 = vld [vmem:[#allocation5 + $0x478] sm:$0xff]
    %v263 = vld [vmem:[#allocation5 + $0x480] sm:$0xff]
    %v264 = vld [vmem:[#allocation5 + $0x488] sm:$0xff]
    %v265 = vld [vmem:[#allocation5 + $0x490] sm:$0xff]
    %v266 = vld [vmem:[#allocation5 + $0x498] sm:$0xff]
    %v267 = vld [vmem:[#allocation5 + $0x4a0] sm:$0xff]
    %v268 = vld [vmem:[#allocation5 + $0x4a8] sm:$0xff]
    %v269 = vld [vmem:[#allocation5 + $0x4b0] sm:$0xff]
    %v270 = vld [vmem:[#allocation5 + $0x4b8] sm:$0xff]
    %v271 = vld [vmem:[#allocation5 + $0x4c0] sm:$0xff]
    %v272 = vld [vmem:[#allocation5 + $0x4c8] sm:$0xff]
    %v273 = vld [vmem:[#allocation5 + $0x4d0] sm:$0xff]
    %v274 = vld [vmem:[#allocation5 + $0x4d8] sm:$0xff]
    %v275 = vld [vmem:[#allocation5 + $0x4e0] sm:$0xff]
    %v276 = vld [vmem:[#allocation5 + $0x4e8] sm:$0xff]
    %v277 = vld [vmem:[#allocation5 + $0x4f0] sm:$0xff]
    %v278 = vld [vmem:[#allocation5 + $0x4f8] sm:$0xff]
    %v279 = vld [vmem:[#allocation5 + $0x500] sm:$0xff]
    %v280 = vld [vmem:[#allocation5 + $0x508] sm:$0xff]
    %v281 = vld [vmem:[#allocation5 + $0x510] sm:$0xff]
    %v282 = vld [vmem:[#allocation5 + $0x518] sm:$0xff]
    %v283 = vld [vmem:[#allocation5 + $0x520] sm:$0xff]
    %v284 = vld [vmem:[#allocation5 + $0x528] sm:$0xff]
    %v285 = vld [vmem:[#allocation5 + $0x530] sm:$0xff]
    %v286 = vld [vmem:[#allocation5 + $0x538] sm:$0xff]
    %v287 = vld [vmem:[#allocation5 + $0x540] sm:$0xff]
    %v288 = vld [vmem:[#allocation5 + $0x548] sm:$0xff]
    %v289 = vld [vmem:[#allocation5 + $0x550] sm:$0xff]
    %v290 = vld [vmem:[#allocation5 + $0x558] sm:$0xff]
    %v291 = vld [vmem:[#allocation5 + $0x560] sm:$0xff]
    %v292 = vld [vmem:[#allocation5 + $0x568] sm:$0xff]
    %v293 = vld [vmem:[#allocation5 + $0x570] sm:$0xff]
    %v294 = vld [vmem:[#allocation5 + $0x578] sm:$0xff]
    %v295 = vld [vmem:[#allocation5 + $0x580] sm:$0xff]
    %v296 = vld [vmem:[#allocation5 + $0x588] sm:$0xff]
    %v297 = vld [vmem:[#allocation5 + $0x590] sm:$0xff]
    %v298 = vld [vmem:[#allocation5 + $0x598] sm:$0xff]
    %v299 = vld [vmem:[#allocation5 + $0x5a0] sm:$0xff]
    %v300 = vld [vmem:[#allocation5 + $0x5a8] sm:$0xff]
    %v301 = vld [vmem:[#allocation5 + $0x5b0] sm:$0xff]
    %v302 = vld [vmem:[#allocation5 + $0x5b8] sm:$0xff]
    %v303 = vld [vmem:[#allocation5 + $0x5c0] sm:$0xff]
    %v304 = vld [vmem:[#allocation5 + $0x5c8] sm:$0xff]
    %v305 = vld [vmem:[#allocation5 + $0x5d0] sm:$0xff]
    %v306 = vld [vmem:[#allocation5 + $0x5d8] sm:$0xff]
    %v307 = vld [vmem:[#allocation5 + $0x5e0] sm:$0xff]
    %v308 = vld [vmem:[#allocation5 + $0x5e8] sm:$0xff]
    %v309 = vld [vmem:[#allocation5 + $0x5f0] sm:$0xff]
    %v310 = vld [vmem:[#allocation5 + $0x5f8] sm:$0xff]
    %v311 = vld [vmem:[#allocation5 + $0x600] sm:$0xff]
    %v312 = vld [vmem:[#allocation5 + $0x608] sm:$0xff]
    %v313 = vld [vmem:[#allocation5 + $0x610] sm:$0xff]
    %v314 = vld [vmem:[#allocation5 + $0x618] sm:$0xff]
    %v315 = vld [vmem:[#allocation5 + $0x620] sm:$0xff]
    %v316 = vld [vmem:[#allocation5 + $0x628] sm:$0xff]
    %v317 = vld [vmem:[#allocation5 + $0x630] sm:$0xff]
    %v318 = vld [vmem:[#allocation5 + $0x638] sm:$0xff]
    %v319 = vld [vmem:[#allocation5 + $0x640] sm:$0xff]
    %v320 = vld [vmem:[#allocation5 + $0x648] sm:$0xff]
    %v321 = vld [vmem:[#allocation5 + $0x650] sm:$0xff]
    %v322 = vld [vmem:[#allocation5 + $0x658] sm:$0xff]
    %v323 = vld [vmem:[#allocation5 + $0x660] sm:$0xff]
    %v324 = vld [vmem:[#allocation5 + $0x668] sm:$0xff]
    %v325 = vld [vmem:[#allocation5 + $0x670] sm:$0xff]
    %v326 = vld [vmem:[#allocation5 + $0x678] sm:$0xff]
    %v327 = vld [vmem:[#allocation5 + $0x680] sm:$0xff]
    %v328 = vld [vmem:[#allocation5 + $0x688] sm:$0xff]
    %v329 = vld [vmem:[#allocation5 + $0x690] sm:$0xff]
    %v330 = vld [vmem:[#allocation5 + $0x698] sm:$0xff]
    %v331 = vld [vmem:[#allocation5 + $0x6a0] sm:$0xff]
    %v332 = vld [vmem:[#allocation5 + $0x6a8] sm:$0xff]
    %v333 = vld [vmem:[#allocation5 + $0x6b0] sm:$0xff]
    %v334 = vld [vmem:[#allocation5 + $0x6b8] sm:$0xff]
    %v335 = vld [vmem:[#allocation5 + $0x6c0] sm:$0xff]
    %v336 = vld [vmem:[#allocation5 + $0x6c8] sm:$0xff]
    %v337 = vld [vmem:[#allocation5 + $0x6d0] sm:$0xff]
    %v338 = vld [vmem:[#allocation5 + $0x6d8] sm:$0xff]
    %v339 = vld [vmem:[#allocation5 + $0x6e0] sm:$0xff]
    %v340 = vld [vmem:[#allocation5 + $0x6e8] sm:$0xff]
    %v341 = vld [vmem:[#allocation5 + $0x6f0] sm:$0xff]
    %v342 = vld [vmem:[#allocation5 + $0x6f8] sm:$0xff]
    %v343 = vld [vmem:[#allocation5 + $0x700] sm:$0xff]
    %v344 = vld [vmem:[#allocation5 + $0x708] sm:$0xff]
    %v345 = vld [vmem:[#allocation5 + $0x710] sm:$0xff]
    %v346 = vld [vmem:[#allocation5 + $0x718] sm:$0xff]
    %v347 = vld [vmem:[#allocation5 + $0x720] sm:$0xff]
    %v348 = vld [vmem:[#allocation5 + $0x728] sm:$0xff]
    %v349 = vld [vmem:[#allocation5 + $0x730] sm:$0xff]
    %v350 = vld [vmem:[#allocation5 + $0x738] sm:$0xff]
    %v351 = vld [vmem:[#allocation5 + $0x740] sm:$0xff]
    %v352 = vld [vmem:[#allocation5 + $0x748] sm:$0xff]
    %v353 = vld [vmem:[#allocation5 + $0x750] sm:$0xff]
    %v354 = vld [vmem:[#allocation5 + $0x758] sm:$0xff]
    %v355 = vld [vmem:[#allocation5 + $0x760] sm:$0xff]
    %v356 = vld [vmem:[#allocation5 + $0x768] sm:$0xff]
    %v357 = vld [vmem:[#allocation5 + $0x770] sm:$0xff]
    %v358 = vld [vmem:[#allocation5 + $0x778] sm:$0xff]
    %v359 = vld [vmem:[#allocation5 + $0x780] sm:$0xff]
    %v360 = vld [vmem:[#allocation5 + $0x788] sm:$0xff]
    %v361 = vld [vmem:[#allocation5 + $0x790] sm:$0xff]
    %v362 = vld [vmem:[#allocation5 + $0x798] sm:$0xff]
    %v363 = vld [vmem:[#allocation5 + $0x7a0] sm:$0xff]
    %v364 = vld [vmem:[#allocation5 + $0x7a8] sm:$0xff]
    %v365 = vld [vmem:[#allocation5 + $0x7b0] sm:$0xff]
    %v366 = vld [vmem:[#allocation5 + $0x7b8] sm:$0xff]
    %v367 = vld [vmem:[#allocation5 + $0x7c0] sm:$0xff]
    %v368 = vld [vmem:[#allocation5 + $0x7c8] sm:$0xff]
    %v369 = vld [vmem:[#allocation5 + $0x7d0] sm:$0xff]
    %v370 = vld [vmem:[#allocation5 + $0x7d8] sm:$0xff]
    %v371 = vld [vmem:[#allocation5 + $0x7e0] sm:$0xff]
    %v372 = vld [vmem:[#allocation5 + $0x7e8] sm:$0xff]
    %v373 = vld [vmem:[#allocation5 + $0x7f0] sm:$0xff]
    %v374 = vld [vmem:[#allocation5 + $0x7f8] sm:$0xff]
    %v375 = vld [vmem:[#allocation5 + $0x800] sm:$0xff]
    %v376 = vld [vmem:[#allocation5 + $0x808] sm:$0xff]
    %v377 = vld [vmem:[#allocation5 + $0x810] sm:$0xff]
    %v378 = vld [vmem:[#allocation5 + $0x818] sm:$0xff]
    %v379 = vld [vmem:[#allocation5 + $0x820] sm:$0xff]
    %v380 = vld [vmem:[#allocation5 + $0x828] sm:$0xff]
    %v381 = vld [vmem:[#allocation5 + $0x830] sm:$0xff]
    %v382 = vld [vmem:[#allocation5 + $0x838] sm:$0xff]
    %v383 = vld [vmem:[#allocation5 + $0x840] sm:$0xff]
    %v384 = vld [vmem:[#allocation5 + $0x848] sm:$0xff]
    %v385 = vld [vmem:[#allocation5 + $0x850] sm:$0xff]
    %v386 = vld [vmem:[#allocation5 + $0x858] sm:$0xff]
    %v387 = vld [vmem:[#allocation5 + $0x860] sm:$0xff]
    %v388 = vld [vmem:[#allocation5 + $0x868] sm:$0xff]
    %v389 = vld [vmem:[#allocation5 + $0x870] sm:$0xff]
    %v390 = vld [vmem:[#allocation5 + $0x878] sm:$0xff]
    %v391 = vld [vmem:[#allocation5 + $0x880] sm:$0xff]
    %v392 = vld [vmem:[#allocation5 + $0x888] sm:$0xff]
    %v393 = vld [vmem:[#allocation5 + $0x890] sm:$0xff]
    %v394 = vld [vmem:[#allocation5 + $0x898] sm:$0xff]
    %v395 = vld [vmem:[#allocation5 + $0x8a0] sm:$0xff]
    %v396 = vld [vmem:[#allocation5 + $0x8a8] sm:$0xff]
    %v397 = vld [vmem:[#allocation5 + $0x8b0] sm:$0xff]
    %v398 = vld [vmem:[#allocation5 + $0x8b8] sm:$0xff]
    %v399 = vld [vmem:[#allocation5 + $0x8c0] sm:$0xff]
    %v400 = vld [vmem:[#allocation5 + $0x8c8] sm:$0xff]
    %v401 = vld [vmem:[#allocation5 + $0x8d0] sm:$0xff]
    %v402 = vld [vmem:[#allocation5 + $0x8d8] sm:$0xff]
    %v403 = vld [vmem:[#allocation5 + $0x8e0] sm:$0xff]
    %v404 = vld [vmem:[#allocation5 + $0x8e8] sm:$0xff]
    %v405 = vld [vmem:[#allocation5 + $0x8f0] sm:$0xff]
    %v406 = vld [vmem:[#allocation5 + $0x8f8] sm:$0xff]
    %v407 = vld [vmem:[#allocation5 + $0x900] sm:$0xff]
    %v408 = vld [vmem:[#allocation5 + $0x908] sm:$0xff]
    %v409 = vld [vmem:[#allocation5 + $0x910] sm:$0xff]
    %v410 = vld [vmem:[#allocation5 + $0x918] sm:$0xff]
    %v411 = vld [vmem:[#allocation5 + $0x920] sm:$0xff]
    %v412 = vld [vmem:[#allocation5 + $0x928] sm:$0xff]
    %v413 = vld [vmem:[#allocation5 + $0x930] sm:$0xff]
    %v414 = vld [vmem:[#allocation5 + $0x938] sm:$0xff]
    %v415 = vld [vmem:[#allocation5 + $0x940] sm:$0xff]
    %v416 = vld [vmem:[#allocation5 + $0x948] sm:$0xff]
    %v417 = vld [vmem:[#allocation5 + $0x950] sm:$0xff]
    %v418 = vld [vmem:[#allocation5 + $0x958] sm:$0xff]
    %v419 = vld [vmem:[#allocation5 + $0x960] sm:$0xff]
    %v420 = vld [vmem:[#allocation5 + $0x968] sm:$0xff]
    %v421 = vld [vmem:[#allocation5 + $0x970] sm:$0xff]
    %v422 = vld [vmem:[#allocation5 + $0x978] sm:$0xff]
    %v423 = vld [vmem:[#allocation5 + $0x980] sm:$0xff]
    %v424 = vld [vmem:[#allocation5 + $0x988] sm:$0xff]
    %v425 = vld [vmem:[#allocation5 + $0x990] sm:$0xff]
    %v426 = vld [vmem:[#allocation5 + $0x998] sm:$0xff]
    %v427 = vld [vmem:[#allocation5 + $0x9a0] sm:$0xff]
    %v428 = vld [vmem:[#allocation5 + $0x9a8] sm:$0xff]
    %v429 = vld [vmem:[#allocation5 + $0x9b0] sm:$0xff]
    %v430 = vld [vmem:[#allocation5 + $0x9b8] sm:$0xff]
    %v431 = vld [vmem:[#allocation5 + $0x9c0] sm:$0xff]
    %v432 = vld [vmem:[#allocation5 + $0x9c8] sm:$0xff]
    %v433 = vld [vmem:[#allocation5 + $0x9d0] sm:$0xff]
    %v434 = vld [vmem:[#allocation5 + $0x9d8] sm:$0xff]
    %v435 = vld [vmem:[#allocation5 + $0x9e0] sm:$0xff]
    %v436 = vld [vmem:[#allocation5 + $0x9e8] sm:$0xff]
    %v437 = vld [vmem:[#allocation5 + $0x9f0] sm:$0xff]
    %v438 = vld [vmem:[#allocation5 + $0x9f8] sm:$0xff]
    %v439 = vld [vmem:[#allocation5 + $0xa00] sm:$0xff]
    %v440 = vld [vmem:[#allocation5 + $0xa08] sm:$0xff]
    %v441 = vld [vmem:[#allocation5 + $0xa10] sm:$0xff]
    %v442 = vld [vmem:[#allocation5 + $0xa18] sm:$0xff]
    %v443 = vld [vmem:[#allocation5 + $0xa20] sm:$0xff]
    %v444 = vld [vmem:[#allocation5 + $0xa28] sm:$0xff]
    %v445 = vld [vmem:[#allocation5 + $0xa30] sm:$0xff]
    %v446 = vld [vmem:[#allocation5 + $0xa38] sm:$0xff]
    %v447 = vld [vmem:[#allocation5 + $0xa40] sm:$0xff]
    %v448 = vld [vmem:[#allocation5 + $0xa48] sm:$0xff]
    %v449 = vld [vmem:[#allocation5 + $0xa50] sm:$0xff]
    %v450 = vld [vmem:[#allocation5 + $0xa58] sm:$0xff]
    %v451 = vld [vmem:[#allocation5 + $0xa60] sm:$0xff]
    %v452 = vld [vmem:[#allocation5 + $0xa68] sm:$0xff]
    %v453 = vld [vmem:[#allocation5 + $0xa70] sm:$0xff]
    %v454 = vld [vmem:[#allocation5 + $0xa78] sm:$0xff]
    %v455 = vld [vmem:[#allocation5 + $0xa80] sm:$0xff]
    %v456 = vld [vmem:[#allocation5 + $0xa88] sm:$0xff]
    %v457 = vld [vmem:[#allocation5 + $0xa90] sm:$0xff]
    %v458 = vld [vmem:[#allocation5 + $0xa98] sm:$0xff]
    %v459 = vld [vmem:[#allocation5 + $0xaa0] sm:$0xff]
    %v460 = vld [vmem:[#allocation5 + $0xaa8] sm:$0xff]
    %v461 = vld [vmem:[#allocation5 + $0xab0] sm:$0xff]
    %v462 = vld [vmem:[#allocation5 + $0xab8] sm:$0xff]
    %v463 = vld [vmem:[#allocation5 + $0xac0] sm:$0xff]
    %v464 = vld [vmem:[#allocation5 + $0xac8] sm:$0xff]
    %v465 = vld [vmem:[#allocation5 + $0xad0] sm:$0xff]
    %v466 = vld [vmem:[#allocation5 + $0xad8] sm:$0xff]
    %v467 = vld [vmem:[#allocation5 + $0xae0] sm:$0xff]
    %v468 = vld [vmem:[#allocation5 + $0xae8] sm:$0xff]
    %v469 = vld [vmem:[#allocation5 + $0xaf0] sm:$0xff]
    %v470 = vld [vmem:[#allocation5 + $0xaf8] sm:$0xff]
    %v471 = vld [vmem:[#allocation5 + $0xb00] sm:$0xff]
    %v472 = vld [vmem:[#allocation5 + $0xb08] sm:$0xff]
    %v473 = vld [vmem:[#allocation5 + $0xb10] sm:$0xff]
    %v474 = vld [vmem:[#allocation5 + $0xb18] sm:$0xff]
    %v475 = vld [vmem:[#allocation5 + $0xb20] sm:$0xff]
    %v476 = vld [vmem:[#allocation5 + $0xb28] sm:$0xff]
    %v477 = vld [vmem:[#allocation5 + $0xb30] sm:$0xff]
    %v478 = vld [vmem:[#allocation5 + $0xb38] sm:$0xff]
    %v479 = vld [vmem:[#allocation5 + $0xb40] sm:$0xff]
    %v480 = vld [vmem:[#allocation5 + $0xb48] sm:$0xff]
    %v481 = vld [vmem:[#allocation5 + $0xb50] sm:$0xff]
    %v482 = vld [vmem:[#allocation5 + $0xb58] sm:$0xff]
    %v483 = vld [vmem:[#allocation5 + $0xb60] sm:$0xff]
    %v484 = vld [vmem:[#allocation5 + $0xb68] sm:$0xff]
    %v485 = vld [vmem:[#allocation5 + $0xb70] sm:$0xff]
    %v486 = vld [vmem:[#allocation5 + $0xb78] sm:$0xff]
    %v487 = vld [vmem:[#allocation5 + $0xb80] sm:$0xff]
    %v488 = vld [vmem:[#allocation5 + $0xb88] sm:$0xff]
    %v489 = vld [vmem:[#allocation5 + $0xb90] sm:$0xff]
    %v490 = vld [vmem:[#allocation5 + $0xb98] sm:$0xff]
    %v491 = vld [vmem:[#allocation5 + $0xba0] sm:$0xff]
    %v492 = vld [vmem:[#allocation5 + $0xba8] sm:$0xff]
    %v493 = vld [vmem:[#allocation5 + $0xbb0] sm:$0xff]
    %v494 = vld [vmem:[#allocation5 + $0xbb8] sm:$0xff]
    %v495 = vld [vmem:[#allocation5 + $0xbc0] sm:$0xff]
    %v496 = vld [vmem:[#allocation5 + $0xbc8] sm:$0xff]
    %v497 = vld [vmem:[#allocation5 + $0xbd0] sm:$0xff]
    %v498 = vld [vmem:[#allocation5 + $0xbd8] sm:$0xff]
    %v499 = vld [vmem:[#allocation5 + $0xbe0] sm:$0xff]
    %v500 = vld [vmem:[#allocation5 + $0xbe8] sm:$0xff]
    %v501 = vld [vmem:[#allocation5 + $0xbf0] sm:$0xff]
    %v502 = vld [vmem:[#allocation5 + $0xbf8] sm:$0xff]
    %v503 = vld [vmem:[#allocation5 + $0xc00] sm:$0xff]
    %v504 = vld [vmem:[#allocation5 + $0xc08] sm:$0xff]
    %v505 = vld [vmem:[#allocation5 + $0xc10] sm:$0xff]
    %v506 = vld [vmem:[#allocation5 + $0xc18] sm:$0xff]
    %v507 = vld [vmem:[#allocation5 + $0xc20] sm:$0xff]
    %v508 = vld [vmem:[#allocation5 + $0xc28] sm:$0xff]
    %v509 = vld [vmem:[#allocation5 + $0xc30] sm:$0xff]
    %v510 = vld [vmem:[#allocation5 + $0xc38] sm:$0xff]
    %v511 = vld [vmem:[#allocation5 + $0xc40] sm:$0xff]
    %v512 = vld [vmem:[#allocation5 + $0xc48] sm:$0xff]
    %v513 = vld [vmem:[#allocation5 + $0xc50] sm:$0xff]
    %v514 = vld [vmem:[#allocation5 + $0xc58] sm:$0xff]
    %v515 = vld [vmem:[#allocation5 + $0xc60] sm:$0xff]
    %v516 = vld [vmem:[#allocation5 + $0xc68] sm:$0xff]
    %v517 = vld [vmem:[#allocation5 + $0xc70] sm:$0xff]
    %v518 = vld [vmem:[#allocation5 + $0xc78] sm:$0xff]
    %v519 = vld [vmem:[#allocation5 + $0xc80] sm:$0xff]
    %v520 = vld [vmem:[#allocation5 + $0xc88] sm:$0xff]
    %v521 = vld [vmem:[#allocation5 + $0xc90] sm:$0xff]
    %v522 = vld [vmem:[#allocation5 + $0xc98] sm:$0xff]
    %v523 = vld [vmem:[#allocation5 + $0xca0] sm:$0xff]
    %v524 = vld [vmem:[#allocation5 + $0xca8] sm:$0xff]
    %v525 = vld [vmem:[#allocation5 + $0xcb0] sm:$0xff]
    %v526 = vld [vmem:[#allocation5 + $0xcb8] sm:$0xff]
    %v527 = vld [vmem:[#allocation5 + $0xcc0] sm:$0xff]
    %v528 = vld [vmem:[#allocation5 + $0xcc8] sm:$0xff]
    %v529 = vld [vmem:[#allocation5 + $0xcd0] sm:$0xff]
    %v530 = vld [vmem:[#allocation5 + $0xcd8] sm:$0xff]
    %v531 = vld [vmem:[#allocation5 + $0xce0] sm:$0xff]
    %v532 = vld [vmem:[#allocation5 + $0xce8] sm:$0xff]
    %v533 = vld [vmem:[#allocation5 + $0xcf0] sm:$0xff]
    %v534 = vld [vmem:[#allocation5 + $0xcf8] sm:$0xff]
    %v535 = vld [vmem:[#allocation5 + $0xd00] sm:$0xff]
    %v536 = vld [vmem:[#allocation5 + $0xd08] sm:$0xff]
    %v537 = vld [vmem:[#allocation5 + $0xd10] sm:$0xff]
    %v538 = vld [vmem:[#allocation5 + $0xd18] sm:$0xff]
    %v539 = vld [vmem:[#allocation5 + $0xd20] sm:$0xff]
    %v540 = vld [vmem:[#allocation5 + $0xd28] sm:$0xff]
    %v541 = vld [vmem:[#allocation5 + $0xd30] sm:$0xff]
    %v542 = vld [vmem:[#allocation5 + $0xd38] sm:$0xff]
    %v543 = vld [vmem:[#allocation5 + $0xd40] sm:$0xff]
    %v544 = vld [vmem:[#allocation5 + $0xd48] sm:$0xff]
    %v545 = vld [vmem:[#allocation5 + $0xd50] sm:$0xff]
    %v546 = vld [vmem:[#allocation5 + $0xd58] sm:$0xff]
    %v547 = vld [vmem:[#allocation5 + $0xd60] sm:$0xff]
    %v548 = vld [vmem:[#allocation5 + $0xd68] sm:$0xff]
    %v549 = vld [vmem:[#allocation5 + $0xd70] sm:$0xff]
    %v550 = vld [vmem:[#allocation5 + $0xd78] sm:$0xff]
    %v551 = vld [vmem:[#allocation5 + $0xd80] sm:$0xff]
    %v552 = vld [vmem:[#allocation5 + $0xd88] sm:$0xff]
    %v553 = vld [vmem:[#allocation5 + $0xd90] sm:$0xff]
    %v554 = vld [vmem:[#allocation5 + $0xd98] sm:$0xff]
    %v555 = vld [vmem:[#allocation5 + $0xda0] sm:$0xff]
    %v556 = vld [vmem:[#allocation5 + $0xda8] sm:$0xff]
    %v557 = vld [vmem:[#allocation5 + $0xdb0] sm:$0xff]
    %v558 = vld [vmem:[#allocation5 + $0xdb8] sm:$0xff]
    %v559 = vld [vmem:[#allocation5 + $0xdc0] sm:$0xff]
    %v560 = vld [vmem:[#allocation5 + $0xdc8] sm:$0xff]
    %v561 = vld [vmem:[#allocation5 + $0xdd0] sm:$0xff]
    %v562 = vld [vmem:[#allocation5 + $0xdd8] sm:$0xff]
    %v563 = vld [vmem:[#allocation5 + $0xde0] sm:$0xff]
    %v564 = vld [vmem:[#allocation5 + $0xde8] sm:$0xff]
    %v565 = vld [vmem:[#allocation5 + $0xdf0] sm:$0xff]
    %v566 = vld [vmem:[#allocation5 + $0xdf8] sm:$0xff]
    %v567 = vld [vmem:[#allocation7] sm:$0xff]
    %v569 = vlaneseq
    %v570 = vshrl.u32 %v569, 7
    %v571 = vsub.s32 0, %v570
    %v572 = vrot.slane %v567, %v571
    %v573 = vlaneseq
    %v574 = vshrl.u32 %v573, 7
    %v575 = vsub.s32 1, %v574
    %v576 = vrot.slane %v567, %v575
    %v577 = vlaneseq
    %v578 = vshrl.u32 %v577, 7
    %v579 = vsub.s32 2, %v578
    %v580 = vrot.slane %v567, %v579
    %v581 = vlaneseq
    %v582 = vshrl.u32 %v581, 7
    %v583 = vsub.s32 3, %v582
    %v584 = vrot.slane %v567, %v583
    %v585 = vlaneseq
    %v586 = vshrl.u32 %v585, 7
    %v587 = vsub.s32 4, %v586
    %v588 = vrot.slane %v567, %v587
    %v589 = vlaneseq
    %v590 = vshrl.u32 %v589, 7
    %v591 = vsub.s32 5, %v590
    %v592 = vrot.slane %v567, %v591
    %v593 = vlaneseq
    %v594 = vshrl.u32 %v593, 7
    %v595 = vsub.s32 6, %v594
    %v596 = vrot.slane %v567, %v595
    %v597 = vlaneseq
    %v598 = vshrl.u32 %v597, 7
    %v599 = vsub.s32 7, %v598
    %v600 = vrot.slane %v567, %v599
    %v613 = vunpack.c.l.b16 %v115
    %v614 = vunpack.c.h.b16 %v115
    %v615 = vunpack.c.l.b16 %v116
    %v616 = vunpack.c.h.b16 %v116
    %v617 = vunpack.c.l.b16 %v117
    %v618 = vunpack.c.h.b16 %v117
    %v619 = vunpack.c.l.b16 %v118
    %v620 = vpack.c.b16 %v613, %v613
    %v621 = vpack.c.b16 %v614, %v614
    %v622 = vpack.c.b16 %v615, %v615
    %v623 = vpack.c.b16 %v616, %v616
    %v624 = vpack.c.b16 %v617, %v617
    %v625 = vpack.c.b16 %v618, %v618
    %v626 = vpack.c.b16 %v619, %v619
    %v1082 = vunpack.c.l.b16 %v119
    %v1083 = vunpack.c.h.b16 %v119
    %v1084 = vunpack.c.l.b16 %v120
    %v1085 = vunpack.c.h.b16 %v120
    %v1086 = vunpack.c.l.b16 %v121
    %v1087 = vunpack.c.h.b16 %v121
    %v1088 = vunpack.c.l.b16 %v122
    %v1089 = vunpack.c.h.b16 %v122
    %v1090 = vunpack.c.l.b16 %v123
    %v1091 = vunpack.c.h.b16 %v123
    %v1092 = vunpack.c.l.b16 %v124
    %v1093 = vunpack.c.h.b16 %v124
    %v1094 = vunpack.c.l.b16 %v125
    %v1095 = vunpack.c.h.b16 %v125
    %v1096 = vunpack.c.l.b16 %v126
    %v1097 = vunpack.c.h.b16 %v126
    %v1098 = vunpack.c.l.b16 %v127
    %v1099 = vunpack.c.h.b16 %v127
    %v1100 = vunpack.c.l.b16 %v128
    %v1101 = vunpack.c.h.b16 %v128
    %v1102 = vunpack.c.l.b16 %v129
    %v1103 = vunpack.c.h.b16 %v129
    %v1104 = vunpack.c.l.b16 %v130
    %v1105 = vunpack.c.h.b16 %v130
    %v1106 = vunpack.c.l.b16 %v131
    %v1107 = vunpack.c.h.b16 %v131
    %v1108 = vunpack.c.l.b16 %v132
    %v1109 = vunpack.c.h.b16 %v132
    %v1110 = vunpack.c.l.b16 %v133
    %v1111 = vunpack.c.h.b16 %v133
    %v1112 = vunpack.c.l.b16 %v134
    %v1113 = vunpack.c.h.b16 %v134
    %v1114 = vunpack.c.l.b16 %v135
    %v1115 = vunpack.c.h.b16 %v135
    %v1116 = vunpack.c.l.b16 %v136
    %v1117 = vunpack.c.h.b16 %v136
    %v1118 = vunpack.c.l.b16 %v137
    %v1119 = vunpack.c.h.b16 %v137
    %v1120 = vunpack.c.l.b16 %v138
    %v1121 = vunpack.c.h.b16 %v138
    %v1122 = vunpack.c.l.b16 %v139
    %v1123 = vunpack.c.h.b16 %v139
    %v1124 = vunpack.c.l.b16 %v140
    %v1125 = vunpack.c.h.b16 %v140
    %v1126 = vunpack.c.l.b16 %v141
    %v1127 = vunpack.c.h.b16 %v141
    %v1128 = vunpack.c.l.b16 %v142
    %v1129 = vunpack.c.h.b16 %v142
    %v1130 = vunpack.c.l.b16 %v143
    %v1131 = vunpack.c.h.b16 %v143
    %v1132 = vunpack.c.l.b16 %v144
    %v1133 = vunpack.c.h.b16 %v144
    %v1134 = vunpack.c.l.b16 %v145
    %v1135 = vunpack.c.h.b16 %v145
    %v1136 = vunpack.c.l.b16 %v146
    %v1137 = vunpack.c.h.b16 %v146
    %v1138 = vunpack.c.l.b16 %v147
    %v1139 = vunpack.c.h.b16 %v147
    %v1140 = vunpack.c.l.b16 %v148
    %v1141 = vunpack.c.h.b16 %v148
    %v1142 = vunpack.c.l.b16 %v149
    %v1143 = vunpack.c.h.b16 %v149
    %v1144 = vunpack.c.l.b16 %v150
    %v1145 = vunpack.c.h.b16 %v150
    %v1146 = vunpack.c.l.b16 %v151
    %v1147 = vunpack.c.h.b16 %v151
    %v1148 = vunpack.c.l.b16 %v152
    %v1149 = vunpack.c.h.b16 %v152
    %v1150 = vunpack.c.l.b16 %v153
    %v1151 = vunpack.c.h.b16 %v153
    %v1152 = vunpack.c.l.b16 %v154
    %v1153 = vunpack.c.h.b16 %v154
    %v1154 = vunpack.c.l.b16 %v155
    %v1155 = vunpack.c.h.b16 %v155
    %v1156 = vunpack.c.l.b16 %v156
    %v1157 = vunpack.c.h.b16 %v156
    %v1158 = vunpack.c.l.b16 %v157
    %v1159 = vunpack.c.h.b16 %v157
    %v1160 = vunpack.c.l.b16 %v158
    %v1161 = vunpack.c.h.b16 %v158
    %v1162 = vunpack.c.l.b16 %v159
    %v1163 = vunpack.c.h.b16 %v159
    %v1164 = vunpack.c.l.b16 %v160
    %v1165 = vunpack.c.h.b16 %v160
    %v1166 = vunpack.c.l.b16 %v161
    %v1167 = vunpack.c.h.b16 %v161
    %v1168 = vunpack.c.l.b16 %v162
    %v1169 = vunpack.c.h.b16 %v162
    %v1170 = vunpack.c.l.b16 %v163
    %v1171 = vunpack.c.h.b16 %v163
    %v1172 = vunpack.c.l.b16 %v164
    %v1173 = vunpack.c.h.b16 %v164
    %v1174 = vunpack.c.l.b16 %v165
    %v1175 = vunpack.c.h.b16 %v165
    %v1176 = vunpack.c.l.b16 %v166
    %v1177 = vunpack.c.h.b16 %v166
    %v1178 = vunpack.c.l.b16 %v167
    %v1179 = vunpack.c.h.b16 %v167
    %v1180 = vunpack.c.l.b16 %v168
    %v1181 = vunpack.c.h.b16 %v168
    %v1182 = vunpack.c.l.b16 %v169
    %v1183 = vunpack.c.h.b16 %v169
    %v1184 = vunpack.c.l.b16 %v170
    %v1185 = vunpack.c.h.b16 %v170
    %v1186 = vunpack.c.l.b16 %v171
    %v1187 = vunpack.c.h.b16 %v171
    %v1188 = vunpack.c.l.b16 %v172
    %v1189 = vunpack.c.h.b16 %v172
    %v1190 = vunpack.c.l.b16 %v173
    %v1191 = vunpack.c.h.b16 %v173
    %v1192 = vunpack.c.l.b16 %v174
    %v1193 = vunpack.c.h.b16 %v174
    %v1194 = vunpack.c.l.b16 %v175
    %v1195 = vunpack.c.h.b16 %v175
    %v1196 = vunpack.c.l.b16 %v176
    %v1197 = vunpack.c.h.b16 %v176
    %v1198 = vunpack.c.l.b16 %v177
    %v1199 = vunpack.c.h.b16 %v177
    %v1200 = vunpack.c.l.b16 %v178
    %v1201 = vunpack.c.h.b16 %v178
    %v1202 = vunpack.c.l.b16 %v179
    %v1203 = vunpack.c.h.b16 %v179
    %v1204 = vunpack.c.l.b16 %v180
    %v1205 = vunpack.c.h.b16 %v180
    %v1206 = vunpack.c.l.b16 %v181
    %v1207 = vunpack.c.h.b16 %v181
    %v1208 = vunpack.c.l.b16 %v182
    %v1209 = vunpack.c.h.b16 %v182
    %v1210 = vunpack.c.l.b16 %v183
    %v1211 = vunpack.c.h.b16 %v183
    %v1212 = vunpack.c.l.b16 %v184
    %v1213 = vunpack.c.h.b16 %v184
    %v1214 = vunpack.c.l.b16 %v185
    %v1215 = vunpack.c.h.b16 %v185
    %v1216 = vunpack.c.l.b16 %v186
    %v1217 = vunpack.c.h.b16 %v186
    %v1218 = vunpack.c.l.b16 %v187
    %v1219 = vunpack.c.h.b16 %v187
    %v1220 = vunpack.c.l.b16 %v188
    %v1221 = vunpack.c.h.b16 %v188
    %v1222 = vunpack.c.l.b16 %v189
    %v1223 = vunpack.c.h.b16 %v189
    %v1224 = vunpack.c.l.b16 %v190
    %v1225 = vunpack.c.h.b16 %v190
    %v1226 = vunpack.c.l.b16 %v191
    %v1227 = vunpack.c.h.b16 %v191
    %v1228 = vunpack.c.l.b16 %v192
    %v1229 = vunpack.c.h.b16 %v192
    %v1230 = vunpack.c.l.b16 %v193
    %v1231 = vunpack.c.h.b16 %v193
    %v1232 = vunpack.c.l.b16 %v194
    %v1233 = vunpack.c.h.b16 %v194
    %v1234 = vunpack.c.l.b16 %v195
    %v1235 = vunpack.c.h.b16 %v195
    %v1236 = vunpack.c.l.b16 %v196
    %v1237 = vunpack.c.h.b16 %v196
    %v1238 = vunpack.c.l.b16 %v197
    %v1239 = vunpack.c.h.b16 %v197
    %v1240 = vunpack.c.l.b16 %v198
    %v1241 = vunpack.c.h.b16 %v198
    %v1242 = vunpack.c.l.b16 %v199
    %v1243 = vunpack.c.h.b16 %v199
    %v1244 = vunpack.c.l.b16 %v200
    %v1245 = vunpack.c.h.b16 %v200
    %v1246 = vunpack.c.l.b16 %v201
    %v1247 = vunpack.c.h.b16 %v201
    %v1248 = vunpack.c.l.b16 %v202
    %v1249 = vunpack.c.h.b16 %v202
    %v1250 = vunpack.c.l.b16 %v203
    %v1251 = vunpack.c.h.b16 %v203
    %v1252 = vunpack.c.l.b16 %v204
    %v1253 = vunpack.c.h.b16 %v204
    %v1254 = vunpack.c.l.b16 %v205
    %v1255 = vunpack.c.h.b16 %v205
    %v1256 = vunpack.c.l.b16 %v206
    %v1257 = vunpack.c.h.b16 %v206
    %v1258 = vunpack.c.l.b16 %v207
    %v1259 = vunpack.c.h.b16 %v207
    %v1260 = vunpack.c.l.b16 %v208
    %v1261 = vunpack.c.h.b16 %v208
    %v1262 = vunpack.c.l.b16 %v209
    %v1263 = vunpack.c.h.b16 %v209
    %v1264 = vunpack.c.l.b16 %v210
    %v1265 = vunpack.c.h.b16 %v210
    %v1266 = vunpack.c.l.b16 %v211
    %v1267 = vunpack.c.h.b16 %v211
    %v1268 = vunpack.c.l.b16 %v212
    %v1269 = vunpack.c.h.b16 %v212
    %v1270 = vunpack.c.l.b16 %v213
    %v1271 = vunpack.c.h.b16 %v213
    %v1272 = vunpack.c.l.b16 %v214
    %v1273 = vunpack.c.h.b16 %v214
    %v1274 = vunpack.c.l.b16 %v215
    %v1275 = vunpack.c.h.b16 %v215
    %v1276 = vunpack.c.l.b16 %v216
    %v1277 = vunpack.c.h.b16 %v216
    %v1278 = vunpack.c.l.b16 %v217
    %v1279 = vunpack.c.h.b16 %v217
    %v1280 = vunpack.c.l.b16 %v218
    %v1281 = vunpack.c.h.b16 %v218
    %v1282 = vunpack.c.l.b16 %v219
    %v1283 = vunpack.c.h.b16 %v219
    %v1284 = vunpack.c.l.b16 %v220
    %v1285 = vunpack.c.h.b16 %v220
    %v1286 = vunpack.c.l.b16 %v221
    %v1287 = vunpack.c.h.b16 %v221
    %v1288 = vunpack.c.l.b16 %v222
    %v1289 = vunpack.c.h.b16 %v222
    %v1290 = vunpack.c.l.b16 %v223
    %v1291 = vunpack.c.h.b16 %v223
    %v1292 = vunpack.c.l.b16 %v224
    %v1293 = vunpack.c.h.b16 %v224
    %v1294 = vunpack.c.l.b16 %v225
    %v1295 = vunpack.c.h.b16 %v225
    %v1296 = vunpack.c.l.b16 %v226
    %v1297 = vunpack.c.h.b16 %v226
    %v1298 = vunpack.c.l.b16 %v227
    %v1299 = vunpack.c.h.b16 %v227
    %v1300 = vunpack.c.l.b16 %v228
    %v1301 = vunpack.c.h.b16 %v228
    %v1302 = vunpack.c.l.b16 %v229
    %v1303 = vunpack.c.h.b16 %v229
    %v1304 = vunpack.c.l.b16 %v230
    %v1305 = vunpack.c.h.b16 %v230
    %v1306 = vunpack.c.l.b16 %v231
    %v1307 = vunpack.c.h.b16 %v231
    %v1308 = vunpack.c.l.b16 %v232
    %v1309 = vunpack.c.h.b16 %v232
    %v1310 = vunpack.c.l.b16 %v233
    %v1311 = vunpack.c.h.b16 %v233
    %v1312 = vunpack.c.l.b16 %v234
    %v1313 = vunpack.c.h.b16 %v234
    %v1314 = vunpack.c.l.b16 %v235
    %v1315 = vunpack.c.h.b16 %v235
    %v1316 = vunpack.c.l.b16 %v236
    %v1317 = vunpack.c.h.b16 %v236
    %v1318 = vunpack.c.l.b16 %v237
    %v1319 = vunpack.c.h.b16 %v237
    %v1320 = vunpack.c.l.b16 %v238
    %v1321 = vunpack.c.h.b16 %v238
    %v1322 = vunpack.c.l.b16 %v239
    %v1323 = vunpack.c.h.b16 %v239
    %v1324 = vunpack.c.l.b16 %v240
    %v1325 = vunpack.c.h.b16 %v240
    %v1326 = vunpack.c.l.b16 %v241
    %v1327 = vunpack.c.h.b16 %v241
    %v1328 = vunpack.c.l.b16 %v242
    %v1329 = vunpack.c.h.b16 %v242
    %v1330 = vunpack.c.l.b16 %v243
    %v1331 = vunpack.c.h.b16 %v243
    %v1332 = vunpack.c.l.b16 %v244
    %v1333 = vunpack.c.h.b16 %v244
    %v1334 = vunpack.c.l.b16 %v245
    %v1335 = vunpack.c.h.b16 %v245
    %v1336 = vunpack.c.l.b16 %v246
    %v1337 = vunpack.c.h.b16 %v246
    %v1338 = vunpack.c.l.b16 %v247
    %v1339 = vunpack.c.h.b16 %v247
    %v1340 = vunpack.c.l.b16 %v248
    %v1341 = vunpack.c.h.b16 %v248
    %v1342 = vunpack.c.l.b16 %v249
    %v1343 = vunpack.c.h.b16 %v249
    %v1344 = vunpack.c.l.b16 %v250
    %v1345 = vunpack.c.h.b16 %v250
    %v1346 = vunpack.c.l.b16 %v251
    %v1347 = vunpack.c.h.b16 %v251
    %v1348 = vunpack.c.l.b16 %v252
    %v1349 = vunpack.c.h.b16 %v252
    %v1350 = vunpack.c.l.b16 %v253
    %v1351 = vunpack.c.h.b16 %v253
    %v1352 = vunpack.c.l.b16 %v254
    %v1353 = vunpack.c.h.b16 %v254
    %v1354 = vunpack.c.l.b16 %v255
    %v1355 = vunpack.c.h.b16 %v255
    %v1356 = vunpack.c.l.b16 %v256
    %v1357 = vunpack.c.h.b16 %v256
    %v1358 = vunpack.c.l.b16 %v257
    %v1359 = vunpack.c.h.b16 %v257
    %v1360 = vunpack.c.l.b16 %v258
    %v1361 = vunpack.c.h.b16 %v258
    %v1362 = vunpack.c.l.b16 %v259
    %v1363 = vunpack.c.h.b16 %v259
    %v1364 = vunpack.c.l.b16 %v260
    %v1365 = vunpack.c.h.b16 %v260
    %v1366 = vunpack.c.l.b16 %v261
    %v1367 = vunpack.c.h.b16 %v261
    %v1368 = vunpack.c.l.b16 %v262
    %v1369 = vunpack.c.h.b16 %v262
    %v1370 = vunpack.c.l.b16 %v263
    %v1371 = vunpack.c.h.b16 %v263
    %v1372 = vunpack.c.l.b16 %v264
    %v1373 = vunpack.c.h.b16 %v264
    %v1374 = vunpack.c.l.b16 %v265
    %v1375 = vunpack.c.h.b16 %v265
    %v1376 = vunpack.c.l.b16 %v266
    %v1377 = vunpack.c.h.b16 %v266
    %v1378 = vunpack.c.l.b16 %v267
    %v1379 = vunpack.c.h.b16 %v267
    %v1380 = vunpack.c.l.b16 %v268
    %v1381 = vunpack.c.h.b16 %v268
    %v1382 = vunpack.c.l.b16 %v269
    %v1383 = vunpack.c.h.b16 %v269
    %v1384 = vunpack.c.l.b16 %v270
    %v1385 = vunpack.c.h.b16 %v270
    %v1386 = vunpack.c.l.b16 %v271
    %v1387 = vunpack.c.h.b16 %v271
    %v1388 = vunpack.c.l.b16 %v272
    %v1389 = vunpack.c.h.b16 %v272
    %v1390 = vunpack.c.l.b16 %v273
    %v1391 = vunpack.c.h.b16 %v273
    %v1392 = vunpack.c.l.b16 %v274
    %v1393 = vunpack.c.h.b16 %v274
    %v1394 = vunpack.c.l.b16 %v275
    %v1395 = vunpack.c.h.b16 %v275
    %v1396 = vunpack.c.l.b16 %v276
    %v1397 = vunpack.c.h.b16 %v276
    %v1398 = vunpack.c.l.b16 %v277
    %v1399 = vunpack.c.h.b16 %v277
    %v1400 = vunpack.c.l.b16 %v278
    %v1401 = vunpack.c.h.b16 %v278
    %v1402 = vunpack.c.l.b16 %v279
    %v1403 = vunpack.c.h.b16 %v279
    %v1404 = vunpack.c.l.b16 %v280
    %v1405 = vunpack.c.h.b16 %v280
    %v1406 = vunpack.c.l.b16 %v281
    %v1407 = vunpack.c.h.b16 %v281
    %v1408 = vunpack.c.l.b16 %v282
    %v1409 = vunpack.c.h.b16 %v282
    %v1410 = vunpack.c.l.b16 %v283
    %v1411 = vunpack.c.h.b16 %v283
    %v1412 = vunpack.c.l.b16 %v284
    %v1413 = vunpack.c.h.b16 %v284
    %v1414 = vunpack.c.l.b16 %v285
    %v1415 = vunpack.c.h.b16 %v285
    %v1416 = vunpack.c.l.b16 %v286
    %v1417 = vunpack.c.h.b16 %v286
    %v1418 = vunpack.c.l.b16 %v287
    %v1419 = vunpack.c.h.b16 %v287
    %v1420 = vunpack.c.l.b16 %v288
    %v1421 = vunpack.c.h.b16 %v288
    %v1422 = vunpack.c.l.b16 %v289
    %v1423 = vunpack.c.h.b16 %v289
    %v1424 = vunpack.c.l.b16 %v290
    %v1425 = vunpack.c.h.b16 %v290
    %v1426 = vunpack.c.l.b16 %v291
    %v1427 = vunpack.c.h.b16 %v291
    %v1428 = vunpack.c.l.b16 %v292
    %v1429 = vunpack.c.h.b16 %v292
    %v1430 = vunpack.c.l.b16 %v293
    %v1431 = vunpack.c.h.b16 %v293
    %v1432 = vunpack.c.l.b16 %v294
    %v1433 = vunpack.c.h.b16 %v294
    %v1434 = vunpack.c.l.b16 %v295
    %v1435 = vunpack.c.h.b16 %v295
    %v1436 = vunpack.c.l.b16 %v296
    %v1437 = vunpack.c.h.b16 %v296
    %v1438 = vunpack.c.l.b16 %v297
    %v1439 = vunpack.c.h.b16 %v297
    %v1440 = vunpack.c.l.b16 %v298
    %v1441 = vunpack.c.h.b16 %v298
    %v1442 = vunpack.c.l.b16 %v299
    %v1443 = vunpack.c.h.b16 %v299
    %v1444 = vunpack.c.l.b16 %v300
    %v1445 = vunpack.c.h.b16 %v300
    %v1446 = vunpack.c.l.b16 %v301
    %v1447 = vunpack.c.h.b16 %v301
    %v1448 = vunpack.c.l.b16 %v302
    %v1449 = vunpack.c.h.b16 %v302
    %v1450 = vunpack.c.l.b16 %v303
    %v1451 = vunpack.c.h.b16 %v303
    %v1452 = vunpack.c.l.b16 %v304
    %v1453 = vunpack.c.h.b16 %v304
    %v1454 = vunpack.c.l.b16 %v305
    %v1455 = vunpack.c.h.b16 %v305
    %v1456 = vunpack.c.l.b16 %v306
    %v1457 = vunpack.c.h.b16 %v306
    %v1458 = vunpack.c.l.b16 %v307
    %v1459 = vunpack.c.h.b16 %v307
    %v1460 = vunpack.c.l.b16 %v308
    %v1461 = vunpack.c.h.b16 %v308
    %v1462 = vunpack.c.l.b16 %v309
    %v1463 = vunpack.c.h.b16 %v309
    %v1464 = vunpack.c.l.b16 %v310
    %v1465 = vunpack.c.h.b16 %v310
    %v1466 = vunpack.c.l.b16 %v311
    %v1467 = vunpack.c.h.b16 %v311
    %v1468 = vunpack.c.l.b16 %v312
    %v1469 = vunpack.c.h.b16 %v312
    %v1470 = vunpack.c.l.b16 %v313
    %v1471 = vunpack.c.h.b16 %v313
    %v1472 = vunpack.c.l.b16 %v314
    %v1473 = vunpack.c.h.b16 %v314
    %v1474 = vunpack.c.l.b16 %v315
    %v1475 = vunpack.c.h.b16 %v315
    %v1476 = vunpack.c.l.b16 %v316
    %v1477 = vunpack.c.h.b16 %v316
    %v1478 = vunpack.c.l.b16 %v317
    %v1479 = vunpack.c.h.b16 %v317
    %v1480 = vunpack.c.l.b16 %v318
    %v1481 = vunpack.c.h.b16 %v318
    %v1482 = vunpack.c.l.b16 %v319
    %v1483 = vunpack.c.h.b16 %v319
    %v1484 = vunpack.c.l.b16 %v320
    %v1485 = vunpack.c.h.b16 %v320
    %v1486 = vunpack.c.l.b16 %v321
    %v1487 = vunpack.c.h.b16 %v321
    %v1488 = vunpack.c.l.b16 %v322
    %v1489 = vunpack.c.h.b16 %v322
    %v1490 = vunpack.c.l.b16 %v323
    %v1491 = vunpack.c.h.b16 %v323
    %v1492 = vunpack.c.l.b16 %v324
    %v1493 = vunpack.c.h.b16 %v324
    %v1494 = vunpack.c.l.b16 %v325
    %v1495 = vunpack.c.h.b16 %v325
    %v1496 = vunpack.c.l.b16 %v326
    %v1497 = vunpack.c.h.b16 %v326
    %v1498 = vunpack.c.l.b16 %v327
    %v1499 = vunpack.c.h.b16 %v327
    %v1500 = vunpack.c.l.b16 %v328
    %v1501 = vunpack.c.h.b16 %v328
    %v1502 = vunpack.c.l.b16 %v329
    %v1503 = vunpack.c.h.b16 %v329
    %v1504 = vunpack.c.l.b16 %v330
    %v1505 = vunpack.c.h.b16 %v330
    %v1506 = vunpack.c.l.b16 %v331
    %v1507 = vunpack.c.h.b16 %v331
    %v1508 = vunpack.c.l.b16 %v332
    %v1509 = vunpack.c.h.b16 %v332
    %v1510 = vunpack.c.l.b16 %v333
    %v1511 = vunpack.c.h.b16 %v333
    %v1512 = vunpack.c.l.b16 %v334
    %v1513 = vunpack.c.h.b16 %v334
    %v1514 = vunpack.c.l.b16 %v335
    %v1515 = vunpack.c.h.b16 %v335
    %v1516 = vunpack.c.l.b16 %v336
    %v1517 = vunpack.c.h.b16 %v336
    %v1518 = vunpack.c.l.b16 %v337
    %v1519 = vunpack.c.h.b16 %v337
    %v1520 = vunpack.c.l.b16 %v338
    %v1521 = vunpack.c.h.b16 %v338
    %v1522 = vunpack.c.l.b16 %v339
    %v1523 = vunpack.c.h.b16 %v339
    %v1524 = vunpack.c.l.b16 %v340
    %v1525 = vunpack.c.h.b16 %v340
    %v1526 = vunpack.c.l.b16 %v341
    %v1527 = vunpack.c.h.b16 %v341
    %v1528 = vunpack.c.l.b16 %v342
    %v1529 = vunpack.c.h.b16 %v342
    %v1530 = vunpack.c.l.b16 %v343
    %v1531 = vunpack.c.h.b16 %v343
    %v1532 = vunpack.c.l.b16 %v344
    %v1533 = vunpack.c.h.b16 %v344
    %v1534 = vunpack.c.l.b16 %v345
    %v1535 = vunpack.c.h.b16 %v345
    %v1536 = vunpack.c.l.b16 %v346
    %v1537 = vunpack.c.h.b16 %v346
    %v1538 = vunpack.c.l.b16 %v347
    %v1539 = vunpack.c.h.b16 %v347
    %v1540 = vunpack.c.l.b16 %v348
    %v1541 = vunpack.c.h.b16 %v348
    %v1542 = vunpack.c.l.b16 %v349
    %v1543 = vunpack.c.h.b16 %v349
    %v1544 = vunpack.c.l.b16 %v350
    %v1545 = vunpack.c.h.b16 %v350
    %v1546 = vunpack.c.l.b16 %v351
    %v1547 = vunpack.c.h.b16 %v351
    %v1548 = vunpack.c.l.b16 %v352
    %v1549 = vunpack.c.h.b16 %v352
    %v1550 = vunpack.c.l.b16 %v353
    %v1551 = vunpack.c.h.b16 %v353
    %v1552 = vunpack.c.l.b16 %v354
    %v1553 = vunpack.c.h.b16 %v354
    %v1554 = vunpack.c.l.b16 %v355
    %v1555 = vunpack.c.h.b16 %v355
    %v1556 = vunpack.c.l.b16 %v356
    %v1557 = vunpack.c.h.b16 %v356
    %v1558 = vunpack.c.l.b16 %v357
    %v1559 = vunpack.c.h.b16 %v357
    %v1560 = vunpack.c.l.b16 %v358
    %v1561 = vunpack.c.h.b16 %v358
    %v1562 = vunpack.c.l.b16 %v359
    %v1563 = vunpack.c.h.b16 %v359
    %v1564 = vunpack.c.l.b16 %v360
    %v1565 = vunpack.c.h.b16 %v360
    %v1566 = vunpack.c.l.b16 %v361
    %v1567 = vunpack.c.h.b16 %v361
    %v1568 = vunpack.c.l.b16 %v362
    %v1569 = vunpack.c.h.b16 %v362
    %v1570 = vunpack.c.l.b16 %v363
    %v1571 = vunpack.c.h.b16 %v363
    %v1572 = vunpack.c.l.b16 %v364
    %v1573 = vunpack.c.h.b16 %v364
    %v1574 = vunpack.c.l.b16 %v365
    %v1575 = vunpack.c.h.b16 %v365
    %v1576 = vunpack.c.l.b16 %v366
    %v1577 = vunpack.c.h.b16 %v366
    %v1578 = vunpack.c.l.b16 %v367
    %v1579 = vunpack.c.h.b16 %v367
    %v1580 = vunpack.c.l.b16 %v368
    %v1581 = vunpack.c.h.b16 %v368
    %v1582 = vunpack.c.l.b16 %v369
    %v1583 = vunpack.c.h.b16 %v369
    %v1584 = vunpack.c.l.b16 %v370
    %v1585 = vunpack.c.h.b16 %v370
    %v1586 = vunpack.c.l.b16 %v371
    %v1587 = vunpack.c.h.b16 %v371
    %v1588 = vunpack.c.l.b16 %v372
    %v1589 = vunpack.c.h.b16 %v372
    %v1590 = vunpack.c.l.b16 %v373
    %v1591 = vunpack.c.h.b16 %v373
    %v1592 = vunpack.c.l.b16 %v374
    %v1593 = vunpack.c.h.b16 %v374
    %v1594 = vunpack.c.l.b16 %v375
    %v1595 = vunpack.c.h.b16 %v375
    %v1596 = vunpack.c.l.b16 %v376
    %v1597 = vunpack.c.h.b16 %v376
    %v1598 = vunpack.c.l.b16 %v377
    %v1599 = vunpack.c.h.b16 %v377
    %v1600 = vunpack.c.l.b16 %v378
    %v1601 = vunpack.c.h.b16 %v378
    %v1602 = vunpack.c.l.b16 %v379
    %v1603 = vunpack.c.h.b16 %v379
    %v1604 = vunpack.c.l.b16 %v380
    %v1605 = vunpack.c.h.b16 %v380
    %v1606 = vunpack.c.l.b16 %v381
    %v1607 = vunpack.c.h.b16 %v381
    %v1608 = vunpack.c.l.b16 %v382
    %v1609 = vunpack.c.h.b16 %v382
    %v1610 = vunpack.c.l.b16 %v383
    %v1611 = vunpack.c.h.b16 %v383
    %v1612 = vunpack.c.l.b16 %v384
    %v1613 = vunpack.c.h.b16 %v384
    %v1614 = vunpack.c.l.b16 %v385
    %v1615 = vunpack.c.h.b16 %v385
    %v1616 = vunpack.c.l.b16 %v386
    %v1617 = vunpack.c.h.b16 %v386
    %v1618 = vunpack.c.l.b16 %v387
    %v1619 = vunpack.c.h.b16 %v387
    %v1620 = vunpack.c.l.b16 %v388
    %v1621 = vunpack.c.h.b16 %v388
    %v1622 = vunpack.c.l.b16 %v389
    %v1623 = vunpack.c.h.b16 %v389
    %v1624 = vunpack.c.l.b16 %v390
    %v1625 = vunpack.c.h.b16 %v390
    %v1626 = vunpack.c.l.b16 %v391
    %v1627 = vunpack.c.h.b16 %v391
    %v1628 = vunpack.c.l.b16 %v392
    %v1629 = vunpack.c.h.b16 %v392
    %v1630 = vunpack.c.l.b16 %v393
    %v1631 = vunpack.c.h.b16 %v393
    %v1632 = vunpack.c.l.b16 %v394
    %v1633 = vunpack.c.h.b16 %v394
    %v1634 = vunpack.c.l.b16 %v395
    %v1635 = vunpack.c.h.b16 %v395
    %v1636 = vunpack.c.l.b16 %v396
    %v1637 = vunpack.c.h.b16 %v396
    %v1638 = vunpack.c.l.b16 %v397
    %v1639 = vunpack.c.h.b16 %v397
    %v1640 = vunpack.c.l.b16 %v398
    %v1641 = vunpack.c.h.b16 %v398
    %v1642 = vunpack.c.l.b16 %v399
    %v1643 = vunpack.c.h.b16 %v399
    %v1644 = vunpack.c.l.b16 %v400
    %v1645 = vunpack.c.h.b16 %v400
    %v1646 = vunpack.c.l.b16 %v401
    %v1647 = vunpack.c.h.b16 %v401
    %v1648 = vunpack.c.l.b16 %v402
    %v1649 = vunpack.c.h.b16 %v402
    %v1650 = vunpack.c.l.b16 %v403
    %v1651 = vunpack.c.h.b16 %v403
    %v1652 = vunpack.c.l.b16 %v404
    %v1653 = vunpack.c.h.b16 %v404
    %v1654 = vunpack.c.l.b16 %v405
    %v1655 = vunpack.c.h.b16 %v405
    %v1656 = vunpack.c.l.b16 %v406
    %v1657 = vunpack.c.h.b16 %v406
    %v1658 = vunpack.c.l.b16 %v407
    %v1659 = vunpack.c.h.b16 %v407
    %v1660 = vunpack.c.l.b16 %v408
    %v1661 = vunpack.c.h.b16 %v408
    %v1662 = vunpack.c.l.b16 %v409
    %v1663 = vunpack.c.h.b16 %v409
    %v1664 = vunpack.c.l.b16 %v410
    %v1665 = vunpack.c.h.b16 %v410
    %v1666 = vunpack.c.l.b16 %v411
    %v1667 = vunpack.c.h.b16 %v411
    %v1668 = vunpack.c.l.b16 %v412
    %v1669 = vunpack.c.h.b16 %v412
    %v1670 = vunpack.c.l.b16 %v413
    %v1671 = vunpack.c.h.b16 %v413
    %v1672 = vunpack.c.l.b16 %v414
    %v1673 = vunpack.c.h.b16 %v414
    %v1674 = vunpack.c.l.b16 %v415
    %v1675 = vunpack.c.h.b16 %v415
    %v1676 = vunpack.c.l.b16 %v416
    %v1677 = vunpack.c.h.b16 %v416
    %v1678 = vunpack.c.l.b16 %v417
    %v1679 = vunpack.c.h.b16 %v417
    %v1680 = vunpack.c.l.b16 %v418
    %v1681 = vunpack.c.h.b16 %v418
    %v1682 = vunpack.c.l.b16 %v419
    %v1683 = vunpack.c.h.b16 %v419
    %v1684 = vunpack.c.l.b16 %v420
    %v1685 = vunpack.c.h.b16 %v420
    %v1686 = vunpack.c.l.b16 %v421
    %v1687 = vunpack.c.h.b16 %v421
    %v1688 = vunpack.c.l.b16 %v422
    %v1689 = vunpack.c.h.b16 %v422
    %v1690 = vunpack.c.l.b16 %v423
    %v1691 = vunpack.c.h.b16 %v423
    %v1692 = vunpack.c.l.b16 %v424
    %v1693 = vunpack.c.h.b16 %v424
    %v1694 = vunpack.c.l.b16 %v425
    %v1695 = vunpack.c.h.b16 %v425
    %v1696 = vunpack.c.l.b16 %v426
    %v1697 = vunpack.c.h.b16 %v426
    %v1698 = vunpack.c.l.b16 %v427
    %v1699 = vunpack.c.h.b16 %v427
    %v1700 = vunpack.c.l.b16 %v428
    %v1701 = vunpack.c.h.b16 %v428
    %v1702 = vunpack.c.l.b16 %v429
    %v1703 = vunpack.c.h.b16 %v429
    %v1704 = vunpack.c.l.b16 %v430
    %v1705 = vunpack.c.h.b16 %v430
    %v1706 = vunpack.c.l.b16 %v431
    %v1707 = vunpack.c.h.b16 %v431
    %v1708 = vunpack.c.l.b16 %v432
    %v1709 = vunpack.c.h.b16 %v432
    %v1710 = vunpack.c.l.b16 %v433
    %v1711 = vunpack.c.h.b16 %v433
    %v1712 = vunpack.c.l.b16 %v434
    %v1713 = vunpack.c.h.b16 %v434
    %v1714 = vunpack.c.l.b16 %v435
    %v1715 = vunpack.c.h.b16 %v435
    %v1716 = vunpack.c.l.b16 %v436
    %v1717 = vunpack.c.h.b16 %v436
    %v1718 = vunpack.c.l.b16 %v437
    %v1719 = vunpack.c.h.b16 %v437
    %v1720 = vunpack.c.l.b16 %v438
    %v1721 = vunpack.c.h.b16 %v438
    %v1722 = vunpack.c.l.b16 %v439
    %v1723 = vunpack.c.h.b16 %v439
    %v1724 = vunpack.c.l.b16 %v440
    %v1725 = vunpack.c.h.b16 %v440
    %v1726 = vunpack.c.l.b16 %v441
    %v1727 = vunpack.c.h.b16 %v441
    %v1728 = vunpack.c.l.b16 %v442
    %v1729 = vunpack.c.h.b16 %v442
    %v1730 = vunpack.c.l.b16 %v443
    %v1731 = vunpack.c.h.b16 %v443
    %v1732 = vunpack.c.l.b16 %v444
    %v1733 = vunpack.c.h.b16 %v444
    %v1734 = vunpack.c.l.b16 %v445
    %v1735 = vunpack.c.h.b16 %v445
    %v1736 = vunpack.c.l.b16 %v446
    %v1737 = vunpack.c.h.b16 %v446
    %v1738 = vunpack.c.l.b16 %v447
    %v1739 = vunpack.c.h.b16 %v447
    %v1740 = vunpack.c.l.b16 %v448
    %v1741 = vunpack.c.h.b16 %v448
    %v1742 = vunpack.c.l.b16 %v449
    %v1743 = vunpack.c.h.b16 %v449
    %v1744 = vunpack.c.l.b16 %v450
    %v1745 = vunpack.c.h.b16 %v450
    %v1746 = vunpack.c.l.b16 %v451
    %v1747 = vunpack.c.h.b16 %v451
    %v1748 = vunpack.c.l.b16 %v452
    %v1749 = vunpack.c.h.b16 %v452
    %v1750 = vunpack.c.l.b16 %v453
    %v1751 = vunpack.c.h.b16 %v453
    %v1752 = vunpack.c.l.b16 %v454
    %v1753 = vunpack.c.h.b16 %v454
    %v1754 = vunpack.c.l.b16 %v455
    %v1755 = vunpack.c.h.b16 %v455
    %v1756 = vunpack.c.l.b16 %v456
    %v1757 = vunpack.c.h.b16 %v456
    %v1758 = vunpack.c.l.b16 %v457
    %v1759 = vunpack.c.h.b16 %v457
    %v1760 = vunpack.c.l.b16 %v458
    %v1761 = vunpack.c.h.b16 %v458
    %v1762 = vunpack.c.l.b16 %v459
    %v1763 = vunpack.c.h.b16 %v459
    %v1764 = vunpack.c.l.b16 %v460
    %v1765 = vunpack.c.h.b16 %v460
    %v1766 = vunpack.c.l.b16 %v461
    %v1767 = vunpack.c.h.b16 %v461
    %v1768 = vunpack.c.l.b16 %v462
    %v1769 = vunpack.c.h.b16 %v462
    %v1770 = vunpack.c.l.b16 %v463
    %v1771 = vunpack.c.h.b16 %v463
    %v1772 = vunpack.c.l.b16 %v464
    %v1773 = vunpack.c.h.b16 %v464
    %v1774 = vunpack.c.l.b16 %v465
    %v1775 = vunpack.c.h.b16 %v465
    %v1776 = vunpack.c.l.b16 %v466
    %v1777 = vunpack.c.h.b16 %v466
    %v1778 = vunpack.c.l.b16 %v467
    %v1779 = vunpack.c.h.b16 %v467
    %v1780 = vunpack.c.l.b16 %v468
    %v1781 = vunpack.c.h.b16 %v468
    %v1782 = vunpack.c.l.b16 %v469
    %v1783 = vunpack.c.h.b16 %v469
    %v1784 = vunpack.c.l.b16 %v470
    %v1785 = vunpack.c.h.b16 %v470
    %v1786 = vunpack.c.l.b16 %v471
    %v1787 = vunpack.c.h.b16 %v471
    %v1788 = vunpack.c.l.b16 %v472
    %v1789 = vunpack.c.h.b16 %v472
    %v1790 = vunpack.c.l.b16 %v473
    %v1791 = vunpack.c.h.b16 %v473
    %v1792 = vunpack.c.l.b16 %v474
    %v1793 = vunpack.c.h.b16 %v474
    %v1794 = vunpack.c.l.b16 %v475
    %v1795 = vunpack.c.h.b16 %v475
    %v1796 = vunpack.c.l.b16 %v476
    %v1797 = vunpack.c.h.b16 %v476
    %v1798 = vunpack.c.l.b16 %v477
    %v1799 = vunpack.c.h.b16 %v477
    %v1800 = vunpack.c.l.b16 %v478
    %v1801 = vunpack.c.h.b16 %v478
    %v1802 = vunpack.c.l.b16 %v479
    %v1803 = vunpack.c.h.b16 %v479
    %v1804 = vunpack.c.l.b16 %v480
    %v1805 = vunpack.c.h.b16 %v480
    %v1806 = vunpack.c.l.b16 %v481
    %v1807 = vunpack.c.h.b16 %v481
    %v1808 = vunpack.c.l.b16 %v482
    %v1809 = vunpack.c.h.b16 %v482
    %v1810 = vunpack.c.l.b16 %v483
    %v1811 = vunpack.c.h.b16 %v483
    %v1812 = vunpack.c.l.b16 %v484
    %v1813 = vunpack.c.h.b16 %v484
    %v1814 = vunpack.c.l.b16 %v485
    %v1815 = vunpack.c.h.b16 %v485
    %v1816 = vunpack.c.l.b16 %v486
    %v1817 = vunpack.c.h.b16 %v486
    %v1818 = vunpack.c.l.b16 %v487
    %v1819 = vunpack.c.h.b16 %v487
    %v1820 = vunpack.c.l.b16 %v488
    %v1821 = vunpack.c.h.b16 %v488
    %v1822 = vunpack.c.l.b16 %v489
    %v1823 = vunpack.c.h.b16 %v489
    %v1824 = vunpack.c.l.b16 %v490
    %v1825 = vunpack.c.h.b16 %v490
    %v1826 = vunpack.c.l.b16 %v491
    %v1827 = vunpack.c.h.b16 %v491
    %v1828 = vunpack.c.l.b16 %v492
    %v1829 = vunpack.c.h.b16 %v492
    %v1830 = vunpack.c.l.b16 %v493
    %v1831 = vunpack.c.h.b16 %v493
    %v1832 = vunpack.c.l.b16 %v494
    %v1833 = vunpack.c.h.b16 %v494
    %v1834 = vunpack.c.l.b16 %v495
    %v1835 = vunpack.c.h.b16 %v495
    %v1836 = vunpack.c.l.b16 %v496
    %v1837 = vunpack.c.h.b16 %v496
    %v1838 = vunpack.c.l.b16 %v497
    %v1839 = vunpack.c.h.b16 %v497
    %v1840 = vunpack.c.l.b16 %v498
    %v1841 = vunpack.c.h.b16 %v498
    %v1842 = vunpack.c.l.b16 %v499
    %v1843 = vunpack.c.h.b16 %v499
    %v1844 = vunpack.c.l.b16 %v500
    %v1845 = vunpack.c.h.b16 %v500
    %v1846 = vunpack.c.l.b16 %v501
    %v1847 = vunpack.c.h.b16 %v501
    %v1848 = vunpack.c.l.b16 %v502
    %v1849 = vunpack.c.h.b16 %v502
    %v1850 = vunpack.c.l.b16 %v503
    %v1851 = vunpack.c.h.b16 %v503
    %v1852 = vunpack.c.l.b16 %v504
    %v1853 = vunpack.c.h.b16 %v504
    %v1854 = vunpack.c.l.b16 %v505
    %v1855 = vunpack.c.h.b16 %v505
    %v1856 = vunpack.c.l.b16 %v506
    %v1857 = vunpack.c.h.b16 %v506
    %v1858 = vunpack.c.l.b16 %v507
    %v1859 = vunpack.c.h.b16 %v507
    %v1860 = vunpack.c.l.b16 %v508
    %v1861 = vunpack.c.h.b16 %v508
    %v1862 = vunpack.c.l.b16 %v509
    %v1863 = vunpack.c.h.b16 %v509
    %v1864 = vunpack.c.l.b16 %v510
    %v1865 = vunpack.c.h.b16 %v510
    %v1866 = vunpack.c.l.b16 %v511
    %v1867 = vunpack.c.h.b16 %v511
    %v1868 = vunpack.c.l.b16 %v512
    %v1869 = vunpack.c.h.b16 %v512
    %v1870 = vunpack.c.l.b16 %v513
    %v1871 = vunpack.c.h.b16 %v513
    %v1872 = vunpack.c.l.b16 %v514
    %v1873 = vunpack.c.h.b16 %v514
    %v1874 = vunpack.c.l.b16 %v515
    %v1875 = vunpack.c.h.b16 %v515
    %v1876 = vunpack.c.l.b16 %v516
    %v1877 = vunpack.c.h.b16 %v516
    %v1878 = vunpack.c.l.b16 %v517
    %v1879 = vunpack.c.h.b16 %v517
    %v1880 = vunpack.c.l.b16 %v518
    %v1881 = vunpack.c.h.b16 %v518
    %v1882 = vunpack.c.l.b16 %v519
    %v1883 = vunpack.c.h.b16 %v519
    %v1884 = vunpack.c.l.b16 %v520
    %v1885 = vunpack.c.h.b16 %v520
    %v1886 = vunpack.c.l.b16 %v521
    %v1887 = vunpack.c.h.b16 %v521
    %v1888 = vunpack.c.l.b16 %v522
    %v1889 = vunpack.c.h.b16 %v522
    %v1890 = vunpack.c.l.b16 %v523
    %v1891 = vunpack.c.h.b16 %v523
    %v1892 = vunpack.c.l.b16 %v524
    %v1893 = vunpack.c.h.b16 %v524
    %v1894 = vunpack.c.l.b16 %v525
    %v1895 = vunpack.c.h.b16 %v525
    %v1896 = vunpack.c.l.b16 %v526
    %v1897 = vunpack.c.h.b16 %v526
    %v1898 = vunpack.c.l.b16 %v527
    %v1899 = vunpack.c.h.b16 %v527
    %v1900 = vunpack.c.l.b16 %v528
    %v1901 = vunpack.c.h.b16 %v528
    %v1902 = vunpack.c.l.b16 %v529
    %v1903 = vunpack.c.h.b16 %v529
    %v1904 = vunpack.c.l.b16 %v530
    %v1905 = vunpack.c.h.b16 %v530
    %v1906 = vunpack.c.l.b16 %v531
    %v1907 = vunpack.c.h.b16 %v531
    %v1908 = vunpack.c.l.b16 %v532
    %v1909 = vunpack.c.h.b16 %v532
    %v1910 = vunpack.c.l.b16 %v533
    %v1911 = vunpack.c.h.b16 %v533
    %v1912 = vunpack.c.l.b16 %v534
    %v1913 = vunpack.c.h.b16 %v534
    %v1914 = vunpack.c.l.b16 %v535
    %v1915 = vunpack.c.h.b16 %v535
    %v1916 = vunpack.c.l.b16 %v536
    %v1917 = vunpack.c.h.b16 %v536
    %v1918 = vunpack.c.l.b16 %v537
    %v1919 = vunpack.c.h.b16 %v537
    %v1920 = vunpack.c.l.b16 %v538
    %v1921 = vunpack.c.h.b16 %v538
    %v1922 = vunpack.c.l.b16 %v539
    %v1923 = vunpack.c.h.b16 %v539
    %v1924 = vunpack.c.l.b16 %v540
    %v1925 = vunpack.c.h.b16 %v540
    %v1926 = vunpack.c.l.b16 %v541
    %v1927 = vunpack.c.h.b16 %v541
    %v1928 = vunpack.c.l.b16 %v542
    %v1929 = vunpack.c.h.b16 %v542
    %v1930 = vunpack.c.l.b16 %v543
    %v1931 = vunpack.c.h.b16 %v543
    %v1932 = vunpack.c.l.b16 %v544
    %v1933 = vunpack.c.h.b16 %v544
    %v1934 = vunpack.c.l.b16 %v545
    %v1935 = vunpack.c.h.b16 %v545
    %v1936 = vunpack.c.l.b16 %v546
    %v1937 = vunpack.c.h.b16 %v546
    %v1938 = vunpack.c.l.b16 %v547
    %v1939 = vunpack.c.h.b16 %v547
    %v1940 = vunpack.c.l.b16 %v548
    %v1941 = vunpack.c.h.b16 %v548
    %v1942 = vunpack.c.l.b16 %v549
    %v1943 = vunpack.c.h.b16 %v549
    %v1944 = vunpack.c.l.b16 %v550
    %v1945 = vunpack.c.h.b16 %v550
    %v1946 = vunpack.c.l.b16 %v551
    %v1947 = vunpack.c.h.b16 %v551
    %v1948 = vunpack.c.l.b16 %v552
    %v1949 = vunpack.c.h.b16 %v552
    %v1950 = vunpack.c.l.b16 %v553
    %v1951 = vunpack.c.h.b16 %v553
    %v1952 = vunpack.c.l.b16 %v554
    %v1953 = vunpack.c.h.b16 %v554
    %v1954 = vunpack.c.l.b16 %v555
    %v1955 = vunpack.c.h.b16 %v555
    %v1956 = vunpack.c.l.b16 %v556
    %v1957 = vunpack.c.h.b16 %v556
    %v1958 = vunpack.c.l.b16 %v557
    %v1959 = vunpack.c.h.b16 %v557
    %v1960 = vunpack.c.l.b16 %v558
    %v1961 = vunpack.c.h.b16 %v558
    %v1962 = vunpack.c.l.b16 %v559
    %v1963 = vunpack.c.h.b16 %v559
    %v1964 = vunpack.c.l.b16 %v560
    %v1965 = vunpack.c.h.b16 %v560
    %v1966 = vunpack.c.l.b16 %v561
    %v1967 = vunpack.c.h.b16 %v561
    %v1968 = vunpack.c.l.b16 %v562
    %v1969 = vunpack.c.h.b16 %v562
    %v1970 = vunpack.c.l.b16 %v563
    %v1971 = vunpack.c.h.b16 %v563
    %v1972 = vunpack.c.l.b16 %v564
    %v1973 = vunpack.c.h.b16 %v564
    %v1974 = vunpack.c.l.b16 %v565
    %v1975 = vunpack.c.h.b16 %v565
    %v1976 = vunpack.c.l.b16 %v566
    %v1977 = vunpack.c.h.b16 %v566
    %v1978 = vpack.c.b16 %v1090, %v1082
    %v1979 = vpack.c.b16 %v1091, %v1083
    %v1980 = vpack.c.b16 %v1092, %v1084
    %v1981 = vpack.c.b16 %v1093, %v1085
    %v1982 = vpack.c.b16 %v1094, %v1086
    %v1983 = vpack.c.b16 %v1095, %v1087
    %v1984 = vpack.c.b16 %v1096, %v1088
    %v1985 = vpack.c.b16 %v1097, %v1089
    %v1986 = vpack.c.b16 %v1106, %v1098
    %v1987 = vpack.c.b16 %v1107, %v1099
    %v1988 = vpack.c.b16 %v1108, %v1100
    %v1989 = vpack.c.b16 %v1109, %v1101
    %v1990 = vpack.c.b16 %v1110, %v1102
    %v1991 = vpack.c.b16 %v1111, %v1103
    %v1992 = vpack.c.b16 %v1112, %v1104
    %v1993 = vpack.c.b16 %v1113, %v1105
    %v1994 = vpack.c.b16 %v1122, %v1114
    %v1995 = vpack.c.b16 %v1123, %v1115
    %v1996 = vpack.c.b16 %v1124, %v1116
    %v1997 = vpack.c.b16 %v1125, %v1117
    %v1998 = vpack.c.b16 %v1126, %v1118
    %v1999 = vpack.c.b16 %v1127, %v1119
    %v2000 = vpack.c.b16 %v1128, %v1120
    %v2001 = vpack.c.b16 %v1129, %v1121
    %v2002 = vpack.c.b16 %v1138, %v1130
    %v2003 = vpack.c.b16 %v1139, %v1131
    %v2004 = vpack.c.b16 %v1140, %v1132
    %v2005 = vpack.c.b16 %v1141, %v1133
    %v2006 = vpack.c.b16 %v1142, %v1134
    %v2007 = vpack.c.b16 %v1143, %v1135
    %v2008 = vpack.c.b16 %v1144, %v1136
    %v2009 = vpack.c.b16 %v1145, %v1137
    %v2010 = vpack.c.b16 %v1154, %v1146
    %v2011 = vpack.c.b16 %v1155, %v1147
    %v2012 = vpack.c.b16 %v1156, %v1148
    %v2013 = vpack.c.b16 %v1157, %v1149
    %v2014 = vpack.c.b16 %v1158, %v1150
    %v2015 = vpack.c.b16 %v1159, %v1151
    %v2016 = vpack.c.b16 %v1160, %v1152
    %v2017 = vpack.c.b16 %v1161, %v1153
    %v2018 = vpack.c.b16 %v1170, %v1162
    %v2019 = vpack.c.b16 %v1171, %v1163
    %v2020 = vpack.c.b16 %v1172, %v1164
    %v2021 = vpack.c.b16 %v1173, %v1165
    %v2022 = vpack.c.b16 %v1174, %v1166
    %v2023 = vpack.c.b16 %v1175, %v1167
    %v2024 = vpack.c.b16 %v1176, %v1168
    %v2025 = vpack.c.b16 %v1177, %v1169
    %v2026 = vpack.c.b16 %v1186, %v1178
    %v2027 = vpack.c.b16 %v1187, %v1179
    %v2028 = vpack.c.b16 %v1188, %v1180
    %v2029 = vpack.c.b16 %v1189, %v1181
    %v2030 = vpack.c.b16 %v1190, %v1182
    %v2031 = vpack.c.b16 %v1191, %v1183
    %v2032 = vpack.c.b16 %v1192, %v1184
    %v2033 = vpack.c.b16 %v1193, %v1185
    %v2034 = vpack.c.b16 %v1202, %v1194
    %v2035 = vpack.c.b16 %v1203, %v1195
    %v2036 = vpack.c.b16 %v1204, %v1196
    %v2037 = vpack.c.b16 %v1205, %v1197
    %v2038 = vpack.c.b16 %v1206, %v1198
    %v2039 = vpack.c.b16 %v1207, %v1199
    %v2040 = vpack.c.b16 %v1208, %v1200
    %v2041 = vpack.c.b16 %v1209, %v1201
    %v2042 = vpack.c.b16 %v1218, %v1210
    %v2043 = vpack.c.b16 %v1219, %v1211
    %v2044 = vpack.c.b16 %v1220, %v1212
    %v2045 = vpack.c.b16 %v1221, %v1213
    %v2046 = vpack.c.b16 %v1222, %v1214
    %v2047 = vpack.c.b16 %v1223, %v1215
    %v2048 = vpack.c.b16 %v1224, %v1216
    %v2049 = vpack.c.b16 %v1225, %v1217
    %v2050 = vpack.c.b16 %v1234, %v1226
    %v2051 = vpack.c.b16 %v1235, %v1227
    %v2052 = vpack.c.b16 %v1236, %v1228
    %v2053 = vpack.c.b16 %v1237, %v1229
    %v2054 = vpack.c.b16 %v1238, %v1230
    %v2055 = vpack.c.b16 %v1239, %v1231
    %v2056 = vpack.c.b16 %v1240, %v1232
    %v2057 = vpack.c.b16 %v1241, %v1233
    %v2058 = vpack.c.b16 %v1250, %v1242
    %v2059 = vpack.c.b16 %v1251, %v1243
    %v2060 = vpack.c.b16 %v1252, %v1244
    %v2061 = vpack.c.b16 %v1253, %v1245
    %v2062 = vpack.c.b16 %v1254, %v1246
    %v2063 = vpack.c.b16 %v1255, %v1247
    %v2064 = vpack.c.b16 %v1256, %v1248
    %v2065 = vpack.c.b16 %v1257, %v1249
    %v2066 = vpack.c.b16 %v1266, %v1258
    %v2067 = vpack.c.b16 %v1267, %v1259
    %v2068 = vpack.c.b16 %v1268, %v1260
    %v2069 = vpack.c.b16 %v1269, %v1261
    %v2070 = vpack.c.b16 %v1270, %v1262
    %v2071 = vpack.c.b16 %v1271, %v1263
    %v2072 = vpack.c.b16 %v1272, %v1264
    %v2073 = vpack.c.b16 %v1273, %v1265
    %v2074 = vpack.c.b16 %v1282, %v1274
    %v2075 = vpack.c.b16 %v1283, %v1275
    %v2076 = vpack.c.b16 %v1284, %v1276
    %v2077 = vpack.c.b16 %v1285, %v1277
    %v2078 = vpack.c.b16 %v1286, %v1278
    %v2079 = vpack.c.b16 %v1287, %v1279
    %v2080 = vpack.c.b16 %v1288, %v1280
    %v2081 = vpack.c.b16 %v1289, %v1281
    %v2082 = vpack.c.b16 %v1298, %v1290
    %v2083 = vpack.c.b16 %v1299, %v1291
    %v2084 = vpack.c.b16 %v1300, %v1292
    %v2085 = vpack.c.b16 %v1301, %v1293
    %v2086 = vpack.c.b16 %v1302, %v1294
    %v2087 = vpack.c.b16 %v1303, %v1295
    %v2088 = vpack.c.b16 %v1304, %v1296
    %v2089 = vpack.c.b16 %v1305, %v1297
    %v2090 = vpack.c.b16 %v1314, %v1306
    %v2091 = vpack.c.b16 %v1315, %v1307
    %v2092 = vpack.c.b16 %v1316, %v1308
    %v2093 = vpack.c.b16 %v1317, %v1309
    %v2094 = vpack.c.b16 %v1318, %v1310
    %v2095 = vpack.c.b16 %v1319, %v1311
    %v2096 = vpack.c.b16 %v1320, %v1312
    %v2097 = vpack.c.b16 %v1321, %v1313
    %v2098 = vpack.c.b16 %v1330, %v1322
    %v2099 = vpack.c.b16 %v1331, %v1323
    %v2100 = vpack.c.b16 %v1332, %v1324
    %v2101 = vpack.c.b16 %v1333, %v1325
    %v2102 = vpack.c.b16 %v1334, %v1326
    %v2103 = vpack.c.b16 %v1335, %v1327
    %v2104 = vpack.c.b16 %v1336, %v1328
    %v2105 = vpack.c.b16 %v1337, %v1329
    %v2106 = vpack.c.b16 %v1346, %v1338
    %v2107 = vpack.c.b16 %v1347, %v1339
    %v2108 = vpack.c.b16 %v1348, %v1340
    %v2109 = vpack.c.b16 %v1349, %v1341
    %v2110 = vpack.c.b16 %v1350, %v1342
    %v2111 = vpack.c.b16 %v1351, %v1343
    %v2112 = vpack.c.b16 %v1352, %v1344
    %v2113 = vpack.c.b16 %v1353, %v1345
    %v2114 = vpack.c.b16 %v1362, %v1354
    %v2115 = vpack.c.b16 %v1363, %v1355
    %v2116 = vpack.c.b16 %v1364, %v1356
    %v2117 = vpack.c.b16 %v1365, %v1357
    %v2118 = vpack.c.b16 %v1366, %v1358
    %v2119 = vpack.c.b16 %v1367, %v1359
    %v2120 = vpack.c.b16 %v1368, %v1360
    %v2121 = vpack.c.b16 %v1369, %v1361
    %v2122 = vpack.c.b16 %v1378, %v1370
    %v2123 = vpack.c.b16 %v1379, %v1371
    %v2124 = vpack.c.b16 %v1380, %v1372
    %v2125 = vpack.c.b16 %v1381, %v1373
    %v2126 = vpack.c.b16 %v1382, %v1374
    %v2127 = vpack.c.b16 %v1383, %v1375
    %v2128 = vpack.c.b16 %v1384, %v1376
    %v2129 = vpack.c.b16 %v1385, %v1377
    %v2130 = vpack.c.b16 %v1394, %v1386
    %v2131 = vpack.c.b16 %v1395, %v1387
    %v2132 = vpack.c.b16 %v1396, %v1388
    %v2133 = vpack.c.b16 %v1397, %v1389
    %v2134 = vpack.c.b16 %v1398, %v1390
    %v2135 = vpack.c.b16 %v1399, %v1391
    %v2136 = vpack.c.b16 %v1400, %v1392
    %v2137 = vpack.c.b16 %v1401, %v1393
    %v2138 = vpack.c.b16 %v1410, %v1402
    %v2139 = vpack.c.b16 %v1411, %v1403
    %v2140 = vpack.c.b16 %v1412, %v1404
    %v2141 = vpack.c.b16 %v1413, %v1405
    %v2142 = vpack.c.b16 %v1414, %v1406
    %v2143 = vpack.c.b16 %v1415, %v1407
    %v2144 = vpack.c.b16 %v1416, %v1408
    %v2145 = vpack.c.b16 %v1417, %v1409
    %v2146 = vpack.c.b16 %v1426, %v1418
    %v2147 = vpack.c.b16 %v1427, %v1419
    %v2148 = vpack.c.b16 %v1428, %v1420
    %v2149 = vpack.c.b16 %v1429, %v1421
    %v2150 = vpack.c.b16 %v1430, %v1422
    %v2151 = vpack.c.b16 %v1431, %v1423
    %v2152 = vpack.c.b16 %v1432, %v1424
    %v2153 = vpack.c.b16 %v1433, %v1425
    %v2154 = vpack.c.b16 %v1442, %v1434
    %v2155 = vpack.c.b16 %v1443, %v1435
    %v2156 = vpack.c.b16 %v1444, %v1436
    %v2157 = vpack.c.b16 %v1445, %v1437
    %v2158 = vpack.c.b16 %v1446, %v1438
    %v2159 = vpack.c.b16 %v1447, %v1439
    %v2160 = vpack.c.b16 %v1448, %v1440
    %v2161 = vpack.c.b16 %v1449, %v1441
    %v2162 = vpack.c.b16 %v1458, %v1450
    %v2163 = vpack.c.b16 %v1459, %v1451
    %v2164 = vpack.c.b16 %v1460, %v1452
    %v2165 = vpack.c.b16 %v1461, %v1453
    %v2166 = vpack.c.b16 %v1462, %v1454
    %v2167 = vpack.c.b16 %v1463, %v1455
    %v2168 = vpack.c.b16 %v1464, %v1456
    %v2169 = vpack.c.b16 %v1465, %v1457
    %v2170 = vpack.c.b16 %v1474, %v1466
    %v2171 = vpack.c.b16 %v1475, %v1467
    %v2172 = vpack.c.b16 %v1476, %v1468
    %v2173 = vpack.c.b16 %v1477, %v1469
    %v2174 = vpack.c.b16 %v1478, %v1470
    %v2175 = vpack.c.b16 %v1479, %v1471
    %v2176 = vpack.c.b16 %v1480, %v1472
    %v2177 = vpack.c.b16 %v1481, %v1473
    %v2178 = vpack.c.b16 %v1490, %v1482
    %v2179 = vpack.c.b16 %v1491, %v1483
    %v2180 = vpack.c.b16 %v1492, %v1484
    %v2181 = vpack.c.b16 %v1493, %v1485
    %v2182 = vpack.c.b16 %v1494, %v1486
    %v2183 = vpack.c.b16 %v1495, %v1487
    %v2184 = vpack.c.b16 %v1496, %v1488
    %v2185 = vpack.c.b16 %v1497, %v1489
    %v2186 = vpack.c.b16 %v1506, %v1498
    %v2187 = vpack.c.b16 %v1507, %v1499
    %v2188 = vpack.c.b16 %v1508, %v1500
    %v2189 = vpack.c.b16 %v1509, %v1501
    %v2190 = vpack.c.b16 %v1510, %v1502
    %v2191 = vpack.c.b16 %v1511, %v1503
    %v2192 = vpack.c.b16 %v1512, %v1504
    %v2193 = vpack.c.b16 %v1513, %v1505
    %v2194 = vpack.c.b16 %v1522, %v1514
    %v2195 = vpack.c.b16 %v1523, %v1515
    %v2196 = vpack.c.b16 %v1524, %v1516
    %v2197 = vpack.c.b16 %v1525, %v1517
    %v2198 = vpack.c.b16 %v1526, %v1518
    %v2199 = vpack.c.b16 %v1527, %v1519
    %v2200 = vpack.c.b16 %v1528, %v1520
    %v2201 = vpack.c.b16 %v1529, %v1521
    %v2202 = vpack.c.b16 %v1538, %v1530
    %v2203 = vpack.c.b16 %v1539, %v1531
    %v2204 = vpack.c.b16 %v1540, %v1532
    %v2205 = vpack.c.b16 %v1541, %v1533
    %v2206 = vpack.c.b16 %v1542, %v1534
    %v2207 = vpack.c.b16 %v1543, %v1535
    %v2208 = vpack.c.b16 %v1544, %v1536
    %v2209 = vpack.c.b16 %v1545, %v1537
    %v2210 = vpack.c.b16 %v1554, %v1546
    %v2211 = vpack.c.b16 %v1555, %v1547
    %v2212 = vpack.c.b16 %v1556, %v1548
    %v2213 = vpack.c.b16 %v1557, %v1549
    %v2214 = vpack.c.b16 %v1558, %v1550
    %v2215 = vpack.c.b16 %v1559, %v1551
    %v2216 = vpack.c.b16 %v1560, %v1552
    %v2217 = vpack.c.b16 %v1561, %v1553
    %v2218 = vpack.c.b16 %v1570, %v1562
    %v2219 = vpack.c.b16 %v1571, %v1563
    %v2220 = vpack.c.b16 %v1572, %v1564
    %v2221 = vpack.c.b16 %v1573, %v1565
    %v2222 = vpack.c.b16 %v1574, %v1566
    %v2223 = vpack.c.b16 %v1575, %v1567
    %v2224 = vpack.c.b16 %v1576, %v1568
    %v2225 = vpack.c.b16 %v1577, %v1569
    %v2226 = vpack.c.b16 %v1586, %v1578
    %v2227 = vpack.c.b16 %v1587, %v1579
    %v2228 = vpack.c.b16 %v1588, %v1580
    %v2229 = vpack.c.b16 %v1589, %v1581
    %v2230 = vpack.c.b16 %v1590, %v1582
    %v2231 = vpack.c.b16 %v1591, %v1583
    %v2232 = vpack.c.b16 %v1592, %v1584
    %v2233 = vpack.c.b16 %v1593, %v1585
    %v2234 = vpack.c.b16 %v1602, %v1594
    %v2235 = vpack.c.b16 %v1603, %v1595
    %v2236 = vpack.c.b16 %v1604, %v1596
    %v2237 = vpack.c.b16 %v1605, %v1597
    %v2238 = vpack.c.b16 %v1606, %v1598
    %v2239 = vpack.c.b16 %v1607, %v1599
    %v2240 = vpack.c.b16 %v1608, %v1600
    %v2241 = vpack.c.b16 %v1609, %v1601
    %v2242 = vpack.c.b16 %v1618, %v1610
    %v2243 = vpack.c.b16 %v1619, %v1611
    %v2244 = vpack.c.b16 %v1620, %v1612
    %v2245 = vpack.c.b16 %v1621, %v1613
    %v2246 = vpack.c.b16 %v1622, %v1614
    %v2247 = vpack.c.b16 %v1623, %v1615
    %v2248 = vpack.c.b16 %v1624, %v1616
    %v2249 = vpack.c.b16 %v1625, %v1617
    %v2250 = vpack.c.b16 %v1634, %v1626
    %v2251 = vpack.c.b16 %v1635, %v1627
    %v2252 = vpack.c.b16 %v1636, %v1628
    %v2253 = vpack.c.b16 %v1637, %v1629
    %v2254 = vpack.c.b16 %v1638, %v1630
    %v2255 = vpack.c.b16 %v1639, %v1631
    %v2256 = vpack.c.b16 %v1640, %v1632
    %v2257 = vpack.c.b16 %v1641, %v1633
    %v2258 = vpack.c.b16 %v1650, %v1642
    %v2259 = vpack.c.b16 %v1651, %v1643
    %v2260 = vpack.c.b16 %v1652, %v1644
    %v2261 = vpack.c.b16 %v1653, %v1645
    %v2262 = vpack.c.b16 %v1654, %v1646
    %v2263 = vpack.c.b16 %v1655, %v1647
    %v2264 = vpack.c.b16 %v1656, %v1648
    %v2265 = vpack.c.b16 %v1657, %v1649
    %v2266 = vpack.c.b16 %v1666, %v1658
    %v2267 = vpack.c.b16 %v1667, %v1659
    %v2268 = vpack.c.b16 %v1668, %v1660
    %v2269 = vpack.c.b16 %v1669, %v1661
    %v2270 = vpack.c.b16 %v1670, %v1662
    %v2271 = vpack.c.b16 %v1671, %v1663
    %v2272 = vpack.c.b16 %v1672, %v1664
    %v2273 = vpack.c.b16 %v1673, %v1665
    %v2274 = vpack.c.b16 %v1682, %v1674
    %v2275 = vpack.c.b16 %v1683, %v1675
    %v2276 = vpack.c.b16 %v1684, %v1676
    %v2277 = vpack.c.b16 %v1685, %v1677
    %v2278 = vpack.c.b16 %v1686, %v1678
    %v2279 = vpack.c.b16 %v1687, %v1679
    %v2280 = vpack.c.b16 %v1688, %v1680
    %v2281 = vpack.c.b16 %v1689, %v1681
    %v2282 = vpack.c.b16 %v1698, %v1690
    %v2283 = vpack.c.b16 %v1699, %v1691
    %v2284 = vpack.c.b16 %v1700, %v1692
    %v2285 = vpack.c.b16 %v1701, %v1693
    %v2286 = vpack.c.b16 %v1702, %v1694
    %v2287 = vpack.c.b16 %v1703, %v1695
    %v2288 = vpack.c.b16 %v1704, %v1696
    %v2289 = vpack.c.b16 %v1705, %v1697
    %v2290 = vpack.c.b16 %v1714, %v1706
    %v2291 = vpack.c.b16 %v1715, %v1707
    %v2292 = vpack.c.b16 %v1716, %v1708
    %v2293 = vpack.c.b16 %v1717, %v1709
    %v2294 = vpack.c.b16 %v1718, %v1710
    %v2295 = vpack.c.b16 %v1719, %v1711
    %v2296 = vpack.c.b16 %v1720, %v1712
    %v2297 = vpack.c.b16 %v1721, %v1713
    %v2298 = vpack.c.b16 %v1730, %v1722
    %v2299 = vpack.c.b16 %v1731, %v1723
    %v2300 = vpack.c.b16 %v1732, %v1724
    %v2301 = vpack.c.b16 %v1733, %v1725
    %v2302 = vpack.c.b16 %v1734, %v1726
    %v2303 = vpack.c.b16 %v1735, %v1727
    %v2304 = vpack.c.b16 %v1736, %v1728
    %v2305 = vpack.c.b16 %v1737, %v1729
    %v2306 = vpack.c.b16 %v1746, %v1738
    %v2307 = vpack.c.b16 %v1747, %v1739
    %v2308 = vpack.c.b16 %v1748, %v1740
    %v2309 = vpack.c.b16 %v1749, %v1741
    %v2310 = vpack.c.b16 %v1750, %v1742
    %v2311 = vpack.c.b16 %v1751, %v1743
    %v2312 = vpack.c.b16 %v1752, %v1744
    %v2313 = vpack.c.b16 %v1753, %v1745
    %v2314 = vpack.c.b16 %v1762, %v1754
    %v2315 = vpack.c.b16 %v1763, %v1755
    %v2316 = vpack.c.b16 %v1764, %v1756
    %v2317 = vpack.c.b16 %v1765, %v1757
    %v2318 = vpack.c.b16 %v1766, %v1758
    %v2319 = vpack.c.b16 %v1767, %v1759
    %v2320 = vpack.c.b16 %v1768, %v1760
    %v2321 = vpack.c.b16 %v1769, %v1761
    %v2322 = vpack.c.b16 %v1778, %v1770
    %v2323 = vpack.c.b16 %v1779, %v1771
    %v2324 = vpack.c.b16 %v1780, %v1772
    %v2325 = vpack.c.b16 %v1781, %v1773
    %v2326 = vpack.c.b16 %v1782, %v1774
    %v2327 = vpack.c.b16 %v1783, %v1775
    %v2328 = vpack.c.b16 %v1784, %v1776
    %v2329 = vpack.c.b16 %v1785, %v1777
    %v2330 = vpack.c.b16 %v1794, %v1786
    %v2331 = vpack.c.b16 %v1795, %v1787
    %v2332 = vpack.c.b16 %v1796, %v1788
    %v2333 = vpack.c.b16 %v1797, %v1789
    %v2334 = vpack.c.b16 %v1798, %v1790
    %v2335 = vpack.c.b16 %v1799, %v1791
    %v2336 = vpack.c.b16 %v1800, %v1792
    %v2337 = vpack.c.b16 %v1801, %v1793
    %v2338 = vpack.c.b16 %v1810, %v1802
    %v2339 = vpack.c.b16 %v1811, %v1803
    %v2340 = vpack.c.b16 %v1812, %v1804
    %v2341 = vpack.c.b16 %v1813, %v1805
    %v2342 = vpack.c.b16 %v1814, %v1806
    %v2343 = vpack.c.b16 %v1815, %v1807
    %v2344 = vpack.c.b16 %v1816, %v1808
    %v2345 = vpack.c.b16 %v1817, %v1809
    %v2346 = vpack.c.b16 %v1826, %v1818
    %v2347 = vpack.c.b16 %v1827, %v1819
    %v2348 = vpack.c.b16 %v1828, %v1820
    %v2349 = vpack.c.b16 %v1829, %v1821
    %v2350 = vpack.c.b16 %v1830, %v1822
    %v2351 = vpack.c.b16 %v1831, %v1823
    %v2352 = vpack.c.b16 %v1832, %v1824
    %v2353 = vpack.c.b16 %v1833, %v1825
    %v2354 = vpack.c.b16 %v1842, %v1834
    %v2355 = vpack.c.b16 %v1843, %v1835
    %v2356 = vpack.c.b16 %v1844, %v1836
    %v2357 = vpack.c.b16 %v1845, %v1837
    %v2358 = vpack.c.b16 %v1846, %v1838
    %v2359 = vpack.c.b16 %v1847, %v1839
    %v2360 = vpack.c.b16 %v1848, %v1840
    %v2361 = vpack.c.b16 %v1849, %v1841
    %v2362 = vpack.c.b16 %v1858, %v1850
    %v2363 = vpack.c.b16 %v1859, %v1851
    %v2364 = vpack.c.b16 %v1860, %v1852
    %v2365 = vpack.c.b16 %v1861, %v1853
    %v2366 = vpack.c.b16 %v1862, %v1854
    %v2367 = vpack.c.b16 %v1863, %v1855
    %v2368 = vpack.c.b16 %v1864, %v1856
    %v2369 = vpack.c.b16 %v1865, %v1857
    %v2370 = vpack.c.b16 %v1874, %v1866
    %v2371 = vpack.c.b16 %v1875, %v1867
    %v2372 = vpack.c.b16 %v1876, %v1868
    %v2373 = vpack.c.b16 %v1877, %v1869
    %v2374 = vpack.c.b16 %v1878, %v1870
    %v2375 = vpack.c.b16 %v1879, %v1871
    %v2376 = vpack.c.b16 %v1880, %v1872
    %v2377 = vpack.c.b16 %v1881, %v1873
    %v2378 = vpack.c.b16 %v1890, %v1882
    %v2379 = vpack.c.b16 %v1891, %v1883
    %v2380 = vpack.c.b16 %v1892, %v1884
    %v2381 = vpack.c.b16 %v1893, %v1885
    %v2382 = vpack.c.b16 %v1894, %v1886
    %v2383 = vpack.c.b16 %v1895, %v1887
    %v2384 = vpack.c.b16 %v1896, %v1888
    %v2385 = vpack.c.b16 %v1897, %v1889
    %v2386 = vpack.c.b16 %v1906, %v1898
    %v2387 = vpack.c.b16 %v1907, %v1899
    %v2388 = vpack.c.b16 %v1908, %v1900
    %v2389 = vpack.c.b16 %v1909, %v1901
    %v2390 = vpack.c.b16 %v1910, %v1902
    %v2391 = vpack.c.b16 %v1911, %v1903
    %v2392 = vpack.c.b16 %v1912, %v1904
    %v2393 = vpack.c.b16 %v1913, %v1905
    %v2394 = vpack.c.b16 %v1922, %v1914
    %v2395 = vpack.c.b16 %v1923, %v1915
    %v2396 = vpack.c.b16 %v1924, %v1916
    %v2397 = vpack.c.b16 %v1925, %v1917
    %v2398 = vpack.c.b16 %v1926, %v1918
    %v2399 = vpack.c.b16 %v1927, %v1919
    %v2400 = vpack.c.b16 %v1928, %v1920
    %v2401 = vpack.c.b16 %v1929, %v1921
    %v2402 = vpack.c.b16 %v1938, %v1930
    %v2403 = vpack.c.b16 %v1939, %v1931
    %v2404 = vpack.c.b16 %v1940, %v1932
    %v2405 = vpack.c.b16 %v1941, %v1933
    %v2406 = vpack.c.b16 %v1942, %v1934
    %v2407 = vpack.c.b16 %v1943, %v1935
    %v2408 = vpack.c.b16 %v1944, %v1936
    %v2409 = vpack.c.b16 %v1945, %v1937
    %v2410 = vpack.c.b16 %v1954, %v1946
    %v2411 = vpack.c.b16 %v1955, %v1947
    %v2412 = vpack.c.b16 %v1956, %v1948
    %v2413 = vpack.c.b16 %v1957, %v1949
    %v2414 = vpack.c.b16 %v1958, %v1950
    %v2415 = vpack.c.b16 %v1959, %v1951
    %v2416 = vpack.c.b16 %v1960, %v1952
    %v2417 = vpack.c.b16 %v1961, %v1953
    %v2418 = vpack.c.b16 %v1970, %v1962
    %v2419 = vpack.c.b16 %v1971, %v1963
    %v2420 = vpack.c.b16 %v1972, %v1964
    %v2421 = vpack.c.b16 %v1973, %v1965
    %v2422 = vpack.c.b16 %v1974, %v1966
    %v2423 = vpack.c.b16 %v1975, %v1967
    %v2424 = vpack.c.b16 %v1976, %v1968
    %v2425 = vpack.c.b16 %v1977, %v1969
    %2874 = vmatprep.subr.bf16.mxu0 %v1979
    %2875 = vmatpush1.bf16.msra.mxu0 %v1978
    %2876 = vmatprep.subr.bf16.mxu0 %v1987
    %2877 = vmatpush1.bf16.msra.mxu0 %v1986
    %2878 = vmatprep.subr.bf16.mxu0 %v1995
    %2879 = vmatpush1.bf16.msra.mxu0 %v1994
    %2880 = vmatprep.subr.bf16.mxu0 %v2003
    %2881 = vmatpush1.bf16.msra.mxu0 %v2002
    %2882 = vmatprep.subr.bf16.mxu0 %v2011
    %2883 = vmatpush1.bf16.msra.mxu0 %v2010
    %2884 = vmatprep.subr.bf16.mxu0 %v2019
    %2885 = vmatpush1.bf16.msra.mxu0 %v2018
    %2886 = vmatprep.subr.bf16.mxu0 %v2027
    %2887 = vmatpush1.bf16.msra.mxu0 %v2026
    %2888 = vmatprep.subr.bf16.mxu0 %v2035
    %2889 = vmatpush1.bf16.msra.mxu0 %v2034
    %2890 = vmatprep.subr.bf16.mxu0 %v2043
    %2891 = vmatpush1.bf16.msra.mxu0 %v2042
    %2892 = vmatprep.subr.bf16.mxu0 %v2051
    %2893 = vmatpush1.bf16.msra.mxu0 %v2050
    %2894 = vmatprep.subr.bf16.mxu0 %v2059
    %2895 = vmatpush1.bf16.msra.mxu0 %v2058
    %2896 = vmatprep.subr.bf16.mxu0 %v2067
    %2897 = vmatpush1.bf16.msra.mxu0 %v2066
    %2898 = vmatprep.subr.bf16.mxu0 %v2075
    %2899 = vmatpush1.bf16.msra.mxu0 %v2074
    %2900 = vmatprep.subr.bf16.mxu0 %v2083
    %2901 = vmatpush1.bf16.msra.mxu0 %v2082
    %2902 = vmatprep.subr.bf16.mxu0 %v2091
    %2903 = vmatpush1.bf16.msra.mxu0 %v2090
    %2904 = vmatprep.subr.bf16.mxu0 %v2099
    %2905 = vmatpush1.bf16.msra.mxu0 %v2098
    %2906 = vmatprep.mubr.bf16.mxu0 %v621
    %2907 = vmatmul.mubr.bf16.gmra.mrb[0].mxu0 %v620
    %v2908 = vpop.f32.mrb[0].mxu0
    %v2909 = vadd.f32 %v572, %v2908
    %v2910 = vpop.f32.mrb[0].mxu0
    %v2911 = vadd.f32 %v576, %v2910
    %v2912 = vpop.f32.mrb[0].mxu0
    %v2913 = vpop.f32.mrb[0].mxu0
    %2914 = vdwg.mxu0
    %2915 = vmatprep.subr.bf16.mxu0 %v2107
    %2916 = vmatpush1.bf16.msra.mxu0 %v2106
    %2917 = vmatprep.subr.bf16.mxu0 %v2115
    %2918 = vmatpush1.bf16.msra.mxu0 %v2114
    %2919 = vmatprep.subr.bf16.mxu0 %v2123
    %2920 = vmatpush1.bf16.msra.mxu0 %v2122
    %2921 = vmatprep.subr.bf16.mxu0 %v2131
    %2922 = vmatpush1.bf16.msra.mxu0 %v2130
    %2923 = vmatprep.subr.bf16.mxu0 %v2139
    %2924 = vmatpush1.bf16.msra.mxu0 %v2138
    %2925 = vmatprep.subr.bf16.mxu0 %v2147
    %2926 = vmatpush1.bf16.msra.mxu0 %v2146
    %2927 = vmatprep.subr.bf16.mxu0 %v2155
    %2928 = vmatpush1.bf16.msra.mxu0 %v2154
    %2929 = vmatprep.subr.bf16.mxu0 %v2163
    %2930 = vmatpush1.bf16.msra.mxu0 %v2162
    %2931 = vmatprep.subr.bf16.mxu0 %v2171
    %2932 = vmatpush1.bf16.msra.mxu0 %v2170
    %2933 = vmatprep.subr.bf16.mxu0 %v2179
    %2934 = vmatpush1.bf16.msra.mxu0 %v2178
    %2935 = vmatprep.subr.bf16.mxu0 %v2187
    %2936 = vmatpush1.bf16.msra.mxu0 %v2186
    %2937 = vmatprep.subr.bf16.mxu0 %v2195
    %2938 = vmatpush1.bf16.msra.mxu0 %v2194
    %2939 = vmatprep.subr.bf16.mxu0 %v2203
    %2940 = vmatpush1.bf16.msra.mxu0 %v2202
    %2941 = vmatprep.subr.bf16.mxu0 %v2211
    %2942 = vmatpush1.bf16.msra.mxu0 %v2210
    %2943 = vmatprep.subr.bf16.mxu0 %v2219
    %2944 = vmatpush1.bf16.msra.mxu0 %v2218
    %2945 = vmatprep.subr.bf16.mxu0 %v2227
    %2946 = vmatpush1.bf16.msra.mxu0 %v2226
    %2947 = vmatprep.mubr.bf16.mxu0 %v623
    %2948 = vmatmul.mubr.bf16.gmra.mrb[0].mxu0 %v622
    %v2949 = vpop.f32.mrb[0].mxu0
    %v2950 = vadd.f32 %v2909, %v2949
    %v2951 = vpop.f32.mrb[0].mxu0
    %v2952 = vadd.f32 %v2911, %v2951
    %v2953 = vpop.f32.mrb[0].mxu0
    %v2954 = vpop.f32.mrb[0].mxu0
    %2955 = vdwg.mxu0
    %2956 = vmatprep.subr.bf16.mxu0 %v2235
    %2957 = vmatpush1.bf16.msra.mxu0 %v2234
    %2958 = vmatprep.subr.bf16.mxu0 %v2243
    %2959 = vmatpush1.bf16.msra.mxu0 %v2242
    %2960 = vmatprep.subr.bf16.mxu0 %v2251
    %2961 = vmatpush1.bf16.msra.mxu0 %v2250
    %2962 = vmatprep.subr.bf16.mxu0 %v2259
    %2963 = vmatpush1.bf16.msra.mxu0 %v2258
    %2964 = vmatprep.subr.bf16.mxu0 %v2267
    %2965 = vmatpush1.bf16.msra.mxu0 %v2266
    %2966 = vmatprep.subr.bf16.mxu0 %v2275
    %2967 = vmatpush1.bf16.msra.mxu0 %v2274
    %2968 = vmatprep.subr.bf16.mxu0 %v2283
    %2969 = vmatpush1.bf16.msra.mxu0 %v2282
    %2970 = vmatprep.subr.bf16.mxu0 %v2291
    %2971 = vmatpush1.bf16.msra.mxu0 %v2290
    %2972 = vmatprep.subr.bf16.mxu0 %v2299
    %2973 = vmatpush1.bf16.msra.mxu0 %v2298
    %2974 = vmatprep.subr.bf16.mxu0 %v2307
    %2975 = vmatpush1.bf16.msra.mxu0 %v2306
    %2976 = vmatprep.subr.bf16.mxu0 %v2315
    %2977 = vmatpush1.bf16.msra.mxu0 %v2314
    %2978 = vmatprep.subr.bf16.mxu0 %v2323
    %2979 = vmatpush1.bf16.msra.mxu0 %v2322
    %2980 = vmatprep.subr.bf16.mxu0 %v2331
    %2981 = vmatpush1.bf16.msra.mxu0 %v2330
    %2982 = vmatprep.subr.bf16.mxu0 %v2339
    %2983 = vmatpush1.bf16.msra.mxu0 %v2338
    %2984 = vmatprep.subr.bf16.mxu0 %v2347
    %2985 = vmatpush1.bf16.msra.mxu0 %v2346
    %2986 = vmatprep.subr.bf16.mxu0 %v2355
    %2987 = vmatpush1.bf16.msra.mxu0 %v2354
    %2988 = vmatprep.mubr.bf16.mxu0 %v625
    %2989 = vmatmul.mubr.bf16.gmra.mrb[0].mxu0 %v624
    %v2990 = vpop.f32.mrb[0].mxu0
    %v2991 = vadd.f32 %v2950, %v2990
    %v2992 = vpop.f32.mrb[0].mxu0
    %v2993 = vadd.f32 %v2952, %v2992
    %v2994 = vpop.f32.mrb[0].mxu0
    %v2995 = vpop.f32.mrb[0].mxu0
    %2996 = vdwg.mxu0
    %2997 = vmatprep.subr.bf16.mxu0 %v2363
    %2998 = vmatpush1.bf16.msra.mxu0 %v2362
    %2999 = vmatprep.subr.bf16.mxu0 %v2371
    %3000 = vmatpush1.bf16.msra.mxu0 %v2370
    %3001 = vmatprep.subr.bf16.mxu0 %v2379
    %3002 = vmatpush1.bf16.msra.mxu0 %v2378
    %3003 = vmatprep.subr.bf16.mxu0 %v2387
    %3004 = vmatpush1.bf16.msra.mxu0 %v2386
    %3005 = vmatprep.subr.bf16.mxu0 %v2395
    %3006 = vmatpush1.bf16.msra.mxu0 %v2394
    %3007 = vmatprep.subr.bf16.mxu0 %v2403
    %3008 = vmatpush1.bf16.msra.mxu0 %v2402
    %3009 = vmatprep.subr.bf16.mxu0 %v2411
    %3010 = vmatpush1.bf16.msra.mxu0 %v2410
    %3011 = vmatprep.subr.bf16.mxu0 %v2419
    %3012 = vmatpush1.bf16.msra.mxu0 %v2418
    %3013 = vmatprep.subr.bf16.mxu0 0
    %3014 = vmatpush1.bf16.msra.mxu0 0
    %3015 = vmatprep.subr.bf16.mxu0 0
    %3016 = vmatpush1.bf16.msra.mxu0 0
    %3017 = vmatprep.subr.bf16.mxu0 0
    %3018 = vmatpush1.bf16.msra.mxu0 0
    %3019 = vmatprep.subr.bf16.mxu0 0
    %3020 = vmatpush1.bf16.msra.mxu0 0
    %3021 = vmatprep.subr.bf16.mxu0 0
    %3022 = vmatpush1.bf16.msra.mxu0 0
    %3023 = vmatprep.subr.bf16.mxu0 0
    %3024 = vmatpush1.bf16.msra.mxu0 0
    %3025 = vmatprep.subr.bf16.mxu0 0
    %3026 = vmatpush1.bf16.msra.mxu0 0
    %3027 = vmatprep.subr.bf16.mxu0 0
    %3028 = vmatpush1.bf16.msra.mxu0 0
    %3029 = vmatprep.mubr.bf16.mxu0 0
    %3030 = vmatmul.mubr.bf16.gmra.mrb[0].mxu0 %v626
    %v3031 = vpop.f32.mrb[0].mxu0
    %v3032 = vadd.f32 %v2991, %v3031
    %v3033 = vpop.f32.mrb[0].mxu0
    %v3034 = vadd.f32 %v2993, %v3033
    %v3035 = vpop.f32.mrb[0].mxu0
    %v3036 = vpop.f32.mrb[0].mxu0
    %3037 = vdwg.mxu0
    %3038 = vmatprep.subr.bf16.mxu0 %v1981
    %3039 = vmatpush1.bf16.msra.mxu0 %v1980
    %3040 = vmatprep.subr.bf16.mxu0 %v1989
    %3041 = vmatpush1.bf16.msra.mxu0 %v1988
    %3042 = vmatprep.subr.bf16.mxu0 %v1997
    %3043 = vmatpush1.bf16.msra.mxu0 %v1996
    %3044 = vmatprep.subr.bf16.mxu0 %v2005
    %3045 = vmatpush1.bf16.msra.mxu0 %v2004
    %3046 = vmatprep.subr.bf16.mxu0 %v2013
    %3047 = vmatpush1.bf16.msra.mxu0 %v2012
    %3048 = vmatprep.subr.bf16.mxu0 %v2021
    %3049 = vmatpush1.bf16.msra.mxu0 %v2020
    %3050 = vmatprep.subr.bf16.mxu0 %v2029
    %3051 = vmatpush1.bf16.msra.mxu0 %v2028
    %3052 = vmatprep.subr.bf16.mxu0 %v2037
    %3053 = vmatpush1.bf16.msra.mxu0 %v2036
    %3054 = vmatprep.subr.bf16.mxu0 %v2045
    %3055 = vmatpush1.bf16.msra.mxu0 %v2044
    %3056 = vmatprep.subr.bf16.mxu0 %v2053
    %3057 = vmatpush1.bf16.msra.mxu0 %v2052
    %3058 = vmatprep.subr.bf16.mxu0 %v2061
    %3059 = vmatpush1.bf16.msra.mxu0 %v2060
    %3060 = vmatprep.subr.bf16.mxu0 %v2069
    %3061 = vmatpush1.bf16.msra.mxu0 %v2068
    %3062 = vmatprep.subr.bf16.mxu0 %v2077
    %3063 = vmatpush1.bf16.msra.mxu0 %v2076
    %3064 = vmatprep.subr.bf16.mxu0 %v2085
    %3065 = vmatpush1.bf16.msra.mxu0 %v2084
    %3066 = vmatprep.subr.bf16.mxu0 %v2093
    %3067 = vmatpush1.bf16.msra.mxu0 %v2092
    %3068 = vmatprep.subr.bf16.mxu0 %v2101
    %3069 = vmatpush1.bf16.msra.mxu0 %v2100
    %3070 = vmatprep.mubr.bf16.mxu0 %v621
    %3071 = vmatmul.mubr.bf16.gmra.mrb[0].mxu0 %v620
    %v3072 = vpop.f32.mrb[0].mxu0
    %v3073 = vadd.f32 %v580, %v3072
    %v3074 = vpop.f32.mrb[0].mxu0
    %v3075 = vadd.f32 %v584, %v3074
    %v3076 = vpop.f32.mrb[0].mxu0
    %v3077 = vpop.f32.mrb[0].mxu0
    %3078 = vdwg.mxu0
    %3079 = vmatprep.subr.bf16.mxu0 %v2109
    %3080 = vmatpush1.bf16.msra.mxu0 %v2108
    %3081 = vmatprep.subr.bf16.mxu0 %v2117
    %3082 = vmatpush1.bf16.msra.mxu0 %v2116
    %3083 = vmatprep.subr.bf16.mxu0 %v2125
    %3084 = vmatpush1.bf16.msra.mxu0 %v2124
    %3085 = vmatprep.subr.bf16.mxu0 %v2133
    %3086 = vmatpush1.bf16.msra.mxu0 %v2132
    %3087 = vmatprep.subr.bf16.mxu0 %v2141
    %3088 = vmatpush1.bf16.msra.mxu0 %v2140
    %3089 = vmatprep.subr.bf16.mxu0 %v2149
    %3090 = vmatpush1.bf16.msra.mxu0 %v2148
    %3091 = vmatprep.subr.bf16.mxu0 %v2157
    %3092 = vmatpush1.bf16.msra.mxu0 %v2156
    %3093 = vmatprep.subr.bf16.mxu0 %v2165
    %3094 = vmatpush1.bf16.msra.mxu0 %v2164
    %3095 = vmatprep.subr.bf16.mxu0 %v2173
    %3096 = vmatpush1.bf16.msra.mxu0 %v2172
    %3097 = vmatprep.subr.bf16.mxu0 %v2181
    %3098 = vmatpush1.bf16.msra.mxu0 %v2180
    %3099 = vmatprep.subr.bf16.mxu0 %v2189
    %3100 = vmatpush1.bf16.msra.mxu0 %v2188
    %3101 = vmatprep.subr.bf16.mxu0 %v2197
    %3102 = vmatpush1.bf16.msra.mxu0 %v2196
    %3103 = vmatprep.subr.bf16.mxu0 %v2205
    %3104 = vmatpush1.bf16.msra.mxu0 %v2204
    %3105 = vmatprep.subr.bf16.mxu0 %v2213
    %3106 = vmatpush1.bf16.msra.mxu0 %v2212
    %3107 = vmatprep.subr.bf16.mxu0 %v2221
    %3108 = vmatpush1.bf16.msra.mxu0 %v2220
    %3109 = vmatprep.subr.bf16.mxu0 %v2229
    %3110 = vmatpush1.bf16.msra.mxu0 %v2228
    %3111 = vmatprep.mubr.bf16.mxu0 %v623
    %3112 = vmatmul.mubr.bf16.gmra.mrb[0].mxu0 %v622
    %v3113 = vpop.f32.mrb[0].mxu0
    %v3114 = vadd.f32 %v3073, %v3113
    %v3115 = vpop.f32.mrb[0].mxu0
    %v3116 = vadd.f32 %v3075, %v3115
    %v3117 = vpop.f32.mrb[0].mxu0
    %v3118 = vpop.f32.mrb[0].mxu0
    %3119 = vdwg.mxu0
    %3120 = vmatprep.subr.bf16.mxu0 %v2237
    %3121 = vmatpush1.bf16.msra.mxu0 %v2236
    %3122 = vmatprep.subr.bf16.mxu0 %v2245
    %3123 = vmatpush1.bf16.msra.mxu0 %v2244
    %3124 = vmatprep.subr.bf16.mxu0 %v2253
    %3125 = vmatpush1.bf16.msra.mxu0 %v2252
    %3126 = vmatprep.subr.bf16.mxu0 %v2261
    %3127 = vmatpush1.bf16.msra.mxu0 %v2260
    %3128 = vmatprep.subr.bf16.mxu0 %v2269
    %3129 = vmatpush1.bf16.msra.mxu0 %v2268
    %3130 = vmatprep.subr.bf16.mxu0 %v2277
    %3131 = vmatpush1.bf16.msra.mxu0 %v2276
    %3132 = vmatprep.subr.bf16.mxu0 %v2285
    %3133 = vmatpush1.bf16.msra.mxu0 %v2284
    %3134 = vmatprep.subr.bf16.mxu0 %v2293
    %3135 = vmatpush1.bf16.msra.mxu0 %v2292
    %3136 = vmatprep.subr.bf16.mxu0 %v2301
    %3137 = vmatpush1.bf16.msra.mxu0 %v2300
    %3138 = vmatprep.subr.bf16.mxu0 %v2309
    %3139 = vmatpush1.bf16.msra.mxu0 %v2308
    %3140 = vmatprep.subr.bf16.mxu0 %v2317
    %3141 = vmatpush1.bf16.msra.mxu0 %v2316
    %3142 = vmatprep.subr.bf16.mxu0 %v2325
    %3143 = vmatpush1.bf16.msra.mxu0 %v2324
    %3144 = vmatprep.subr.bf16.mxu0 %v2333
    %3145 = vmatpush1.bf16.msra.mxu0 %v2332
    %3146 = vmatprep.subr.bf16.mxu0 %v2341
    %3147 = vmatpush1.bf16.msra.mxu0 %v2340
    %3148 = vmatprep.subr.bf16.mxu0 %v2349
    %3149 = vmatpush1.bf16.msra.mxu0 %v2348
    %3150 = vmatprep.subr.bf16.mxu0 %v2357
    %3151 = vmatpush1.bf16.msra.mxu0 %v2356
    %3152 = vmatprep.mubr.bf16.mxu0 %v625
    %3153 = vmatmul.mubr.bf16.gmra.mrb[0].mxu0 %v624
    %v3154 = vpop.f32.mrb[0].mxu0
    %v3155 = vadd.f32 %v3114, %v3154
    %v3156 = vpop.f32.mrb[0].mxu0
    %v3157 = vadd.f32 %v3116, %v3156
    %v3158 = vpop.f32.mrb[0].mxu0
    %v3159 = vpop.f32.mrb[0].mxu0
    %3160 = vdwg.mxu0
    %3161 = vmatprep.subr.bf16.mxu0 %v2365
    %3162 = vmatpush1.bf16.msra.mxu0 %v2364
    %3163 = vmatprep.subr.bf16.mxu0 %v2373
    %3164 = vmatpush1.bf16.msra.mxu0 %v2372
    %3165 = vmatprep.subr.bf16.mxu0 %v2381
    %3166 = vmatpush1.bf16.msra.mxu0 %v2380
    %3167 = vmatprep.subr.bf16.mxu0 %v2389
    %3168 = vmatpush1.bf16.msra.mxu0 %v2388
    %3169 = vmatprep.subr.bf16.mxu0 %v2397
    %3170 = vmatpush1.bf16.msra.mxu0 %v2396
    %3171 = vmatprep.subr.bf16.mxu0 %v2405
    %3172 = vmatpush1.bf16.msra.mxu0 %v2404
    %3173 = vmatprep.subr.bf16.mxu0 %v2413
    %3174 = vmatpush1.bf16.msra.mxu0 %v2412
    %3175 = vmatprep.subr.bf16.mxu0 %v2421
    %3176 = vmatpush1.bf16.msra.mxu0 %v2420
    %3177 = vmatprep.subr.bf16.mxu0 0
    %3178 = vmatpush1.bf16.msra.mxu0 0
    %3179 = vmatprep.subr.bf16.mxu0 0
    %3180 = vmatpush1.bf16.msra.mxu0 0
    %3181 = vmatprep.subr.bf16.mxu0 0
    %3182 = vmatpush1.bf16.msra.mxu0 0
    %3183 = vmatprep.subr.bf16.mxu0 0
    %3184 = vmatpush1.bf16.msra.mxu0 0
    %3185 = vmatprep.subr.bf16.mxu0 0
    %3186 = vmatpush1.bf16.msra.mxu0 0
    %3187 = vmatprep.subr.bf16.mxu0 0
    %3188 = vmatpush1.bf16.msra.mxu0 0
    %3189 = vmatprep.subr.bf16.mxu0 0
    %3190 = vmatpush1.bf16.msra.mxu0 0
    %3191 = vmatprep.subr.bf16.mxu0 0
    %3192 = vmatpush1.bf16.msra.mxu0 0
    %3193 = vmatprep.mubr.bf16.mxu0 0
    %3194 = vmatmul.mubr.bf16.gmra.mrb[0].mxu0 %v626
    %v3195 = vpop.f32.mrb[0].mxu0
    %v3196 = vadd.f32 %v3155, %v3195
    %v3197 = vpop.f32.mrb[0].mxu0
    %v3198 = vadd.f32 %v3157, %v3197
    %v3199 = vpop.f32.mrb[0].mxu0
    %v3200 = vpop.f32.mrb[0].mxu0
    %3201 = vdwg.mxu0
    %3202 = vmatprep.subr.bf16.mxu0 %v1983
    %3203 = vmatpush1.bf16.msra.mxu0 %v1982
    %3204 = vmatprep.subr.bf16.mxu0 %v1991
    %3205 = vmatpush1.bf16.msra.mxu0 %v1990
    %3206 = vmatprep.subr.bf16.mxu0 %v1999
    %3207 = vmatpush1.bf16.msra.mxu0 %v1998
    %3208 = vmatprep.subr.bf16.mxu0 %v2007
    %3209 = vmatpush1.bf16.msra.mxu0 %v2006
    %3210 = vmatprep.subr.bf16.mxu0 %v2015
    %3211 = vmatpush1.bf16.msra.mxu0 %v2014
    %3212 = vmatprep.subr.bf16.mxu0 %v2023
    %3213 = vmatpush1.bf16.msra.mxu0 %v2022
    %3214 = vmatprep.subr.bf16.mxu0 %v2031
    %3215 = vmatpush1.bf16.msra.mxu0 %v2030
    %3216 = vmatprep.subr.bf16.mxu0 %v2039
    %3217 = vmatpush1.bf16.msra.mxu0 %v2038
    %3218 = vmatprep.subr.bf16.mxu0 %v2047
    %3219 = vmatpush1.bf16.msra.mxu0 %v2046
    %3220 = vmatprep.subr.bf16.mxu0 %v2055
    %3221 = vmatpush1.bf16.msra.mxu0 %v2054
    %3222 = vmatprep.subr.bf16.mxu0 %v2063
    %3223 = vmatpush1.bf16.msra.mxu0 %v2062
    %3224 = vmatprep.subr.bf16.mxu0 %v2071
    %3225 = vmatpush1.bf16.msra.mxu0 %v2070
    %3226 = vmatprep.subr.bf16.mxu0 %v2079
    %3227 = vmatpush1.bf16.msra.mxu0 %v2078
    %3228 = vmatprep.subr.bf16.mxu0 %v2087
    %3229 = vmatpush1.bf16.msra.mxu0 %v2086
    %3230 = vmatprep.subr.bf16.mxu0 %v2095
    %3231 = vmatpush1.bf16.msra.mxu0 %v2094
    %3232 = vmatprep.subr.bf16.mxu0 %v2103
    %3233 = vmatpush1.bf16.msra.mxu0 %v2102
    %3234 = vmatprep.mubr.bf16.mxu0 %v621
    %3235 = vmatmul.mubr.bf16.gmra.mrb[0].mxu0 %v620
    %v3236 = vpop.f32.mrb[0].mxu0
    %v3237 = vadd.f32 %v588, %v3236
    %v3238 = vpop.f32.mrb[0].mxu0
    %v3239 = vadd.f32 %v592, %v3238
    %v3240 = vpop.f32.mrb[0].mxu0
    %v3241 = vpop.f32.mrb[0].mxu0
    %3242 = vdwg.mxu0
    %3243 = vmatprep.subr.bf16.mxu0 %v2111
    %3244 = vmatpush1.bf16.msra.mxu0 %v2110
    %3245 = vmatprep.subr.bf16.mxu0 %v2119
    %3246 = vmatpush1.bf16.msra.mxu0 %v2118
    %3247 = vmatprep.subr.bf16.mxu0 %v2127
    %3248 = vmatpush1.bf16.msra.mxu0 %v2126
    %3249 = vmatprep.subr.bf16.mxu0 %v2135
    %3250 = vmatpush1.bf16.msra.mxu0 %v2134
    %3251 = vmatprep.subr.bf16.mxu0 %v2143
    %3252 = vmatpush1.bf16.msra.mxu0 %v2142
    %3253 = vmatprep.subr.bf16.mxu0 %v2151
    %3254 = vmatpush1.bf16.msra.mxu0 %v2150
    %3255 = vmatprep.subr.bf16.mxu0 %v2159
    %3256 = vmatpush1.bf16.msra.mxu0 %v2158
    %3257 = vmatprep.subr.bf16.mxu0 %v2167
    %3258 = vmatpush1.bf16.msra.mxu0 %v2166
    %3259 = vmatprep.subr.bf16.mxu0 %v2175
    %3260 = vmatpush1.bf16.msra.mxu0 %v2174
    %3261 = vmatprep.subr.bf16.mxu0 %v2183
    %3262 = vmatpush1.bf16.msra.mxu0 %v2182
    %3263 = vmatprep.subr.bf16.mxu0 %v2191
    %3264 = vmatpush1.bf16.msra.mxu0 %v2190
    %3265 = vmatprep.subr.bf16.mxu0 %v2199
    %3266 = vmatpush1.bf16.msra.mxu0 %v2198
    %3267 = vmatprep.subr.bf16.mxu0 %v2207
    %3268 = vmatpush1.bf16.msra.mxu0 %v2206
    %3269 = vmatprep.subr.bf16.mxu0 %v2215
    %3270 = vmatpush1.bf16.msra.mxu0 %v2214
    %3271 = vmatprep.subr.bf16.mxu0 %v2223
    %3272 = vmatpush1.bf16.msra.mxu0 %v2222
    %3273 = vmatprep.subr.bf16.mxu0 %v2231
    %3274 = vmatpush1.bf16.msra.mxu0 %v2230
    %3275 = vmatprep.mubr.bf16.mxu0 %v623
    %3276 = vmatmul.mubr.bf16.gmra.mrb[0].mxu0 %v622
    %v3277 = vpop.f32.mrb[0].mxu0
    %v3278 = vadd.f32 %v3237, %v3277
    %v3279 = vpop.f32.mrb[0].mxu0
    %v3280 = vadd.f32 %v3239, %v3279
    %v3281 = vpop.f32.mrb[0].mxu0
    %v3282 = vpop.f32.mrb[0].mxu0
    %3283 = vdwg.mxu0
    %3284 = vmatprep.subr.bf16.mxu0 %v2239
    %3285 = vmatpush1.bf16.msra.mxu0 %v2238
    %3286 = vmatprep.subr.bf16.mxu0 %v2247
    %3287 = vmatpush1.bf16.msra.mxu0 %v2246
    %3288 = vmatprep.subr.bf16.mxu0 %v2255
    %3289 = vmatpush1.bf16.msra.mxu0 %v2254
    %3290 = vmatprep.subr.bf16.mxu0 %v2263
    %3291 = vmatpush1.bf16.msra.mxu0 %v2262
    %3292 = vmatprep.subr.bf16.mxu0 %v2271
    %3293 = vmatpush1.bf16.msra.mxu0 %v2270
    %3294 = vmatprep.subr.bf16.mxu0 %v2279
    %3295 = vmatpush1.bf16.msra.mxu0 %v2278
    %3296 = vmatprep.subr.bf16.mxu0 %v2287
    %3297 = vmatpush1.bf16.msra.mxu0 %v2286
    %3298 = vmatprep.subr.bf16.mxu0 %v2295
    %3299 = vmatpush1.bf16.msra.mxu0 %v2294
    %3300 = vmatprep.subr.bf16.mxu0 %v2303
    %3301 = vmatpush1.bf16.msra.mxu0 %v2302
    %3302 = vmatprep.subr.bf16.mxu0 %v2311
    %3303 = vmatpush1.bf16.msra.mxu0 %v2310
    %3304 = vmatprep.subr.bf16.mxu0 %v2319
    %3305 = vmatpush1.bf16.msra.mxu0 %v2318
    %3306 = vmatprep.subr.bf16.mxu0 %v2327
    %3307 = vmatpush1.bf16.msra.mxu0 %v2326
    %3308 = vmatprep.subr.bf16.mxu0 %v2335
    %3309 = vmatpush1.bf16.msra.mxu0 %v2334
    %3310 = vmatprep.subr.bf16.mxu0 %v2343
    %3311 = vmatpush1.bf16.msra.mxu0 %v2342
    %3312 = vmatprep.subr.bf16.mxu0 %v2351
    %3313 = vmatpush1.bf16.msra.mxu0 %v2350
    %3314 = vmatprep.subr.bf16.mxu0 %v2359
    %3315 = vmatpush1.bf16.msra.mxu0 %v2358
    %3316 = vmatprep.mubr.bf16.mxu0 %v625
    %3317 = vmatmul.mubr.bf16.gmra.mrb[0].mxu0 %v624
    %v3318 = vpop.f32.mrb[0].mxu0
    %v3319 = vadd.f32 %v3278, %v3318
    %v3320 = vpop.f32.mrb[0].mxu0
    %v3321 = vadd.f32 %v3280, %v3320
    %v3322 = vpop.f32.mrb[0].mxu0
    %v3323 = vpop.f32.mrb[0].mxu0
    %3324 = vdwg.mxu0
    %3325 = vmatprep.subr.bf16.mxu0 %v2367
    %3326 = vmatpush1.bf16.msra.mxu0 %v2366
    %3327 = vmatprep.subr.bf16.mxu0 %v2375
    %3328 = vmatpush1.bf16.msra.mxu0 %v2374
    %3329 = vmatprep.subr.bf16.mxu0 %v2383
    %3330 = vmatpush1.bf16.msra.mxu0 %v2382
    %3331 = vmatprep.subr.bf16.mxu0 %v2391
    %3332 = vmatpush1.bf16.msra.mxu0 %v2390
    %3333 = vmatprep.subr.bf16.mxu0 %v2399
    %3334 = vmatpush1.bf16.msra.mxu0 %v2398
    %3335 = vmatprep.subr.bf16.mxu0 %v2407
    %3336 = vmatpush1.bf16.msra.mxu0 %v2406
    %3337 = vmatprep.subr.bf16.mxu0 %v2415
    %3338 = vmatpush1.bf16.msra.mxu0 %v2414
    %3339 = vmatprep.subr.bf16.mxu0 %v2423
    %3340 = vmatpush1.bf16.msra.mxu0 %v2422
    %3341 = vmatprep.subr.bf16.mxu0 0
    %3342 = vmatpush1.bf16.msra.mxu0 0
    %3343 = vmatprep.subr.bf16.mxu0 0
    %3344 = vmatpush1.bf16.msra.mxu0 0
    %3345 = vmatprep.subr.bf16.mxu0 0
    %3346 = vmatpush1.bf16.msra.mxu0 0
    %3347 = vmatprep.subr.bf16.mxu0 0
    %3348 = vmatpush1.bf16.msra.mxu0 0
    %3349 = vmatprep.subr.bf16.mxu0 0
    %3350 = vmatpush1.bf16.msra.mxu0 0
    %3351 = vmatprep.subr.bf16.mxu0 0
    %3352 = vmatpush1.bf16.msra.mxu0 0
    %3353 = vmatprep.subr.bf16.mxu0 0
    %3354 = vmatpush1.bf16.msra.mxu0 0
    %3355 = vmatprep.subr.bf16.mxu0 0
    %3356 = vmatpush1.bf16.msra.mxu0 0
    %3357 = vmatprep.mubr.bf16.mxu0 0
    %3358 = vmatmul.mubr.bf16.gmra.mrb[0].mxu0 %v626
    %v3359 = vpop.f32.mrb[0].mxu0
    %v3360 = vadd.f32 %v3319, %v3359
    %v3361 = vpop.f32.mrb[0].mxu0
    %v3362 = vadd.f32 %v3321, %v3361
    %v3363 = vpop.f32.mrb[0].mxu0
    %v3364 = vpop.f32.mrb[0].mxu0
    %3365 = vdwg.mxu0
    %3366 = vmatprep.subr.bf16.mxu0 %v1985
    %3367 = vmatpush1.bf16.msra.mxu0 %v1984
    %3368 = vmatprep.subr.bf16.mxu0 %v1993
    %3369 = vmatpush1.bf16.msra.mxu0 %v1992
    %3370 = vmatprep.subr.bf16.mxu0 %v2001
    %3371 = vmatpush1.bf16.msra.mxu0 %v2000
    %3372 = vmatprep.subr.bf16.mxu0 %v2009
    %3373 = vmatpush1.bf16.msra.mxu0 %v2008
    %3374 = vmatprep.subr.bf16.mxu0 %v2017
    %3375 = vmatpush1.bf16.msra.mxu0 %v2016
    %3376 = vmatprep.subr.bf16.mxu0 %v2025
    %3377 = vmatpush1.bf16.msra.mxu0 %v2024
    %3378 = vmatprep.subr.bf16.mxu0 %v2033
    %3379 = vmatpush1.bf16.msra.mxu0 %v2032
    %3380 = vmatprep.subr.bf16.mxu0 %v2041
    %3381 = vmatpush1.bf16.msra.mxu0 %v2040
    %3382 = vmatprep.subr.bf16.mxu0 %v2049
    %3383 = vmatpush1.bf16.msra.mxu0 %v2048
    %3384 = vmatprep.subr.bf16.mxu0 %v2057
    %3385 = vmatpush1.bf16.msra.mxu0 %v2056
    %3386 = vmatprep.subr.bf16.mxu0 %v2065
    %3387 = vmatpush1.bf16.msra.mxu0 %v2064
    %3388 = vmatprep.subr.bf16.mxu0 %v2073
    %3389 = vmatpush1.bf16.msra.mxu0 %v2072
    %3390 = vmatprep.subr.bf16.mxu0 %v2081
    %3391 = vmatpush1.bf16.msra.mxu0 %v2080
    %3392 = vmatprep.subr.bf16.mxu0 %v2089
    %3393 = vmatpush1.bf16.msra.mxu0 %v2088
    %3394 = vmatprep.subr.bf16.mxu0 %v2097
    %3395 = vmatpush1.bf16.msra.mxu0 %v2096
    %3396 = vmatprep.subr.bf16.mxu0 %v2105
    %3397 = vmatpush1.bf16.msra.mxu0 %v2104
    %3398 = vmatprep.mubr.bf16.mxu0 %v621
    %3399 = vmatmul.mubr.bf16.gmra.mrb[0].mxu0 %v620
    %v3400 = vpop.f32.mrb[0].mxu0
    %v3401 = vadd.f32 %v596, %v3400
    %v3402 = vpop.f32.mrb[0].mxu0
    %v3403 = vadd.f32 %v600, %v3402
    %v3404 = vpop.f32.mrb[0].mxu0
    %v3405 = vpop.f32.mrb[0].mxu0
    %3406 = vdwg.mxu0
    %3407 = vmatprep.subr.bf16.mxu0 %v2113
    %3408 = vmatpush1.bf16.msra.mxu0 %v2112
    %3409 = vmatprep.subr.bf16.mxu0 %v2121
    %3410 = vmatpush1.bf16.msra.mxu0 %v2120
    %3411 = vmatprep.subr.bf16.mxu0 %v2129
    %3412 = vmatpush1.bf16.msra.mxu0 %v2128
    %3413 = vmatprep.subr.bf16.mxu0 %v2137
    %3414 = vmatpush1.bf16.msra.mxu0 %v2136
    %3415 = vmatprep.subr.bf16.mxu0 %v2145
    %3416 = vmatpush1.bf16.msra.mxu0 %v2144
    %3417 = vmatprep.subr.bf16.mxu0 %v2153
    %3418 = vmatpush1.bf16.msra.mxu0 %v2152
    %3419 = vmatprep.subr.bf16.mxu0 %v2161
    %3420 = vmatpush1.bf16.msra.mxu0 %v2160
    %3421 = vmatprep.subr.bf16.mxu0 %v2169
    %3422 = vmatpush1.bf16.msra.mxu0 %v2168
    %3423 = vmatprep.subr.bf16.mxu0 %v2177
    %3424 = vmatpush1.bf16.msra.mxu0 %v2176
    %3425 = vmatprep.subr.bf16.mxu0 %v2185
    %3426 = vmatpush1.bf16.msra.mxu0 %v2184
    %3427 = vmatprep.subr.bf16.mxu0 %v2193
    %3428 = vmatpush1.bf16.msra.mxu0 %v2192
    %3429 = vmatprep.subr.bf16.mxu0 %v2201
    %3430 = vmatpush1.bf16.msra.mxu0 %v2200
    %3431 = vmatprep.subr.bf16.mxu0 %v2209
    %3432 = vmatpush1.bf16.msra.mxu0 %v2208
    %3433 = vmatprep.subr.bf16.mxu0 %v2217
    %3434 = vmatpush1.bf16.msra.mxu0 %v2216
    %3435 = vmatprep.subr.bf16.mxu0 %v2225
    %3436 = vmatpush1.bf16.msra.mxu0 %v2224
    %3437 = vmatprep.subr.bf16.mxu0 %v2233
    %3438 = vmatpush1.bf16.msra.mxu0 %v2232
    %3439 = vmatprep.mubr.bf16.mxu0 %v623
    %3440 = vmatmul.mubr.bf16.gmra.mrb[0].mxu0 %v622
    %v3441 = vpop.f32.mrb[0].mxu0
    %v3442 = vadd.f32 %v3401, %v3441
    %v3443 = vpop.f32.mrb[0].mxu0
    %v3444 = vadd.f32 %v3403, %v3443
    %v3445 = vpop.f32.mrb[0].mxu0
    %v3446 = vpop.f32.mrb[0].mxu0
    %3447 = vdwg.mxu0
    %3448 = vmatprep.subr.bf16.mxu0 %v2241
    %3449 = vmatpush1.bf16.msra.mxu0 %v2240
    %3450 = vmatprep.subr.bf16.mxu0 %v2249
    %3451 = vmatpush1.bf16.msra.mxu0 %v2248
    %3452 = vmatprep.subr.bf16.mxu0 %v2257
    %3453 = vmatpush1.bf16.msra.mxu0 %v2256
    %3454 = vmatprep.subr.bf16.mxu0 %v2265
    %3455 = vmatpush1.bf16.msra.mxu0 %v2264
    %3456 = vmatprep.subr.bf16.mxu0 %v2273
    %3457 = vmatpush1.bf16.msra.mxu0 %v2272
    %3458 = vmatprep.subr.bf16.mxu0 %v2281
    %3459 = vmatpush1.bf16.msra.mxu0 %v2280
    %3460 = vmatprep.subr.bf16.mxu0 %v2289
    %3461 = vmatpush1.bf16.msra.mxu0 %v2288
    %3462 = vmatprep.subr.bf16.mxu0 %v2297
    %3463 = vmatpush1.bf16.msra.mxu0 %v2296
    %3464 = vmatprep.subr.bf16.mxu0 %v2305
    %3465 = vmatpush1.bf16.msra.mxu0 %v2304
    %3466 = vmatprep.subr.bf16.mxu0 %v2313
    %3467 = vmatpush1.bf16.msra.mxu0 %v2312
    %3468 = vmatprep.subr.bf16.mxu0 %v2321
    %3469 = vmatpush1.bf16.msra.mxu0 %v2320
    %3470 = vmatprep.subr.bf16.mxu0 %v2329
    %3471 = vmatpush1.bf16.msra.mxu0 %v2328
    %3472 = vmatprep.subr.bf16.mxu0 %v2337
    %3473 = vmatpush1.bf16.msra.mxu0 %v2336
    %3474 = vmatprep.subr.bf16.mxu0 %v2345
    %3475 = vmatpush1.bf16.msra.mxu0 %v2344
    %3476 = vmatprep.subr.bf16.mxu0 %v2353
    %3477 = vmatpush1.bf16.msra.mxu0 %v2352
    %3478 = vmatprep.subr.bf16.mxu0 %v2361
    %3479 = vmatpush1.bf16.msra.mxu0 %v2360
    %3480 = vmatprep.mubr.bf16.mxu0 %v625
    %3481 = vmatmul.mubr.bf16.gmra.mrb[0].mxu0 %v624
    %v3482 = vpop.f32.mrb[0].mxu0
    %v3483 = vadd.f32 %v3442, %v3482
    %v3484 = vpop.f32.mrb[0].mxu0
    %v3485 = vadd.f32 %v3444, %v3484
    %v3486 = vpop.f32.mrb[0].mxu0
    %v3487 = vpop.f32.mrb[0].mxu0
    %3488 = vdwg.mxu0
    %3489 = vmatprep.subr.bf16.mxu0 %v2369
    %3490 = vmatpush1.bf16.msra.mxu0 %v2368
    %3491 = vmatprep.subr.bf16.mxu0 %v2377
    %3492 = vmatpush1.bf16.msra.mxu0 %v2376
    %3493 = vmatprep.subr.bf16.mxu0 %v2385
    %3494 = vmatpush1.bf16.msra.mxu0 %v2384
    %3495 = vmatprep.subr.bf16.mxu0 %v2393
    %3496 = vmatpush1.bf16.msra.mxu0 %v2392
    %3497 = vmatprep.subr.bf16.mxu0 %v2401
    %3498 = vmatpush1.bf16.msra.mxu0 %v2400
    %3499 = vmatprep.subr.bf16.mxu0 %v2409
    %3500 = vmatpush1.bf16.msra.mxu0 %v2408
    %3501 = vmatprep.subr.bf16.mxu0 %v2417
    %3502 = vmatpush1.bf16.msra.mxu0 %v2416
    %3503 = vmatprep.subr.bf16.mxu0 %v2425
    %3504 = vmatpush1.bf16.msra.mxu0 %v2424
    %3505 = vmatprep.subr.bf16.mxu0 0
    %3506 = vmatpush1.bf16.msra.mxu0 0
    %3507 = vmatprep.subr.bf16.mxu0 0
    %3508 = vmatpush1.bf16.msra.mxu0 0
    %3509 = vmatprep.subr.bf16.mxu0 0
    %3510 = vmatpush1.bf16.msra.mxu0 0
    %3511 = vmatprep.subr.bf16.mxu0 0
    %3512 = vmatpush1.bf16.msra.mxu0 0
    %3513 = vmatprep.subr.bf16.mxu0 0
    %3514 = vmatpush1.bf16.msra.mxu0 0
    %3515 = vmatprep.subr.bf16.mxu0 0
    %3516 = vmatpush1.bf16.msra.mxu0 0
    %3517 = vmatprep.subr.bf16.mxu0 0
    %3518 = vmatpush1.bf16.msra.mxu0 0
    %3519 = vmatprep.subr.bf16.mxu0 0
    %3520 = vmatpush1.bf16.msra.mxu0 0
    %3521 = vmatprep.mubr.bf16.mxu0 0
    %3522 = vmatmul.mubr.bf16.gmra.mrb[0].mxu0 %v626
    %v3523 = vpop.f32.mrb[0].mxu0
    %v3524 = vadd.f32 %v3483, %v3523
    %v3525 = vpop.f32.mrb[0].mxu0
    %v3526 = vadd.f32 %v3485, %v3525
    %v3527 = vpop.f32.mrb[0].mxu0
    %v3528 = vpop.f32.mrb[0].mxu0
    %3529 = vdwg.mxu0
    %v3530 = vmax.f32 %v3032, 0.0
    %v3531 = vmax.f32 %v3034, 0.0
    %v3532 = vmax.f32 %v3196, 0.0
    %v3533 = vmax.f32 %v3198, 0.0
    %v3534 = vmax.f32 %v3360, 0.0
    %v3535 = vmax.f32 %v3362, 0.0
    %v3536 = vmax.f32 %v3524, 0.0
    %v3537 = vmax.f32 %v3526, 0.0
    %v3538 = vpack.c.bf16 %v3530, %v3530
    %v3539 = vpack.c.bf16 %v3531, %v3531
    %v3540 = vpack.c.bf16 %v3532, %v3532
    %v3541 = vpack.c.bf16 %v3533, %v3533
    %v3542 = vpack.c.bf16 %v3534, %v3534
    %v3543 = vpack.c.bf16 %v3535, %v3535
    %v3544 = vpack.c.bf16 %v3536, %v3536
    %v3545 = vpack.c.bf16 %v3537, %v3537
    %v3546 = vld [vmem:[#allocation8] sm:$0xff]
    %v3547 = vld [vmem:[#allocation8 + $0x8] sm:$0xff]
    %v3548 = vld [vmem:[#allocation8 + $0x10] sm:$0xff]
    %v3549 = vld [vmem:[#allocation8 + $0x18] sm:$0xff]
    %v3550 = vld [vmem:[#allocation8 + $0x20] sm:$0xff]
    %v3551 = vld [vmem:[#allocation8 + $0x28] sm:$0xff]
    %v3552 = vld [vmem:[#allocation8 + $0x30] sm:$0xff]
    %v3553 = vld [vmem:[#allocation8 + $0x38] sm:$0xff]
    %v3554 = vld [vmem:[#allocation8 + $0x40] sm:$0xff]
    %v3555 = vld [vmem:[#allocation8 + $0x48] sm:$0xff]
    %v3556 = vld [vmem:[#allocation8 + $0x50] sm:$0xff]
    %v3557 = vld [vmem:[#allocation8 + $0x58] sm:$0xff]
    %v3558 = vld [vmem:[#allocation8 + $0x60] sm:$0xff]
    %v3559 = vld [vmem:[#allocation8 + $0x68] sm:$0xff]
    %v3560 = vld [vmem:[#allocation8 + $0x70] sm:$0xff]
    %v3561 = vld [vmem:[#allocation8 + $0x78] sm:$0xff]
    %v3562 = vld [vmem:[#allocation8 + $0x80] sm:$0xff]
    %v3563 = vld [vmem:[#allocation8 + $0x88] sm:$0xff]
    %v3564 = vld [vmem:[#allocation8 + $0x90] sm:$0xff]
    %v3565 = vld [vmem:[#allocation8 + $0x98] sm:$0xff]
    %v3566 = vld [vmem:[#allocation8 + $0xa0] sm:$0xff]
    %v3567 = vld [vmem:[#allocation8 + $0xa8] sm:$0xff]
    %v3568 = vld [vmem:[#allocation8 + $0xb0] sm:$0xff]
    %v3569 = vld [vmem:[#allocation8 + $0xb8] sm:$0xff]
    %v3570 = vld [vmem:[#allocation8 + $0xc0] sm:$0xff]
    %v3571 = vld [vmem:[#allocation8 + $0xc8] sm:$0xff]
    %v3572 = vld [vmem:[#allocation8 + $0xd0] sm:$0xff]
    %v3573 = vld [vmem:[#allocation8 + $0xd8] sm:$0xff]
    %v3574 = vld [vmem:[#allocation8 + $0xe0] sm:$0xff]
    %v3575 = vld [vmem:[#allocation8 + $0xe8] sm:$0xff]
    %v3576 = vld [vmem:[#allocation8 + $0xf0] sm:$0xff]
    %v3577 = vld [vmem:[#allocation8 + $0xf8] sm:$0xff]
    %v3578 = vld [vmem:[#allocation8 + $0x100] sm:$0xff]
    %v3579 = vld [vmem:[#allocation8 + $0x108] sm:$0xff]
    %v3580 = vld [vmem:[#allocation8 + $0x110] sm:$0xff]
    %v3581 = vld [vmem:[#allocation8 + $0x118] sm:$0xff]
    %v3582 = vld [vmem:[#allocation8 + $0x120] sm:$0xff]
    %v3583 = vld [vmem:[#allocation8 + $0x128] sm:$0xff]
    %v3584 = vld [vmem:[#allocation8 + $0x130] sm:$0xff]
    %v3585 = vld [vmem:[#allocation8 + $0x138] sm:$0xff]
    %v3586 = vld [vmem:[#allocation8 + $0x140] sm:$0xff]
    %v3587 = vld [vmem:[#allocation8 + $0x148] sm:$0xff]
    %v3588 = vld [vmem:[#allocation8 + $0x150] sm:$0xff]
    %v3589 = vld [vmem:[#allocation8 + $0x158] sm:$0xff]
    %v3590 = vld [vmem:[#allocation8 + $0x160] sm:$0xff]
    %v3591 = vld [vmem:[#allocation8 + $0x168] sm:$0xff]
    %v3592 = vld [vmem:[#allocation8 + $0x170] sm:$0xff]
    %v3593 = vld [vmem:[#allocation8 + $0x178] sm:$0xff]
    %v3594 = vld [vmem:[#allocation8 + $0x180] sm:$0xff]
    %v3595 = vld [vmem:[#allocation8 + $0x188] sm:$0xff]
    %v3596 = vld [vmem:[#allocation8 + $0x190] sm:$0xff]
    %v3597 = vld [vmem:[#allocation8 + $0x198] sm:$0xff]
    %v3598 = vld [vmem:[#allocation8 + $0x1a0] sm:$0xff]
    %v3599 = vld [vmem:[#allocation8 + $0x1a8] sm:$0xff]
    %v3600 = vld [vmem:[#allocation8 + $0x1b0] sm:$0xff]
    %v3601 = vld [vmem:[#allocation8 + $0x1b8] sm:$0xff]
    %v3602 = vld [vmem:[#allocation8 + $0x1c0] sm:$0xff]
    %v3603 = vld [vmem:[#allocation8 + $0x1c8] sm:$0xff]
    %v3604 = vld [vmem:[#allocation8 + $0x1d0] sm:$0xff]
    %v3605 = vld [vmem:[#allocation8 + $0x1d8] sm:$0xff]
    %v3606 = vld [vmem:[#allocation8 + $0x1e0] sm:$0xff]
    %v3607 = vld [vmem:[#allocation8 + $0x1e8] sm:$0xff]
    %v3608 = vld [vmem:[#allocation8 + $0x1f0] sm:$0xff]
    %v3609 = vld [vmem:[#allocation8 + $0x1f8] sm:$0xff]
    %v3610 = vld [vmem:[#allocation8 + $0x200] sm:$0xff]
    %v3611 = vld [vmem:[#allocation8 + $0x208] sm:$0xff]
    %v3612 = vld [vmem:[#allocation8 + $0x210] sm:$0xff]
    %v3613 = vld [vmem:[#allocation8 + $0x218] sm:$0xff]
    %v3614 = vld [vmem:[#allocation8 + $0x220] sm:$0xff]
    %v3615 = vld [vmem:[#allocation8 + $0x228] sm:$0xff]
    %v3616 = vld [vmem:[#allocation8 + $0x230] sm:$0xff]
    %v3617 = vld [vmem:[#allocation8 + $0x238] sm:$0xff]
    %v3618 = vld [vmem:[#allocation8 + $0x240] sm:$0xff]
    %v3619 = vld [vmem:[#allocation8 + $0x248] sm:$0xff]
    %v3620 = vld [vmem:[#allocation8 + $0x250] sm:$0xff]
    %v3621 = vld [vmem:[#allocation8 + $0x258] sm:$0xff]
    %v3622 = vld [vmem:[#allocation8 + $0x260] sm:$0xff]
    %v3623 = vld [vmem:[#allocation8 + $0x268] sm:$0xff]
    %v3624 = vld [vmem:[#allocation8 + $0x270] sm:$0xff]
    %v3625 = vld [vmem:[#allocation8 + $0x278] sm:$0xff]
    %v3626 = vld [vmem:[#allocation8 + $0x280] sm:$0xff]
    %v3627 = vld [vmem:[#allocation8 + $0x288] sm:$0xff]
    %v3628 = vld [vmem:[#allocation8 + $0x290] sm:$0xff]
    %v3629 = vld [vmem:[#allocation8 + $0x298] sm:$0xff]
    %v3630 = vld [vmem:[#allocation8 + $0x2a0] sm:$0xff]
    %v3631 = vld [vmem:[#allocation8 + $0x2a8] sm:$0xff]
    %v3632 = vld [vmem:[#allocation8 + $0x2b0] sm:$0xff]
    %v3633 = vld [vmem:[#allocation8 + $0x2b8] sm:$0xff]
    %v3634 = vld [vmem:[#allocation8 + $0x2c0] sm:$0xff]
    %v3635 = vld [vmem:[#allocation8 + $0x2c8] sm:$0xff]
    %v3636 = vld [vmem:[#allocation8 + $0x2d0] sm:$0xff]
    %v3637 = vld [vmem:[#allocation8 + $0x2d8] sm:$0xff]
    %v3638 = vld [vmem:[#allocation8 + $0x2e0] sm:$0xff]
    %v3639 = vld [vmem:[#allocation8 + $0x2e8] sm:$0xff]
    %v3640 = vld [vmem:[#allocation8 + $0x2f0] sm:$0xff]
    %v3641 = vld [vmem:[#allocation8 + $0x2f8] sm:$0xff]
    %v3642 = vld [vmem:[#allocation8 + $0x300] sm:$0xff]
    %v3643 = vld [vmem:[#allocation8 + $0x308] sm:$0xff]
    %v3644 = vld [vmem:[#allocation8 + $0x310] sm:$0xff]
    %v3645 = vld [vmem:[#allocation8 + $0x318] sm:$0xff]
    %v3646 = vld [vmem:[#allocation8 + $0x320] sm:$0xff]
    %v3647 = vld [vmem:[#allocation8 + $0x328] sm:$0xff]
    %v3648 = vld [vmem:[#allocation8 + $0x330] sm:$0xff]
    %v3649 = vld [vmem:[#allocation8 + $0x338] sm:$0xff]
    %v3650 = vld [vmem:[#allocation8 + $0x340] sm:$0xff]
    %v3651 = vld [vmem:[#allocation8 + $0x348] sm:$0xff]
    %v3652 = vld [vmem:[#allocation8 + $0x350] sm:$0xff]
    %v3653 = vld [vmem:[#allocation8 + $0x358] sm:$0xff]
    %v3654 = vld [vmem:[#allocation8 + $0x360] sm:$0xff]
    %v3655 = vld [vmem:[#allocation8 + $0x368] sm:$0xff]
    %v3656 = vld [vmem:[#allocation8 + $0x370] sm:$0xff]
    %v3657 = vld [vmem:[#allocation8 + $0x378] sm:$0xff]
    %v3658 = vld [vmem:[#allocation8 + $0x380] sm:$0xff]
    %v3659 = vld [vmem:[#allocation8 + $0x388] sm:$0xff]
    %v3660 = vld [vmem:[#allocation8 + $0x390] sm:$0xff]
    %v3661 = vld [vmem:[#allocation8 + $0x398] sm:$0xff]
    %v3662 = vld [vmem:[#allocation8 + $0x3a0] sm:$0xff]
    %v3663 = vld [vmem:[#allocation8 + $0x3a8] sm:$0xff]
    %v3664 = vld [vmem:[#allocation8 + $0x3b0] sm:$0xff]
    %v3665 = vld [vmem:[#allocation8 + $0x3b8] sm:$0xff]
    %v3666 = vld [vmem:[#allocation8 + $0x3c0] sm:$0xff]
    %v3667 = vld [vmem:[#allocation8 + $0x3c8] sm:$0xff]
    %v3668 = vld [vmem:[#allocation8 + $0x3d0] sm:$0xff]
    %v3669 = vld [vmem:[#allocation8 + $0x3d8] sm:$0xff]
    %v3670 = vld [vmem:[#allocation8 + $0x3e0] sm:$0xff]
    %v3671 = vld [vmem:[#allocation8 + $0x3e8] sm:$0xff]
    %v3672 = vld [vmem:[#allocation8 + $0x3f0] sm:$0xff]
    %v3673 = vld [vmem:[#allocation8 + $0x3f8] sm:$0xff]
    %v3674 = vld [vmem:[#allocation10] sm:$0x3]
    %v3676 = vlaneseq
    %v3677 = vshrl.u32 %v3676, 7
    %v3678 = vsub.s32 0, %v3677
    %v3679 = vrot.slane %v3674, %v3678
    %v3680 = vlaneseq
    %v3681 = vshrl.u32 %v3680, 7
    %v3682 = vsub.s32 1, %v3681
    %v3683 = vrot.slane %v3674, %v3682
    %v3814 = vunpack.c.l.b16 %v3546
    %v3815 = vunpack.c.h.b16 %v3546
    %v3816 = vunpack.c.l.b16 %v3547
    %v3817 = vunpack.c.h.b16 %v3547
    %v3818 = vunpack.c.l.b16 %v3548
    %v3819 = vunpack.c.h.b16 %v3548
    %v3820 = vunpack.c.l.b16 %v3549
    %v3821 = vunpack.c.h.b16 %v3549
    %v3822 = vunpack.c.l.b16 %v3550
    %v3823 = vunpack.c.h.b16 %v3550
    %v3824 = vunpack.c.l.b16 %v3551
    %v3825 = vunpack.c.h.b16 %v3551
    %v3826 = vunpack.c.l.b16 %v3552
    %v3827 = vunpack.c.h.b16 %v3552
    %v3828 = vunpack.c.l.b16 %v3553
    %v3829 = vunpack.c.h.b16 %v3553
    %v3830 = vunpack.c.l.b16 %v3554
    %v3831 = vunpack.c.h.b16 %v3554
    %v3832 = vunpack.c.l.b16 %v3555
    %v3833 = vunpack.c.h.b16 %v3555
    %v3834 = vunpack.c.l.b16 %v3556
    %v3835 = vunpack.c.h.b16 %v3556
    %v3836 = vunpack.c.l.b16 %v3557
    %v3837 = vunpack.c.h.b16 %v3557
    %v3838 = vunpack.c.l.b16 %v3558
    %v3839 = vunpack.c.h.b16 %v3558
    %v3840 = vunpack.c.l.b16 %v3559
    %v3841 = vunpack.c.h.b16 %v3559
    %v3842 = vunpack.c.l.b16 %v3560
    %v3843 = vunpack.c.h.b16 %v3560
    %v3844 = vunpack.c.l.b16 %v3561
    %v3845 = vunpack.c.h.b16 %v3561
    %v3846 = vunpack.c.l.b16 %v3562
    %v3847 = vunpack.c.h.b16 %v3562
    %v3848 = vunpack.c.l.b16 %v3563
    %v3849 = vunpack.c.h.b16 %v3563
    %v3850 = vunpack.c.l.b16 %v3564
    %v3851 = vunpack.c.h.b16 %v3564
    %v3852 = vunpack.c.l.b16 %v3565
    %v3853 = vunpack.c.h.b16 %v3565
    %v3854 = vunpack.c.l.b16 %v3566
    %v3855 = vunpack.c.h.b16 %v3566
    %v3856 = vunpack.c.l.b16 %v3567
    %v3857 = vunpack.c.h.b16 %v3567
    %v3858 = vunpack.c.l.b16 %v3568
    %v3859 = vunpack.c.h.b16 %v3568
    %v3860 = vunpack.c.l.b16 %v3569
    %v3861 = vunpack.c.h.b16 %v3569
    %v3862 = vunpack.c.l.b16 %v3570
    %v3863 = vunpack.c.h.b16 %v3570
    %v3864 = vunpack.c.l.b16 %v3571
    %v3865 = vunpack.c.h.b16 %v3571
    %v3866 = vunpack.c.l.b16 %v3572
    %v3867 = vunpack.c.h.b16 %v3572
    %v3868 = vunpack.c.l.b16 %v3573
    %v3869 = vunpack.c.h.b16 %v3573
    %v3870 = vunpack.c.l.b16 %v3574
    %v3871 = vunpack.c.h.b16 %v3574
    %v3872 = vunpack.c.l.b16 %v3575
    %v3873 = vunpack.c.h.b16 %v3575
    %v3874 = vunpack.c.l.b16 %v3576
    %v3875 = vunpack.c.h.b16 %v3576
    %v3876 = vunpack.c.l.b16 %v3577
    %v3877 = vunpack.c.h.b16 %v3577
    %v3878 = vunpack.c.l.b16 %v3578
    %v3879 = vunpack.c.h.b16 %v3578
    %v3880 = vunpack.c.l.b16 %v3579
    %v3881 = vunpack.c.h.b16 %v3579
    %v3882 = vunpack.c.l.b16 %v3580
    %v3883 = vunpack.c.h.b16 %v3580
    %v3884 = vunpack.c.l.b16 %v3581
    %v3885 = vunpack.c.h.b16 %v3581
    %v3886 = vunpack.c.l.b16 %v3582
    %v3887 = vunpack.c.h.b16 %v3582
    %v3888 = vunpack.c.l.b16 %v3583
    %v3889 = vunpack.c.h.b16 %v3583
    %v3890 = vunpack.c.l.b16 %v3584
    %v3891 = vunpack.c.h.b16 %v3584
    %v3892 = vunpack.c.l.b16 %v3585
    %v3893 = vunpack.c.h.b16 %v3585
    %v3894 = vunpack.c.l.b16 %v3586
    %v3895 = vunpack.c.h.b16 %v3586
    %v3896 = vunpack.c.l.b16 %v3587
    %v3897 = vunpack.c.h.b16 %v3587
    %v3898 = vunpack.c.l.b16 %v3588
    %v3899 = vunpack.c.h.b16 %v3588
    %v3900 = vunpack.c.l.b16 %v3589
    %v3901 = vunpack.c.h.b16 %v3589
    %v3902 = vunpack.c.l.b16 %v3590
    %v3903 = vunpack.c.h.b16 %v3590
    %v3904 = vunpack.c.l.b16 %v3591
    %v3905 = vunpack.c.h.b16 %v3591
    %v3906 = vunpack.c.l.b16 %v3592
    %v3907 = vunpack.c.h.b16 %v3592
    %v3908 = vunpack.c.l.b16 %v3593
    %v3909 = vunpack.c.h.b16 %v3593
    %v3910 = vunpack.c.l.b16 %v3594
    %v3911 = vunpack.c.h.b16 %v3594
    %v3912 = vunpack.c.l.b16 %v3595
    %v3913 = vunpack.c.h.b16 %v3595
    %v3914 = vunpack.c.l.b16 %v3596
    %v3915 = vunpack.c.h.b16 %v3596
    %v3916 = vunpack.c.l.b16 %v3597
    %v3917 = vunpack.c.h.b16 %v3597
    %v3918 = vunpack.c.l.b16 %v3598
    %v3919 = vunpack.c.h.b16 %v3598
    %v3920 = vunpack.c.l.b16 %v3599
    %v3921 = vunpack.c.h.b16 %v3599
    %v3922 = vunpack.c.l.b16 %v3600
    %v3923 = vunpack.c.h.b16 %v3600
    %v3924 = vunpack.c.l.b16 %v3601
    %v3925 = vunpack.c.h.b16 %v3601
    %v3926 = vunpack.c.l.b16 %v3602
    %v3927 = vunpack.c.h.b16 %v3602
    %v3928 = vunpack.c.l.b16 %v3603
    %v3929 = vunpack.c.h.b16 %v3603
    %v3930 = vunpack.c.l.b16 %v3604
    %v3931 = vunpack.c.h.b16 %v3604
    %v3932 = vunpack.c.l.b16 %v3605
    %v3933 = vunpack.c.h.b16 %v3605
    %v3934 = vunpack.c.l.b16 %v3606
    %v3935 = vunpack.c.h.b16 %v3606
    %v3936 = vunpack.c.l.b16 %v3607
    %v3937 = vunpack.c.h.b16 %v3607
    %v3938 = vunpack.c.l.b16 %v3608
    %v3939 = vunpack.c.h.b16 %v3608
    %v3940 = vunpack.c.l.b16 %v3609
    %v3941 = vunpack.c.h.b16 %v3609
    %v3942 = vunpack.c.l.b16 %v3610
    %v3943 = vunpack.c.h.b16 %v3610
    %v3944 = vunpack.c.l.b16 %v3611
    %v3945 = vunpack.c.h.b16 %v3611
    %v3946 = vunpack.c.l.b16 %v3612
    %v3947 = vunpack.c.h.b16 %v3612
    %v3948 = vunpack.c.l.b16 %v3613
    %v3949 = vunpack.c.h.b16 %v3613
    %v3950 = vunpack.c.l.b16 %v3614
    %v3951 = vunpack.c.h.b16 %v3614
    %v3952 = vunpack.c.l.b16 %v3615
    %v3953 = vunpack.c.h.b16 %v3615
    %v3954 = vunpack.c.l.b16 %v3616
    %v3955 = vunpack.c.h.b16 %v3616
    %v3956 = vunpack.c.l.b16 %v3617
    %v3957 = vunpack.c.h.b16 %v3617
    %v3958 = vunpack.c.l.b16 %v3618
    %v3959 = vunpack.c.h.b16 %v3618
    %v3960 = vunpack.c.l.b16 %v3619
    %v3961 = vunpack.c.h.b16 %v3619
    %v3962 = vunpack.c.l.b16 %v3620
    %v3963 = vunpack.c.h.b16 %v3620
    %v3964 = vunpack.c.l.b16 %v3621
    %v3965 = vunpack.c.h.b16 %v3621
    %v3966 = vunpack.c.l.b16 %v3622
    %v3967 = vunpack.c.h.b16 %v3622
    %v3968 = vunpack.c.l.b16 %v3623
    %v3969 = vunpack.c.h.b16 %v3623
    %v3970 = vunpack.c.l.b16 %v3624
    %v3971 = vunpack.c.h.b16 %v3624
    %v3972 = vunpack.c.l.b16 %v3625
    %v3973 = vunpack.c.h.b16 %v3625
    %v3974 = vunpack.c.l.b16 %v3626
    %v3975 = vunpack.c.h.b16 %v3626
    %v3976 = vunpack.c.l.b16 %v3627
    %v3977 = vunpack.c.h.b16 %v3627
    %v3978 = vunpack.c.l.b16 %v3628
    %v3979 = vunpack.c.h.b16 %v3628
    %v3980 = vunpack.c.l.b16 %v3629
    %v3981 = vunpack.c.h.b16 %v3629
    %v3982 = vunpack.c.l.b16 %v3630
    %v3983 = vunpack.c.h.b16 %v3630
    %v3984 = vunpack.c.l.b16 %v3631
    %v3985 = vunpack.c.h.b16 %v3631
    %v3986 = vunpack.c.l.b16 %v3632
    %v3987 = vunpack.c.h.b16 %v3632
    %v3988 = vunpack.c.l.b16 %v3633
    %v3989 = vunpack.c.h.b16 %v3633
    %v3990 = vunpack.c.l.b16 %v3634
    %v3991 = vunpack.c.h.b16 %v3634
    %v3992 = vunpack.c.l.b16 %v3635
    %v3993 = vunpack.c.h.b16 %v3635
    %v3994 = vunpack.c.l.b16 %v3636
    %v3995 = vunpack.c.h.b16 %v3636
    %v3996 = vunpack.c.l.b16 %v3637
    %v3997 = vunpack.c.h.b16 %v3637
    %v3998 = vunpack.c.l.b16 %v3638
    %v3999 = vunpack.c.h.b16 %v3638
    %v4000 = vunpack.c.l.b16 %v3639
    %v4001 = vunpack.c.h.b16 %v3639
    %v4002 = vunpack.c.l.b16 %v3640
    %v4003 = vunpack.c.h.b16 %v3640
    %v4004 = vunpack.c.l.b16 %v3641
    %v4005 = vunpack.c.h.b16 %v3641
    %v4006 = vunpack.c.l.b16 %v3642
    %v4007 = vunpack.c.h.b16 %v3642
    %v4008 = vunpack.c.l.b16 %v3643
    %v4009 = vunpack.c.h.b16 %v3643
    %v4010 = vunpack.c.l.b16 %v3644
    %v4011 = vunpack.c.h.b16 %v3644
    %v4012 = vunpack.c.l.b16 %v3645
    %v4013 = vunpack.c.h.b16 %v3645
    %v4014 = vunpack.c.l.b16 %v3646
    %v4015 = vunpack.c.h.b16 %v3646
    %v4016 = vunpack.c.l.b16 %v3647
    %v4017 = vunpack.c.h.b16 %v3647
    %v4018 = vunpack.c.l.b16 %v3648
    %v4019 = vunpack.c.h.b16 %v3648
    %v4020 = vunpack.c.l.b16 %v3649
    %v4021 = vunpack.c.h.b16 %v3649
    %v4022 = vunpack.c.l.b16 %v3650
    %v4023 = vunpack.c.h.b16 %v3650
    %v4024 = vunpack.c.l.b16 %v3651
    %v4025 = vunpack.c.h.b16 %v3651
    %v4026 = vunpack.c.l.b16 %v3652
    %v4027 = vunpack.c.h.b16 %v3652
    %v4028 = vunpack.c.l.b16 %v3653
    %v4029 = vunpack.c.h.b16 %v3653
    %v4030 = vunpack.c.l.b16 %v3654
    %v4031 = vunpack.c.h.b16 %v3654
    %v4032 = vunpack.c.l.b16 %v3655
    %v4033 = vunpack.c.h.b16 %v3655
    %v4034 = vunpack.c.l.b16 %v3656
    %v4035 = vunpack.c.h.b16 %v3656
    %v4036 = vunpack.c.l.b16 %v3657
    %v4037 = vunpack.c.h.b16 %v3657
    %v4038 = vunpack.c.l.b16 %v3658
    %v4039 = vunpack.c.h.b16 %v3658
    %v4040 = vunpack.c.l.b16 %v3659
    %v4041 = vunpack.c.h.b16 %v3659
    %v4042 = vunpack.c.l.b16 %v3660
    %v4043 = vunpack.c.h.b16 %v3660
    %v4044 = vunpack.c.l.b16 %v3661
    %v4045 = vunpack.c.h.b16 %v3661
    %v4046 = vunpack.c.l.b16 %v3662
    %v4047 = vunpack.c.h.b16 %v3662
    %v4048 = vunpack.c.l.b16 %v3663
    %v4049 = vunpack.c.h.b16 %v3663
    %v4050 = vunpack.c.l.b16 %v3664
    %v4051 = vunpack.c.h.b16 %v3664
    %v4052 = vunpack.c.l.b16 %v3665
    %v4053 = vunpack.c.h.b16 %v3665
    %v4054 = vunpack.c.l.b16 %v3666
    %v4055 = vunpack.c.h.b16 %v3666
    %v4056 = vunpack.c.l.b16 %v3667
    %v4057 = vunpack.c.h.b16 %v3667
    %v4058 = vunpack.c.l.b16 %v3668
    %v4059 = vunpack.c.h.b16 %v3668
    %v4060 = vunpack.c.l.b16 %v3669
    %v4061 = vunpack.c.h.b16 %v3669
    %v4062 = vunpack.c.l.b16 %v3670
    %v4063 = vunpack.c.h.b16 %v3670
    %v4064 = vunpack.c.l.b16 %v3671
    %v4065 = vunpack.c.h.b16 %v3671
    %v4066 = vunpack.c.l.b16 %v3672
    %v4067 = vunpack.c.h.b16 %v3672
    %v4068 = vunpack.c.l.b16 %v3673
    %v4069 = vunpack.c.h.b16 %v3673
    %v4070 = vpack.c.b16 %v3816, %v3814
    %v4071 = vpack.c.b16 %v3817, %v3815
    %v4072 = vpack.c.b16 %v3820, %v3818
    %v4073 = vpack.c.b16 %v3821, %v3819
    %v4074 = vpack.c.b16 %v3824, %v3822
    %v4075 = vpack.c.b16 %v3825, %v3823
    %v4076 = vpack.c.b16 %v3828, %v3826
    %v4077 = vpack.c.b16 %v3829, %v3827
    %v4078 = vpack.c.b16 %v3832, %v3830
    %v4079 = vpack.c.b16 %v3833, %v3831
    %v4080 = vpack.c.b16 %v3836, %v3834
    %v4081 = vpack.c.b16 %v3837, %v3835
    %v4082 = vpack.c.b16 %v3840, %v3838
    %v4083 = vpack.c.b16 %v3841, %v3839
    %v4084 = vpack.c.b16 %v3844, %v3842
    %v4085 = vpack.c.b16 %v3845, %v3843
    %v4086 = vpack.c.b16 %v3848, %v3846
    %v4087 = vpack.c.b16 %v3849, %v3847
    %v4088 = vpack.c.b16 %v3852, %v3850
    %v4089 = vpack.c.b16 %v3853, %v3851
    %v4090 = vpack.c.b16 %v3856, %v3854
    %v4091 = vpack.c.b16 %v3857, %v3855
    %v4092 = vpack.c.b16 %v3860, %v3858
    %v4093 = vpack.c.b16 %v3861, %v3859
    %v4094 = vpack.c.b16 %v3864, %v3862
    %v4095 = vpack.c.b16 %v3865, %v3863
    %v4096 = vpack.c.b16 %v3868, %v3866
    %v4097 = vpack.c.b16 %v3869, %v3867
    %v4098 = vpack.c.b16 %v3872, %v3870
    %v4099 = vpack.c.b16 %v3873, %v3871
    %v4100 = vpack.c.b16 %v3876, %v3874
    %v4101 = vpack.c.b16 %v3877, %v3875
    %v4102 = vpack.c.b16 %v3880, %v3878
    %v4103 = vpack.c.b16 %v3881, %v3879
    %v4104 = vpack.c.b16 %v3884, %v3882
    %v4105 = vpack.c.b16 %v3885, %v3883
    %v4106 = vpack.c.b16 %v3888, %v3886
    %v4107 = vpack.c.b16 %v3889, %v3887
    %v4108 = vpack.c.b16 %v3892, %v3890
    %v4109 = vpack.c.b16 %v3893, %v3891
    %v4110 = vpack.c.b16 %v3896, %v3894
    %v4111 = vpack.c.b16 %v3897, %v3895
    %v4112 = vpack.c.b16 %v3900, %v3898
    %v4113 = vpack.c.b16 %v3901, %v3899
    %v4114 = vpack.c.b16 %v3904, %v3902
    %v4115 = vpack.c.b16 %v3905, %v3903
    %v4116 = vpack.c.b16 %v3908, %v3906
    %v4117 = vpack.c.b16 %v3909, %v3907
    %v4118 = vpack.c.b16 %v3912, %v3910
    %v4119 = vpack.c.b16 %v3913, %v3911
    %v4120 = vpack.c.b16 %v3916, %v3914
    %v4121 = vpack.c.b16 %v3917, %v3915
    %v4122 = vpack.c.b16 %v3920, %v3918
    %v4123 = vpack.c.b16 %v3921, %v3919
    %v4124 = vpack.c.b16 %v3924, %v3922
    %v4125 = vpack.c.b16 %v3925, %v3923
    %v4126 = vpack.c.b16 %v3928, %v3926
    %v4127 = vpack.c.b16 %v3929, %v3927
    %v4128 = vpack.c.b16 %v3932, %v3930
    %v4129 = vpack.c.b16 %v3933, %v3931
    %v4130 = vpack.c.b16 %v3936, %v3934
    %v4131 = vpack.c.b16 %v3937, %v3935
    %v4132 = vpack.c.b16 %v3940, %v3938
    %v4133 = vpack.c.b16 %v3941, %v3939
    %v4134 = vpack.c.b16 %v3944, %v3942
    %v4135 = vpack.c.b16 %v3945, %v3943
    %v4136 = vpack.c.b16 %v3948, %v3946
    %v4137 = vpack.c.b16 %v3949, %v3947
    %v4138 = vpack.c.b16 %v3952, %v3950
    %v4139 = vpack.c.b16 %v3953, %v3951
    %v4140 = vpack.c.b16 %v3956, %v3954
    %v4141 = vpack.c.b16 %v3957, %v3955
    %v4142 = vpack.c.b16 %v3960, %v3958
    %v4143 = vpack.c.b16 %v3961, %v3959
    %v4144 = vpack.c.b16 %v3964, %v3962
    %v4145 = vpack.c.b16 %v3965, %v3963
    %v4146 = vpack.c.b16 %v3968, %v3966
    %v4147 = vpack.c.b16 %v3969, %v3967
    %v4148 = vpack.c.b16 %v3972, %v3970
    %v4149 = vpack.c.b16 %v3973, %v3971
    %v4150 = vpack.c.b16 %v3976, %v3974
    %v4151 = vpack.c.b16 %v3977, %v3975
    %v4152 = vpack.c.b16 %v3980, %v3978
    %v4153 = vpack.c.b16 %v3981, %v3979
    %v4154 = vpack.c.b16 %v3984, %v3982
    %v4155 = vpack.c.b16 %v3985, %v3983
    %v4156 = vpack.c.b16 %v3988, %v3986
    %v4157 = vpack.c.b16 %v3989, %v3987
    %v4158 = vpack.c.b16 %v3992, %v3990
    %v4159 = vpack.c.b16 %v3993, %v3991
    %v4160 = vpack.c.b16 %v3996, %v3994
    %v4161 = vpack.c.b16 %v3997, %v3995
    %v4162 = vpack.c.b16 %v4000, %v3998
    %v4163 = vpack.c.b16 %v4001, %v3999
    %v4164 = vpack.c.b16 %v4004, %v4002
    %v4165 = vpack.c.b16 %v4005, %v4003
    %v4166 = vpack.c.b16 %v4008, %v4006
    %v4167 = vpack.c.b16 %v4009, %v4007
    %v4168 = vpack.c.b16 %v4012, %v4010
    %v4169 = vpack.c.b16 %v4013, %v4011
    %v4170 = vpack.c.b16 %v4016, %v4014
    %v4171 = vpack.c.b16 %v4017, %v4015
    %v4172 = vpack.c.b16 %v4020, %v4018
    %v4173 = vpack.c.b16 %v4021, %v4019
    %v4174 = vpack.c.b16 %v4024, %v4022
    %v4175 = vpack.c.b16 %v4025, %v4023
    %v4176 = vpack.c.b16 %v4028, %v4026
    %v4177 = vpack.c.b16 %v4029, %v4027
    %v4178 = vpack.c.b16 %v4032, %v4030
    %v4179 = vpack.c.b16 %v4033, %v4031
    %v4180 = vpack.c.b16 %v4036, %v4034
    %v4181 = vpack.c.b16 %v4037, %v4035
    %v4182 = vpack.c.b16 %v4040, %v4038
    %v4183 = vpack.c.b16 %v4041, %v4039
    %v4184 = vpack.c.b16 %v4044, %v4042
    %v4185 = vpack.c.b16 %v4045, %v4043
    %v4186 = vpack.c.b16 %v4048, %v4046
    %v4187 = vpack.c.b16 %v4049, %v4047
    %v4188 = vpack.c.b16 %v4052, %v4050
    %v4189 = vpack.c.b16 %v4053, %v4051
    %v4190 = vpack.c.b16 %v4056, %v4054
    %v4191 = vpack.c.b16 %v4057, %v4055
    %v4192 = vpack.c.b16 %v4060, %v4058
    %v4193 = vpack.c.b16 %v4061, %v4059
    %v4194 = vpack.c.b16 %v4064, %v4062
    %v4195 = vpack.c.b16 %v4065, %v4063
    %v4196 = vpack.c.b16 %v4068, %v4066
    %v4197 = vpack.c.b16 %v4069, %v4067
    %4326 = vmatprep.subr.bf16.mxu0 %v4071
    %4327 = vmatpush1.bf16.msra.mxu0 %v4070
    %4328 = vmatprep.subr.bf16.mxu0 %v4073
    %4329 = vmatpush1.bf16.msra.mxu0 %v4072
    %4330 = vmatprep.subr.bf16.mxu0 %v4075
    %4331 = vmatpush1.bf16.msra.mxu0 %v4074
    %4332 = vmatprep.subr.bf16.mxu0 %v4077
    %4333 = vmatpush1.bf16.msra.mxu0 %v4076
    %4334 = vmatprep.subr.bf16.mxu0 %v4079
    %4335 = vmatpush1.bf16.msra.mxu0 %v4078
    %4336 = vmatprep.subr.bf16.mxu0 %v4081
    %4337 = vmatpush1.bf16.msra.mxu0 %v4080
    %4338 = vmatprep.subr.bf16.mxu0 %v4083
    %4339 = vmatpush1.bf16.msra.mxu0 %v4082
    %4340 = vmatprep.subr.bf16.mxu0 %v4085
    %4341 = vmatpush1.bf16.msra.mxu0 %v4084
    %4342 = vmatprep.subr.bf16.mxu0 %v4087
    %4343 = vmatpush1.bf16.msra.mxu0 %v4086
    %4344 = vmatprep.subr.bf16.mxu0 %v4089
    %4345 = vmatpush1.bf16.msra.mxu0 %v4088
    %4346 = vmatprep.subr.bf16.mxu0 %v4091
    %4347 = vmatpush1.bf16.msra.mxu0 %v4090
    %4348 = vmatprep.subr.bf16.mxu0 %v4093
    %4349 = vmatpush1.bf16.msra.mxu0 %v4092
    %4350 = vmatprep.subr.bf16.mxu0 %v4095
    %4351 = vmatpush1.bf16.msra.mxu0 %v4094
    %4352 = vmatprep.subr.bf16.mxu0 %v4097
    %4353 = vmatpush1.bf16.msra.mxu0 %v4096
    %4354 = vmatprep.subr.bf16.mxu0 %v4099
    %4355 = vmatpush1.bf16.msra.mxu0 %v4098
    %4356 = vmatprep.subr.bf16.mxu0 %v4101
    %4357 = vmatpush1.bf16.msra.mxu0 %v4100
    %4358 = vmatprep.mubr.bf16.mxu0 %v3539
    %4359 = vmatmul.mubr.bf16.gmra.mrb[0].mxu0 %v3538
    %v4360 = vpop.f32.mrb[0].mxu0
    %v4361 = vadd.f32 %v3679, %v4360
    %v4362 = vpop.f32.mrb[0].mxu0
    %v4363 = vadd.f32 %v3683, %v4362
    %v4364 = vpop.f32.mrb[0].mxu0
    %v4365 = vpop.f32.mrb[0].mxu0
    %4366 = vdwg.mxu0
    %4367 = vmatprep.subr.bf16.mxu0 %v4103
    %4368 = vmatpush1.bf16.msra.mxu0 %v4102
    %4369 = vmatprep.subr.bf16.mxu0 %v4105
    %4370 = vmatpush1.bf16.msra.mxu0 %v4104
    %4371 = vmatprep.subr.bf16.mxu0 %v4107
    %4372 = vmatpush1.bf16.msra.mxu0 %v4106
    %4373 = vmatprep.subr.bf16.mxu0 %v4109
    %4374 = vmatpush1.bf16.msra.mxu0 %v4108
    %4375 = vmatprep.subr.bf16.mxu0 %v4111
    %4376 = vmatpush1.bf16.msra.mxu0 %v4110
    %4377 = vmatprep.subr.bf16.mxu0 %v4113
    %4378 = vmatpush1.bf16.msra.mxu0 %v4112
    %4379 = vmatprep.subr.bf16.mxu0 %v4115
    %4380 = vmatpush1.bf16.msra.mxu0 %v4114
    %4381 = vmatprep.subr.bf16.mxu0 %v4117
    %4382 = vmatpush1.bf16.msra.mxu0 %v4116
    %4383 = vmatprep.subr.bf16.mxu0 %v4119
    %4384 = vmatpush1.bf16.msra.mxu0 %v4118
    %4385 = vmatprep.subr.bf16.mxu0 %v4121
    %4386 = vmatpush1.bf16.msra.mxu0 %v4120
    %4387 = vmatprep.subr.bf16.mxu0 %v4123
    %4388 = vmatpush1.bf16.msra.mxu0 %v4122
    %4389 = vmatprep.subr.bf16.mxu0 %v4125
    %4390 = vmatpush1.bf16.msra.mxu0 %v4124
    %4391 = vmatprep.subr.bf16.mxu0 %v4127
    %4392 = vmatpush1.bf16.msra.mxu0 %v4126
    %4393 = vmatprep.subr.bf16.mxu0 %v4129
    %4394 = vmatpush1.bf16.msra.mxu0 %v4128
    %4395 = vmatprep.subr.bf16.mxu0 %v4131
    %4396 = vmatpush1.bf16.msra.mxu0 %v4130
    %4397 = vmatprep.subr.bf16.mxu0 %v4133
    %4398 = vmatpush1.bf16.msra.mxu0 %v4132
    %4399 = vmatprep.mubr.bf16.mxu0 %v3541
    %4400 = vmatmul.mubr.bf16.gmra.mrb[0].mxu0 %v3540
    %v4401 = vpop.f32.mrb[0].mxu0
    %v4402 = vadd.f32 %v4361, %v4401
    %v4403 = vpop.f32.mrb[0].mxu0
    %v4404 = vadd.f32 %v4363, %v4403
    %v4405 = vpop.f32.mrb[0].mxu0
    %v4406 = vpop.f32.mrb[0].mxu0
    %4407 = vdwg.mxu0
    %4408 = vmatprep.subr.bf16.mxu0 %v4135
    %4409 = vmatpush1.bf16.msra.mxu0 %v4134
    %4410 = vmatprep.subr.bf16.mxu0 %v4137
    %4411 = vmatpush1.bf16.msra.mxu0 %v4136
    %4412 = vmatprep.subr.bf16.mxu0 %v4139
    %4413 = vmatpush1.bf16.msra.mxu0 %v4138
    %4414 = vmatprep.subr.bf16.mxu0 %v4141
    %4415 = vmatpush1.bf16.msra.mxu0 %v4140
    %4416 = vmatprep.subr.bf16.mxu0 %v4143
    %4417 = vmatpush1.bf16.msra.mxu0 %v4142
    %4418 = vmatprep.subr.bf16.mxu0 %v4145
    %4419 = vmatpush1.bf16.msra.mxu0 %v4144
    %4420 = vmatprep.subr.bf16.mxu0 %v4147
    %4421 = vmatpush1.bf16.msra.mxu0 %v4146
    %4422 = vmatprep.subr.bf16.mxu0 %v4149
    %4423 = vmatpush1.bf16.msra.mxu0 %v4148
    %4424 = vmatprep.subr.bf16.mxu0 %v4151
    %4425 = vmatpush1.bf16.msra.mxu0 %v4150
    %4426 = vmatprep.subr.bf16.mxu0 %v4153
    %4427 = vmatpush1.bf16.msra.mxu0 %v4152
    %4428 = vmatprep.subr.bf16.mxu0 %v4155
    %4429 = vmatpush1.bf16.msra.mxu0 %v4154
    %4430 = vmatprep.subr.bf16.mxu0 %v4157
    %4431 = vmatpush1.bf16.msra.mxu0 %v4156
    %4432 = vmatprep.subr.bf16.mxu0 %v4159
    %4433 = vmatpush1.bf16.msra.mxu0 %v4158
    %4434 = vmatprep.subr.bf16.mxu0 %v4161
    %4435 = vmatpush1.bf16.msra.mxu0 %v4160
    %4436 = vmatprep.subr.bf16.mxu0 %v4163
    %4437 = vmatpush1.bf16.msra.mxu0 %v4162
    %4438 = vmatprep.subr.bf16.mxu0 %v4165
    %4439 = vmatpush1.bf16.msra.mxu0 %v4164
    %4440 = vmatprep.mubr.bf16.mxu0 %v3543
    %4441 = vmatmul.mubr.bf16.gmra.mrb[0].mxu0 %v3542
    %v4442 = vpop.f32.mrb[0].mxu0
    %v4443 = vadd.f32 %v4402, %v4442
    %v4444 = vpop.f32.mrb[0].mxu0
    %v4445 = vadd.f32 %v4404, %v4444
    %v4446 = vpop.f32.mrb[0].mxu0
    %v4447 = vpop.f32.mrb[0].mxu0
    %4448 = vdwg.mxu0
    %4449 = vmatprep.subr.bf16.mxu0 %v4167
    %4450 = vmatpush1.bf16.msra.mxu0 %v4166
    %4451 = vmatprep.subr.bf16.mxu0 %v4169
    %4452 = vmatpush1.bf16.msra.mxu0 %v4168
    %4453 = vmatprep.subr.bf16.mxu0 %v4171
    %4454 = vmatpush1.bf16.msra.mxu0 %v4170
    %4455 = vmatprep.subr.bf16.mxu0 %v4173
    %4456 = vmatpush1.bf16.msra.mxu0 %v4172
    %4457 = vmatprep.subr.bf16.mxu0 %v4175
    %4458 = vmatpush1.bf16.msra.mxu0 %v4174
    %4459 = vmatprep.subr.bf16.mxu0 %v4177
    %4460 = vmatpush1.bf16.msra.mxu0 %v4176
    %4461 = vmatprep.subr.bf16.mxu0 %v4179
    %4462 = vmatpush1.bf16.msra.mxu0 %v4178
    %4463 = vmatprep.subr.bf16.mxu0 %v4181
    %4464 = vmatpush1.bf16.msra.mxu0 %v4180
    %4465 = vmatprep.subr.bf16.mxu0 %v4183
    %4466 = vmatpush1.bf16.msra.mxu0 %v4182
    %4467 = vmatprep.subr.bf16.mxu0 %v4185
    %4468 = vmatpush1.bf16.msra.mxu0 %v4184
    %4469 = vmatprep.subr.bf16.mxu0 %v4187
    %4470 = vmatpush1.bf16.msra.mxu0 %v4186
    %4471 = vmatprep.subr.bf16.mxu0 %v4189
    %4472 = vmatpush1.bf16.msra.mxu0 %v4188
    %4473 = vmatprep.subr.bf16.mxu0 %v4191
    %4474 = vmatpush1.bf16.msra.mxu0 %v4190
    %4475 = vmatprep.subr.bf16.mxu0 %v4193
    %4476 = vmatpush1.bf16.msra.mxu0 %v4192
    %4477 = vmatprep.subr.bf16.mxu0 %v4195
    %4478 = vmatpush1.bf16.msra.mxu0 %v4194
    %4479 = vmatprep.subr.bf16.mxu0 %v4197
    %4480 = vmatpush1.bf16.msra.mxu0 %v4196
    %4481 = vmatprep.mubr.bf16.mxu0 %v3545
    %4482 = vmatmul.mubr.bf16.gmra.mrb[0].mxu0 %v3544
    %v4483 = vpop.f32.mrb[0].mxu0
    %v4484 = vadd.f32 %v4443, %v4483
    %v4485 = vpop.f32.mrb[0].mxu0
    %v4486 = vadd.f32 %v4445, %v4485
    %v4487 = vpop.f32.mrb[0].mxu0
    %v4488 = vpop.f32.mrb[0].mxu0
    %4489 = vdwg.mxu0
    %v4490 = vmax.f32 %v4484, 0.0
    %v4491 = vmax.f32 %v4486, 0.0
    %v4492 = vpack.c.bf16 %v4490, %v4490
    %v4493 = vpack.c.bf16 %v4491, %v4491
    %v4494 = vld [vmem:[#allocation11] sm:$0xf]
    %v4495 = vld [vmem:[#allocation11 + $0x4] sm:$0xf]
    %v4496 = vld [vmem:[#allocation11 + $0x8] sm:$0xf]
    %v4497 = vld [vmem:[#allocation11 + $0xc] sm:$0xf]
    %v4498 = vld [vmem:[#allocation11 + $0x10] sm:$0xf]
    %v4499 = vld [vmem:[#allocation11 + $0x14] sm:$0xf]
    %v4500 = vld [vmem:[#allocation11 + $0x18] sm:$0xf]
    %v4501 = vld [vmem:[#allocation11 + $0x1c] sm:$0xf]
    %v4502 = vld [vmem:[#allocation11 + $0x20] sm:$0xf]
    %v4503 = vld [vmem:[#allocation11 + $0x24] sm:$0xf]
    %v4504 = vld [vmem:[#allocation11 + $0x28] sm:$0xf]
    %v4505 = vld [vmem:[#allocation11 + $0x2c] sm:$0xf]
    %v4506 = vld [vmem:[#allocation11 + $0x30] sm:$0xf]
    %v4507 = vld [vmem:[#allocation11 + $0x34] sm:$0xf]
    %v4508 = vld [vmem:[#allocation11 + $0x38] sm:$0xf]
    %v4509 = vld [vmem:[#allocation11 + $0x3c] sm:$0xf]
    %v4510 = vld [vmem:[#allocation11 + $0x40] sm:$0xf]
    %v4511 = vld [vmem:[#allocation11 + $0x44] sm:$0xf]
    %v4512 = vld [vmem:[#allocation11 + $0x48] sm:$0xf]
    %v4513 = vld [vmem:[#allocation11 + $0x4c] sm:$0xf]
    %v4514 = vld [vmem:[#allocation11 + $0x50] sm:$0xf]
    %v4515 = vld [vmem:[#allocation11 + $0x54] sm:$0xf]
    %v4516 = vld [vmem:[#allocation11 + $0x58] sm:$0xf]
    %v4517 = vld [vmem:[#allocation11 + $0x5c] sm:$0xf]
    %v4518 = vld [vmem:[#allocation11 + $0x60] sm:$0xf]
    %v4519 = vld [vmem:[#allocation11 + $0x64] sm:$0xf]
    %v4520 = vld [vmem:[#allocation11 + $0x68] sm:$0xf]
    %v4521 = vld [vmem:[#allocation11 + $0x6c] sm:$0xf]
    %v4522 = vld [vmem:[#allocation11 + $0x70] sm:$0xf]
    %v4523 = vld [vmem:[#allocation11 + $0x74] sm:$0xf]
    %v4524 = vld [vmem:[#allocation11 + $0x78] sm:$0xf]
    %v4525 = vld [vmem:[#allocation11 + $0x7c] sm:$0xf]
    %v4526 = vld [vmem:[#allocation13] sm:$0x1]
    %v4528 = vlaneseq
    %v4529 = vshrl.u32 %v4528, 7
    %v4530 = vsub.s32 0, %v4529
    %v4531 = vrot.slane %v4526, %v4530
    %v4565 = vunpack.c.l.b16 %v4494
    %v4566 = vunpack.c.l.b16 %v4495
    %v4567 = vunpack.c.l.b16 %v4496
    %v4568 = vunpack.c.l.b16 %v4497
    %v4569 = vunpack.c.l.b16 %v4498
    %v4570 = vunpack.c.l.b16 %v4499
    %v4571 = vunpack.c.l.b16 %v4500
    %v4572 = vunpack.c.l.b16 %v4501
    %v4573 = vunpack.c.l.b16 %v4502
    %v4574 = vunpack.c.l.b16 %v4503
    %v4575 = vunpack.c.l.b16 %v4504
    %v4576 = vunpack.c.l.b16 %v4505
    %v4577 = vunpack.c.l.b16 %v4506
    %v4578 = vunpack.c.l.b16 %v4507
    %v4579 = vunpack.c.l.b16 %v4508
    %v4580 = vunpack.c.l.b16 %v4509
    %v4581 = vunpack.c.l.b16 %v4510
    %v4582 = vunpack.c.l.b16 %v4511
    %v4583 = vunpack.c.l.b16 %v4512
    %v4584 = vunpack.c.l.b16 %v4513
    %v4585 = vunpack.c.l.b16 %v4514
    %v4586 = vunpack.c.l.b16 %v4515
    %v4587 = vunpack.c.l.b16 %v4516
    %v4588 = vunpack.c.l.b16 %v4517
    %v4589 = vunpack.c.l.b16 %v4518
    %v4590 = vunpack.c.l.b16 %v4519
    %v4591 = vunpack.c.l.b16 %v4520
    %v4592 = vunpack.c.l.b16 %v4521
    %v4593 = vunpack.c.l.b16 %v4522
    %v4594 = vunpack.c.l.b16 %v4523
    %v4595 = vunpack.c.l.b16 %v4524
    %v4596 = vunpack.c.l.b16 %v4525
    %v4597 = vpack.c.b16 %v4566, %v4565
    %v4598 = vpack.c.b16 %v4568, %v4567
    %v4599 = vpack.c.b16 %v4570, %v4569
    %v4600 = vpack.c.b16 %v4572, %v4571
    %v4601 = vpack.c.b16 %v4574, %v4573
    %v4602 = vpack.c.b16 %v4576, %v4575
    %v4603 = vpack.c.b16 %v4578, %v4577
    %v4604 = vpack.c.b16 %v4580, %v4579
    %v4605 = vpack.c.b16 %v4582, %v4581
    %v4606 = vpack.c.b16 %v4584, %v4583
    %v4607 = vpack.c.b16 %v4586, %v4585
    %v4608 = vpack.c.b16 %v4588, %v4587
    %v4609 = vpack.c.b16 %v4590, %v4589
    %v4610 = vpack.c.b16 %v4592, %v4591
    %v4611 = vpack.c.b16 %v4594, %v4593
    %v4612 = vpack.c.b16 %v4596, %v4595
    %4629 = vmatprep.subr.bf16.mxu0 0
    %4630 = vmatpush1.bf16.msra.mxu0 %v4597
    %4631 = vmatprep.subr.bf16.mxu0 0
    %4632 = vmatpush1.bf16.msra.mxu0 %v4598
    %4633 = vmatprep.subr.bf16.mxu0 0
    %4634 = vmatpush1.bf16.msra.mxu0 %v4599
    %4635 = vmatprep.subr.bf16.mxu0 0
    %4636 = vmatpush1.bf16.msra.mxu0 %v4600
    %4637 = vmatprep.subr.bf16.mxu0 0
    %4638 = vmatpush1.bf16.msra.mxu0 %v4601
    %4639 = vmatprep.subr.bf16.mxu0 0
    %4640 = vmatpush1.bf16.msra.mxu0 %v4602
    %4641 = vmatprep.subr.bf16.mxu0 0
    %4642 = vmatpush1.bf16.msra.mxu0 %v4603
    %4643 = vmatprep.subr.bf16.mxu0 0
    %4644 = vmatpush1.bf16.msra.mxu0 %v4604
    %4645 = vmatprep.subr.bf16.mxu0 0
    %4646 = vmatpush1.bf16.msra.mxu0 %v4605
    %4647 = vmatprep.subr.bf16.mxu0 0
    %4648 = vmatpush1.bf16.msra.mxu0 %v4606
    %4649 = vmatprep.subr.bf16.mxu0 0
    %4650 = vmatpush1.bf16.msra.mxu0 %v4607
    %4651 = vmatprep.subr.bf16.mxu0 0
    %4652 = vmatpush1.bf16.msra.mxu0 %v4608
    %4653 = vmatprep.subr.bf16.mxu0 0
    %4654 = vmatpush1.bf16.msra.mxu0 %v4609
    %4655 = vmatprep.subr.bf16.mxu0 0
    %4656 = vmatpush1.bf16.msra.mxu0 %v4610
    %4657 = vmatprep.subr.bf16.mxu0 0
    %4658 = vmatpush1.bf16.msra.mxu0 %v4611
    %4659 = vmatprep.subr.bf16.mxu0 0
    %4660 = vmatpush1.bf16.msra.mxu0 %v4612
    %4661 = vmatprep.mubr.bf16.mxu0 %v4493
    %4662 = vmatmul.mubr.bf16.gmra.mrb[0].mxu0 %v4492
    %v4663 = vpop.f32.mrb[0].mxu0
    %v4664 = vadd.f32 %v4531, %v4663
    %v4665 = vpop.f32.mrb[0].mxu0
    %v4666 = vpop.f32.mrb[0].mxu0
    %v4667 = vpop.f32.mrb[0].mxu0
    %4668 = vdwg.mxu0
    %4669 = vst [vmem:[#allocation14] sm:$0xff] %v4664
    // Predicated region
    $region58: #{tpu_custom_call.1} parent=1 // pred_check
      _
    $region59: #{tpu_custom_call.1} parent=1 // pred_check_branch
      %4671 = sbr.rel (0) target = $region61
    $region60: #{tpu_custom_call.1} parent=1 // pred_region
      %s4673 = ssub.s32 128, 128
      %4674 = vsyncadd [#allocation4], %s4673
      %s4676 = sshll.u32 [#allocation14], 4
      %s4677 = int_to_ptr.vmem [resolvable:$true] %s4676
      %4679 = dma.vmem_to_hbm [thread:$0]  %s4677, 128, %s7, [#allocation4]
    $region61: #{tpu_custom_call.1} parent=1 // pred_fallthru
      _
    // Predicated region
    $region62: #{tpu_custom_call.1} parent=1 // pred_check
      _
    $region63: #{tpu_custom_call.1} parent=1 // pred_check_branch
      %4681 = sbr.rel (0) target = $region65
    $region64: #{tpu_custom_call.1} parent=1 // pred_region
      %4682 = dma.done [#allocation4], 128
    $region65: #{tpu_custom_call.1} parent=1 // pred_fallthru
      _
    %4683 = vsyncpa [#allocation3], 1
    %4684 = vsyncpa [#allocation6], 1
    %4685 = vsyncpa [#allocation9], 1
    %4686 = vsyncpa [#allocation12], 1
    %4687 = vsyncpa [#allocation4], 1

</llo_original>
